<compile_context>
chip_gen: v5e
topology: v5e:2x2
jax: 0.10.0
libtpu: 0.0.40
codegen_flags: <defaults>
</compile_context>

<pallas_src>
import jax
import jax.numpy as jnp
from jax import lax
from jax.experimental import pallas as pl
from jax.experimental.pallas import tpu as pltpu


def _attn_net_kernel(x_ref, w1_ref, b1_ref, w2t_ref, b2_ref, a_ref):
    w_dtype = w1_ref.dtype

    # Stream x in its stored dtype; cast to the MXU dtype in VMEM (VPU cast,
    # hidden under the matmul).  Exact-f32 path when weights are f32.
    x = x_ref[...]
    if x.dtype != w_dtype:
        x = x.astype(w_dtype)

    # First linear on the MXU with f32 accumulation; bias + tanh in f32 (EUP).
    h = jnp.dot(x, w1_ref[...], preferred_element_type=jnp.float32)
    h = jnp.tanh(h + b1_ref[...])

    n_classes = w2t_ref.shape[0]
    if n_classes == 1:
        # (tn, D) * (1, D) broadcast-mul (VPU) + lane reduce (XLU): avoids a
        # single-output-column MXU matmul; VPU/XLU have slack here.
        a = jnp.sum(h * w2t_ref[...], axis=-1, keepdims=True)
    else:
        # General case: h @ W2 computed as h @ (W2^T)^T on the MXU.  When the
        # main weights are bf16, run this as one bf16 MXU pass too.
        if w_dtype == jnp.float32:
            lhs, rhs = h, w2t_ref[...]
        else:
            lhs, rhs = h.astype(w_dtype), w2t_ref[...].astype(w_dtype)
        a = lax.dot_general(
            lhs, rhs,
            dimension_numbers=(((1,), (1,)), ((), ())),
            preferred_element_type=jnp.float32)

    a_ref[...] = (a + b2_ref[...]).astype(a_ref.dtype)


def _round_up(x, m):
    return ((x + m - 1) // m) * m


def _pick_tn(n, tn_max):
    """Biggest row tile <= tn_max that keeps >= 2 grid steps when N allows it
    (so v7x can shard the 'parallel' grid across both TensorCores)."""
    if n <= 128:
        return _round_up(max(n, 8), 8)
    return max(128, min(tn_max, _round_up(pl.cdiv(n, 2), 128)))


def pack_attn_net_params(w1, b1, w2, b2, compute_dtype=jnp.bfloat16):
    """One-time parameter packing for the kernel (hoisted out of the forward).

    w1: (L, D)   b1: (D,) or (1, D)   w2: (D, C)   b2: (C,) or (1, C)
    compute_dtype: MXU dtype for the big matmul (None => exact-f32 semantics).
                   bf16 is the recommended default (esp. on v5e, where f32 is a
                   multi-pass MXU mode ~3-4x slower).
    """
    w1_p = w1 if compute_dtype is None else w1.astype(compute_dtype)
    b1_p = jnp.asarray(b1, jnp.float32).reshape(1, -1)
    w2t_p = jnp.asarray(jnp.transpose(w2), jnp.float32)   # (C, D)
    b2_p = jnp.asarray(b2, jnp.float32).reshape(1, -1)
    return (w1_p, b1_p, w2t_p, b2_p)


def attn_net_forward(x, packed_params, *, tn_max=1024):
    """Fused Attn_Net forward. Returns (A, x) like the PyTorch module.

    x: (N, L).  packed_params = pack_attn_net_params(...).
    """
    w1, b1, w2t, b2 = packed_params
    N, L = x.shape
    Lw, D = w1.shape
    assert Lw == L, f"x feature dim {L} != w1 input dim {Lw}"
    n_classes = w2t.shape[0]
    out_dtype = x.dtype

    tn = _pick_tn(N, tn_max)
    grid = (pl.cdiv(N, tn),)          # partial last block handled by Pallas

    x_isz = jnp.dtype(x.dtype).itemsize
    w_isz = jnp.dtype(w1.dtype).itemsize
    o_isz = jnp.dtype(out_dtype).itemsize

    # Per-step VMEM footprint: double-buffered x tiles, in-kernel cast temp,
    # (double-buffered-by-default) resident W1, f32 h, output tiles, small params.
    vmem_bytes = (2 * tn * L * x_isz
                  + (tn * L * w_isz if jnp.dtype(w1.dtype) != jnp.dtype(x.dtype) else 0)
                  + 2 * L * D * w_isz
                  + tn * D * 4
                  + 2 * tn * n_classes * o_isz
                  + 2 * (n_classes * D + D + n_classes) * 4)
    vmem_limit = int(min(max(1.5 * vmem_bytes, 16 * 1024 * 1024), 64 * 1024 * 1024))

    cost = pl.CostEstimate(
        flops=2 * N * L * D + 2 * N * D * n_classes,
        transcendentals=N * D,
        bytes_accessed=(N * L * x_isz
                        + L * D * w_isz
                        + N * n_classes * o_isz
                        + (n_classes * D + D + n_classes) * 4),
    )

    a = pl.pallas_call(
        _attn_net_kernel,
        out_shape=jax.ShapeDtypeStruct((N, n_classes), out_dtype),
        grid_spec=pltpu.PrefetchScalarGridSpec(
            num_scalar_prefetch=0,
            grid=grid,
            in_specs=[
                pl.BlockSpec((tn, L), lambda i: (i, 0)),             # x tile (streamed, stored dtype)
                pl.BlockSpec((L, D), lambda i: (0, 0)),              # W1 (resident)
                pl.BlockSpec((1, D), lambda i: (0, 0)),              # b1 (f32)
                pl.BlockSpec((n_classes, D), lambda i: (0, 0)),      # W2^T (resident)
                pl.BlockSpec((1, n_classes), lambda i: (0, 0)),      # b2 (f32)
            ],
            out_specs=pl.BlockSpec((tn, n_classes), lambda i: (i, 0)),
        ),
        compiler_params=pltpu.CompilerParams(
            dimension_semantics=("parallel",),
            vmem_limit_bytes=vmem_limit,
        ),
        cost_estimate=cost,
    )(x, w1, b1, w2t, b2)

    return a, x


def init_params(key, L=1024, D=256, n_classes=1, dtype=jnp.float32):
    # Deterministic init mimicking PyTorch's default U(-1/sqrt(fan_in), +1/sqrt(fan_in)).
    k1, k2, k3, k4 = jax.random.split(key, 4)
    s1 = 1.0 / jnp.sqrt(L)
    s2 = 1.0 / jnp.sqrt(D)
    w1 = jax.random.uniform(k1, (L, D), dtype, -s1, s1)
    b1 = jax.random.uniform(k2, (1, D), dtype, -s1, s1)
    w2 = jax.random.uniform(k3, (D, n_classes), dtype, -s2, s2)
    b2 = jax.random.uniform(k4, (1, n_classes), dtype, -s2, s2)
    return w1, b1, w2, b2


if __name__ == "__main__":
    L, D = 1024, 256
    key = jax.random.PRNGKey(0)
    kx, kp, kx2, kp2 = jax.random.split(key, 4)

    # ---- Case 1: module defaults (n_classes=1), N not a multiple of the tile.
    N, C = 300, 1
    x = jax.random.normal(kx, (N, L), jnp.float32)
    w1, b1, w2, b2 = init_params(kp, L=L, D=D, n_classes=C)
    a_ref = jnp.tanh(x @ w1 + b1) @ w2 + b2              # pure-JAX f32 reference

    # Exact-f32 path.
    p_f32 = pack_attn_net_params(w1, b1, w2, b2, compute_dtype=None)
    a_f32, x_out = attn_net_forward(x, p_f32)
    jax.block_until_ready((a_f32, x_out))
    assert a_f32.shape == (N, C) and x_out.shape == (N, L)
    assert jnp.allclose(a_f32, a_ref, atol=1e-4, rtol=1e-4)
    assert jnp.array_equal(x_out, x)

    # Default bf16-weight path (x cast in-kernel, f32 accumulation): looser tol.
    p_bf16 = pack_attn_net_params(w1, b1, w2, b2)
    a_bf16, _ = attn_net_forward(x, p_bf16)
    jax.block_until_ready(a_bf16)
    assert a_bf16.shape == (N, C)
    assert jnp.allclose(a_bf16, a_ref, atol=5e-2, rtol=5e-2)

    # ---- Case 2: n_classes > 1 exercises the MXU second-projection path
    #      and the partial last grid block (272 = 256 + 16).
    N2, C2 = 272, 3
    x2 = jax.random.normal(kx2, (N2, L), jnp.float32)
    w1b, b1b, w2b, b2b = init_params(kp2, L=L, D=D, n_classes=C2)
    a2_ref = jnp.tanh(x2 @ w1b + b1b) @ w2b + b2b

    a2_f32, _ = attn_net_forward(
        x2, pack_attn_net_params(w1b, b1b, w2b, b2b, compute_dtype=None))
    a2_bf16, _ = attn_net_forward(
        x2, pack_attn_net_params(w1b, b1b, w2b, b2b))
    jax.block_until_ready((a2_f32, a2_bf16))
    assert a2_f32.shape == (N2, C2)
    assert jnp.allclose(a2_f32, a2_ref, atol=1e-4, rtol=1e-4)
    assert jnp.allclose(a2_bf16, a2_ref, atol=5e-2, rtol=5e-2)

    print("KERNEL_OK")
</pallas_src>

<mosaic_0001>
module attributes {stable_mosaic.version = 11 : i64} {
  func.func @_attn_net_kernel(%arg0: i32, %arg1: memref<256x1024xf32, #tpu.memory_space<vmem>>, %arg2: memref<1024x256xf32, #tpu.memory_space<vmem>>, %arg3: memref<1x256xf32, #tpu.memory_space<vmem>>, %arg4: memref<1x256xf32, #tpu.memory_space<vmem>>, %arg5: memref<1x1xf32, #tpu.memory_space<vmem>>, %arg6: memref<256x1xf32, #tpu.memory_space<vmem>>) attributes {dimension_semantics = [#tpu.dimension_semantics<parallel>], iteration_bounds = array<i64: 2>, scalar_prefetch = 0 : i64, scratch_operands = 0 : i64, tpu.core_type = #tpu.core_type<tc>, window_params = [{transform_indices = @transform_0, window_bounds = array<i64: 256, 1024>}, {pipeline_mode = #tpu.pipeline_mode<synchronous>, transform_indices = @transform_1, window_bounds = array<i64: 1024, 256>}, {pipeline_mode = #tpu.pipeline_mode<synchronous>, transform_indices = @transform_2, window_bounds = array<i64: 1, 256>}, {pipeline_mode = #tpu.pipeline_mode<synchronous>, transform_indices = @transform_3, window_bounds = array<i64: 1, 256>}, {pipeline_mode = #tpu.pipeline_mode<synchronous>, transform_indices = @transform_4, window_bounds = array<i64: 1, 1>}, {transform_indices = @transform_5, window_bounds = array<i64: 256, 1>}]} {
    %c0 = arith.constant 0 : index
    %c0_0 = arith.constant 0 : index
    %0 = vector.load %arg1[%c0, %c0_0] : memref<256x1024xf32, #tpu.memory_space<vmem>>, vector<256x1024xf32>
    %c0_1 = arith.constant 0 : index
    %c0_2 = arith.constant 0 : index
    %1 = vector.load %arg2[%c0_1, %c0_2] : memref<1024x256xf32, #tpu.memory_space<vmem>>, vector<1024x256xf32>
    %cst = arith.constant dense<0.000000e+00> : vector<256x256xf32>
    %2 = tpu.matmul %0, %1, %cst {dimension_numbers = #tpu.dot_dimension_numbers<[1], [0], [0], [1], [0, 0, 1, 1], [], []>} : vector<256x1024xf32>, vector<1024x256xf32>, vector<256x256xf32> -> vector<256x256xf32>
    %c0_3 = arith.constant 0 : index
    %c0_4 = arith.constant 0 : index
    %3 = vector.load %arg3[%c0_3, %c0_4] : memref<1x256xf32, #tpu.memory_space<vmem>>, vector<1x256xf32>
    %4 = vector.broadcast %3 : vector<1x256xf32> to vector<256x256xf32>
    %5 = arith.addf %2, %4 : vector<256x256xf32>
    %6 = math.tanh %5 : vector<256x256xf32>
    %c0_5 = arith.constant 0 : index
    %c0_6 = arith.constant 0 : index
    %7 = vector.load %arg4[%c0_5, %c0_6] : memref<1x256xf32, #tpu.memory_space<vmem>>, vector<1x256xf32>
    %8 = vector.broadcast %7 : vector<1x256xf32> to vector<256x256xf32>
    %9 = arith.mulf %6, %8 : vector<256x256xf32>
    %cst_7 = arith.constant dense<0.000000e+00> : vector<256xf32>
    %10 = vector.multi_reduction <add>, %9, %cst_7 [1] : vector<256x256xf32> to vector<256xf32>
    %11 = vector.shape_cast %10 : vector<256xf32> to vector<256x1xf32>
    %c0_8 = arith.constant 0 : index
    %c0_9 = arith.constant 0 : index
    %12 = vector.load %arg5[%c0_8, %c0_9] : memref<1x1xf32, #tpu.memory_space<vmem>>, vector<1x1xf32>
    %13 = vector.broadcast %12 : vector<1x1xf32> to vector<256x1xf32>
    %14 = arith.addf %11, %13 : vector<256x1xf32>
    %c0_10 = arith.constant 0 : index
    %c0_11 = arith.constant 0 : index
    %15 = vector.load %arg6[%c0_10, %c0_11] : memref<256x1xf32, #tpu.memory_space<vmem>>, vector<256x1xf32>
    tpu.vector_store %arg6[%c0_10, %c0_11], %14 {strides = array<i32>} : memref<256x1xf32, #tpu.memory_space<vmem>>, vector<256x1xf32>,
    return
  }
  func.func @transform_0(%arg0: i32) -> (i32, i32) {
    %c0_i32 = arith.constant 0 : i32
    %c0_i32_0 = arith.constant 0 : i32
    return %arg0, %c0_i32 : i32, i32
  }
  func.func @transform_1(%arg0: i32) -> (i32, i32) {
    %c0_i32 = arith.constant 0 : i32
    %c0_i32_0 = arith.constant 0 : i32
    %c0_i32_1 = arith.constant 0 : i32
    return %c0_i32, %c0_i32_0 : i32, i32
  }
  func.func @transform_2(%arg0: i32) -> (i32, i32) {
    %c0_i32 = arith.constant 0 : i32
    %c0_i32_0 = arith.constant 0 : i32
    %c0_i32_1 = arith.constant 0 : i32
    return %c0_i32, %c0_i32_0 : i32, i32
  }
  func.func @transform_3(%arg0: i32) -> (i32, i32) {
    %c0_i32 = arith.constant 0 : i32
    %c0_i32_0 = arith.constant 0 : i32
    %c0_i32_1 = arith.constant 0 : i32
    return %c0_i32, %c0_i32_0 : i32, i32
  }
  func.func @transform_4(%arg0: i32) -> (i32, i32) {
    %c0_i32 = arith.constant 0 : i32
    %c0_i32_0 = arith.constant 0 : i32
    %c0_i32_1 = arith.constant 0 : i32
    return %c0_i32, %c0_i32_0 : i32, i32
  }
  func.func @transform_5(%arg0: i32) -> (i32, i32) {
    %c0_i32 = arith.constant 0 : i32
    %c0_i32_0 = arith.constant 0 : i32
    return %arg0, %c0_i32 : i32, i32
  }
}

</mosaic_0001>

<llo_original>
// kernel: tpu_custom_call.1
$region0: #{tpu_custom_call.1}
  #allocation0 [shape = 'u32[]', space=smem, size = 0x4, offset = 0x4, fixed_abs, tag = 'smem constant byte address 0x4 - core index']
  #allocation1 [shape = 'u32[72,128]{1,0:T(1,128)}', space=vmem, size = 0x9000, scoped, tag = 'internal scratch']
  #allocation2 [shape = 'f32[1,1]{1,0:T(1,128)S(1)}', space=vmem, size = 0x200, scoped, tag = 'scoped memory for tpu_custom_call.1']
  %s0 = inlined_call_operand.hbm [shape: f32[300,1024], index: 0, kind: input, shape index: {}]
  %s1 = inlined_call_operand.hbm [shape: f32[1024,256], index: 1, kind: input, shape index: {}]
  %s2 = inlined_call_operand.hbm [shape: f32[1,256], index: 2, kind: input, shape index: {}]
  %s3 = inlined_call_operand.hbm [shape: f32[1,256], index: 3, kind: input, shape index: {}]
  %s4 = inlined_call_operand.<no memory space> [shape: f32[1,1], index: 4, kind: input, shape index: {}]
  %s5 = inlined_call_operand.vmem [shape: f32[300,1], index: 5, kind: output, shape index: {}]
  %s6 = sld [smem:[#allocation0]]
  $region117: #{tpu_custom_call.1} parent=0
    _
  %s8 = ssub.s32 1, %s6
  %s9 = scalar_select 0, %s8, %s6
  %v10 = vstv %s4
  %11 = vst [vmem:[#allocation2] sm:$0x1] %v10
  $region1: #{tpu_custom_call.1} parent=0
    #allocation3 [shape = 'u8[2097152]{0}', space=vmem, size = 0x200000, scoped, tag = 'input window, operand 0']
    #allocation4 [shape = 's32[2]{0}', space=sflag, size = 0x8, scoped, tag = 'scoped memory for tpu_custom_call.1']
    #allocation5 [shape = 'u8[1048576]{0}', space=vmem, size = 0x100000, scoped, tag = 'input window, operand 1, single buffered']
    #allocation6 [shape = 's32[1]{0}', space=sflag, size = 0x4, scoped, tag = 'scoped memory for tpu_custom_call.1']
    #allocation7 [shape = 'u8[1024]{0}', space=vmem, size = 0x400, scoped, tag = 'input window, operand 2, single buffered']
    #allocation8 [shape = 'u8[1024]{0}', space=vmem, size = 0x400, scoped, tag = 'input window, operand 3, single buffered']
    #allocation9 [shape = 's32[1]{0}', space=sflag, size = 0x4, scoped, tag = 'scoped memory for tpu_custom_call.1']
    #allocation10 [shape = 'u8[262144]{0}', space=vmem, size = 0x40000, scoped, tag = 'output window, operand 0']
    %12 = vsyncpa [#allocation4], 0
    %s13 = scalar_lea.sflag [#allocation4], 1
    %14 = vsyncpa %s13, 0
    %15 = vsyncpa [#allocation6], 0
    %16 = vsyncpa [#allocation9], 0
    loop: start=0, step=1, limit=4
    $region2: #{tpu_custom_call.1} parent=1 // loop_pre_header
      _
    $region3: #{tpu_custom_call.1} parent=1 // loop_header
      %s18 = sphi 0, %s22
      %p19 = scmp.ge.s32.totalorder %s18, 4
      %s28 = sphi 0, %s30
      %s31 = sphi 0, %s28
      %s32 = sphi 0, %s31
      %s48 = sphi 0, %s32
      %s52 = sphi 0, %s52
      %s54 = sphi 0, %s52
      %s55 = sphi 0, %s54
      %s69 = sphi 0, %s55
      %s73 = sphi 0, %s73
      %s75 = sphi 0, %s73
      %s76 = sphi 0, %s75
      %s90 = sphi 0, %s76
      %s94 = sphi 0, %s94
      %s96 = sphi 0, %s94
      %s97 = sphi 0, %s96
      %s111 = sphi 0, %s97
      %s115 = sphi 0, %s115
      %s117 = sphi 0, %s115
      %s118 = sphi 0, %s117
      %s132 = sphi 0, %s118
      %s138 = sphi 0, %s140
      %s141 = sphi 0, %s138
      %s142 = sphi 0, %s141
      %s158 = sphi 0, %s142
    $region4: #{tpu_custom_call.1} parent=1 // loop_header_branch
      %21 = sbr.rel (%p19) target = $region8
    $region5: #{tpu_custom_call.1} parent=1 // loop_body
      %s23 = ssub.s32 %s18, 1
      %s24 = ssub.s32 %s18, 2
      %s25 = sadd.s32 %s18, 1
      %s26 = ssub.s32 %s18, %s25
      %p27 = scmp.eq.s32.totalorder %s26, 0
      %s29 = sadd.s32 %s28, 1
      %s30 = scalar_select %p27, %s28, %s29
      %p33 = pneg %p27
      %p34 = scmp.eq.s32.totalorder %s18, 1
      %p35 = por %p33, %p34
      %p36 = scmp.ne.s32.totalorder %s28, %s31
      %p37 = scmp.eq.s32.totalorder %s18, 0
      %p38 = por %p36, %p37
      %p39 = scmp.ne.s32.totalorder %s28, %s31
      %p40 = scmp.eq.s32.totalorder %s23, 1
      %p41 = por %p39, %p40
      %p42 = scmp.ne.s32.totalorder %s31, %s32
      %p43 = scmp.eq.s32.totalorder %s23, 0
      %p44 = por %p42, %p43
      %p45 = scmp.ne.s32.totalorder %s31, %s32
      %p46 = scmp.eq.s32.totalorder %s24, 1
      %p47 = por %p45, %p46
      %p49 = scmp.ne.s32.totalorder %s32, %s48
      %p50 = scmp.eq.s32.totalorder %s24, 0
      %p51 = por %p49, %p50
      %s53 = sadd.s32 %s52, 1
      %p56 = scmp.eq.s32.totalorder %s18, 1
      %p57 = scmp.ne.s32.totalorder %s52, %s54
      %p58 = scmp.eq.s32.totalorder %s18, 0
      %p59 = por %p57, %p58
      %p60 = scmp.ne.s32.totalorder %s52, %s54
      %p61 = scmp.eq.s32.totalorder %s23, 1
      %p62 = por %p60, %p61
      %p63 = scmp.ne.s32.totalorder %s54, %s55
      %p64 = scmp.eq.s32.totalorder %s23, 0
      %p65 = por %p63, %p64
      %p66 = scmp.ne.s32.totalorder %s54, %s55
      %p67 = scmp.eq.s32.totalorder %s24, 1
      %p68 = por %p66, %p67
      %p70 = scmp.ne.s32.totalorder %s55, %s69
      %p71 = scmp.eq.s32.totalorder %s24, 0
      %p72 = por %p70, %p71
      %s74 = sadd.s32 %s73, 1
      %p77 = scmp.eq.s32.totalorder %s18, 1
      %p78 = scmp.ne.s32.totalorder %s73, %s75
      %p79 = scmp.eq.s32.totalorder %s18, 0
      %p80 = por %p78, %p79
      %p81 = scmp.ne.s32.totalorder %s73, %s75
      %p82 = scmp.eq.s32.totalorder %s23, 1
      %p83 = por %p81, %p82
      %p84 = scmp.ne.s32.totalorder %s75, %s76
      %p85 = scmp.eq.s32.totalorder %s23, 0
      %p86 = por %p84, %p85
      %p87 = scmp.ne.s32.totalorder %s75, %s76
      %p88 = scmp.eq.s32.totalorder %s24, 1
      %p89 = por %p87, %p88
      %p91 = scmp.ne.s32.totalorder %s76, %s90
      %p92 = scmp.eq.s32.totalorder %s24, 0
      %p93 = por %p91, %p92
      %s95 = sadd.s32 %s94, 1
      %p98 = scmp.eq.s32.totalorder %s18, 1
      %p99 = scmp.ne.s32.totalorder %s94, %s96
      %p100 = scmp.eq.s32.totalorder %s18, 0
      %p101 = por %p99, %p100
      %p102 = scmp.ne.s32.totalorder %s94, %s96
      %p103 = scmp.eq.s32.totalorder %s23, 1
      %p104 = por %p102, %p103
      %p105 = scmp.ne.s32.totalorder %s96, %s97
      %p106 = scmp.eq.s32.totalorder %s23, 0
      %p107 = por %p105, %p106
      %p108 = scmp.ne.s32.totalorder %s96, %s97
      %p109 = scmp.eq.s32.totalorder %s24, 1
      %p110 = por %p108, %p109
      %p112 = scmp.ne.s32.totalorder %s97, %s111
      %p113 = scmp.eq.s32.totalorder %s24, 0
      %p114 = por %p112, %p113
      %s116 = sadd.s32 %s115, 1
      %p119 = scmp.eq.s32.totalorder %s18, 1
      %p120 = scmp.ne.s32.totalorder %s115, %s117
      %p121 = scmp.eq.s32.totalorder %s18, 0
      %p122 = por %p120, %p121
      %p123 = scmp.ne.s32.totalorder %s115, %s117
      %p124 = scmp.eq.s32.totalorder %s23, 1
      %p125 = por %p123, %p124
      %p126 = scmp.ne.s32.totalorder %s117, %s118
      %p127 = scmp.eq.s32.totalorder %s23, 0
      %p128 = por %p126, %p127
      %p129 = scmp.ne.s32.totalorder %s117, %s118
      %p130 = scmp.eq.s32.totalorder %s24, 1
      %p131 = por %p129, %p130
      %p133 = scmp.ne.s32.totalorder %s118, %s132
      %p134 = scmp.eq.s32.totalorder %s24, 0
      %p135 = por %p133, %p134
      %s136 = ssub.s32 %s18, %s25
      %p137 = scmp.eq.s32.totalorder %s136, 0
      %s139 = sadd.s32 %s138, 1
      %s140 = scalar_select %p137, %s138, %s139
      %p143 = pneg %p137
      %p144 = scmp.eq.s32.totalorder %s18, 1
      %p145 = por %p143, %p144
      %p146 = scmp.ne.s32.totalorder %s138, %s141
      %p147 = scmp.eq.s32.totalorder %s18, 0
      %p148 = por %p146, %p147
      %p149 = scmp.ne.s32.totalorder %s138, %s141
      %p150 = scmp.eq.s32.totalorder %s23, 1
      %p151 = por %p149, %p150
      %p152 = scmp.ne.s32.totalorder %s141, %s142
      %p153 = scmp.eq.s32.totalorder %s23, 0
      %p154 = por %p152, %p153
      %p155 = scmp.ne.s32.totalorder %s141, %s142
      %p156 = scmp.eq.s32.totalorder %s24, 1
      %p157 = por %p155, %p156
      %p159 = scmp.ne.s32.totalorder %s142, %s158
      %p160 = scmp.eq.s32.totalorder %s24, 0
      %p161 = por %p159, %p160
      %p162 = scmp.le.s32.totalorder 1, %s18
      %p163 = scmp.lt.s32.totalorder %s18, 3
      %p164 = pnand %p162, %p163
      %p165 = pneg %p164
      // Predicated region
      $region9: #{tpu_custom_call.1} parent=5 // pred_check
        _
      $region10: #{tpu_custom_call.1} parent=5 // pred_check_branch
        %167 = sbr.rel (%p164) target = $region12
      $region11: #{tpu_custom_call.1} parent=5 // pred_region
        %s168 = ssub.s32 %s18, 1
        // Predicated region
        $region13: #{tpu_custom_call.1} parent=11 // pred_check
          %p169 = pneg %p65
        $region14: #{tpu_custom_call.1} parent=11 // pred_check_branch
          %171 = sbr.rel (%p169) target = $region16
        $region15: #{tpu_custom_call.1} parent=11 // pred_region
          %173 = vsyncadd [#allocation6], 0
          %s174 = sshll.u32 %s1, 4
          %s175 = int_to_ptr.hbm [resolvable:$true] %s174
          %s176 = sshll.u32 [#allocation5], 4
          %s177 = int_to_ptr.vmem [resolvable:$true] %s176
          %182 = dma.hbm_to_vmem [thread:$0]  %s175, 32768, %s177, [#allocation6], 256, 256, 16
        $region16: #{tpu_custom_call.1} parent=11 // pred_fallthru
          _
        // Predicated region
        $region17: #{tpu_custom_call.1} parent=11 // pred_check
          %p183 = pneg %p86
        $region18: #{tpu_custom_call.1} parent=11 // pred_check_branch
          %185 = sbr.rel (%p183) target = $region20
        $region19: #{tpu_custom_call.1} parent=11 // pred_region
          %187 = vsyncadd [#allocation6], 0
          %s189 = sshll.u32 %s2, 4
          %s190 = int_to_ptr.hbm [resolvable:$true] %s189
          %s191 = sshll.u32 [#allocation7], 4
          %s192 = int_to_ptr.vmem [resolvable:$true] %s191
          %194 = dma.hbm_to_vmem [thread:$0]  %s190, 32, %s192, [#allocation6]
        $region20: #{tpu_custom_call.1} parent=11 // pred_fallthru
          _
        // Predicated region
        $region21: #{tpu_custom_call.1} parent=11 // pred_check
          %p195 = pneg %p107
        $region22: #{tpu_custom_call.1} parent=11 // pred_check_branch
          %197 = sbr.rel (%p195) target = $region24
        $region23: #{tpu_custom_call.1} parent=11 // pred_region
          %199 = vsyncadd [#allocation9], 0
          %s201 = sshll.u32 %s3, 4
          %s202 = int_to_ptr.hbm [resolvable:$true] %s201
          %s203 = sshll.u32 [#allocation8], 4
          %s204 = int_to_ptr.vmem [resolvable:$true] %s203
          %206 = dma.hbm_to_vmem [thread:$0]  %s202, 32, %s204, [#allocation9]
        $region24: #{tpu_custom_call.1} parent=11 // pred_fallthru
          _
        // Predicated region
        $region25: #{tpu_custom_call.1} parent=11 // pred_check
          %p207 = pneg %p128
        $region26: #{tpu_custom_call.1} parent=11 // pred_check_branch
          %209 = sbr.rel (%p207) target = $region28
        $region27: #{tpu_custom_call.1} parent=11 // pred_region
          _
        $region28: #{tpu_custom_call.1} parent=11 // pred_fallthru
          _
      $region12: #{tpu_custom_call.1} parent=5 // pred_fallthru
        _
      %p210 = scmp.lt.s32.totalorder %s18, 2
      // Predicated region
      $region29: #{tpu_custom_call.1} parent=5 // pred_check
        %p211 = pneg %p210
      $region30: #{tpu_custom_call.1} parent=5 // pred_check_branch
        %213 = sbr.rel (%p211) target = $region32
      $region31: #{tpu_custom_call.1} parent=5 // pred_region
        // Predicated region
        $region33: #{tpu_custom_call.1} parent=31 // pred_check
          %p214 = pneg %p38
        $region34: #{tpu_custom_call.1} parent=31 // pred_check_branch
          %216 = sbr.rel (%p214) target = $region36
        $region35: #{tpu_custom_call.1} parent=31 // pred_region
          %s217 = sand.u32 %s28, 1
          %s218 = scalar_lea.sflag [#allocation4], %s217
          %s219 = sand.u32 %s28, 1
          %s220 = smul.addr %s219, 2048
          %s221 = scalar_lea.vmem [#allocation3], %s220
          %s222 = smul.u32 32, %s18
          %s223 = ssub.s32 38, %s222
          %p224 = scmp.lt.s32.totalorder %s223, 32
          %s225 = scalar_select %p224, %s223, 32
          %s226 = smul.u32 8, %s225
          %s227 = smul.u32 %s226, 8
          %s228 = ssub.s32 2048, %s227
          %s229 = sshll.u32 %s228, 4
          %230 = vsyncadd %s218, %s229
          %p231 = scmp.ne.s32.totalorder 0, %s227
          %s232 = smul.addr %s222, 8
          %s233 = smul.addr %s232, 8
          %s234 = scalar_lea.hbm %s0, %s233
          %s235 = smul.u32 64, %s225
          %s236 = sshll.u32 %s234, 4
          %s237 = int_to_ptr.hbm [resolvable:$true] %s236
          %s238 = sshll.u32 %s221, 4
          %s239 = int_to_ptr.vmem [resolvable:$true] %s238
          %s240 = sshll.u32 %s235, 4
          %244 = dma.hbm_to_vmem [thread:$0]  (%p231), %s237, %s240, %s239, %s218, 1024, 1024, 64
        $region36: #{tpu_custom_call.1} parent=31 // pred_fallthru
          _
      $region32: #{tpu_custom_call.1} parent=5 // pred_fallthru
        _
      %p245 = scmp.le.s32.totalorder 1, %s18
      %p246 = scmp.lt.s32.totalorder %s18, 3
      %p247 = pnand %p245, %p246
      %p248 = pneg %p247
      // Predicated region
      $region37: #{tpu_custom_call.1} parent=5 // pred_check
        _
      $region38: #{tpu_custom_call.1} parent=5 // pred_check_branch
        %250 = sbr.rel (%p247) target = $region40
      $region39: #{tpu_custom_call.1} parent=5 // pred_region
        %s251 = ssub.s32 %s18, 1
        %s252 = sand.u32 %s31, 1
        %s253 = scalar_lea.sflag [#allocation4], %s252
        %s254 = sand.u32 %s31, 1
        %s255 = smul.addr %s254, 2048
        %s256 = scalar_lea.vmem [#allocation3], %s255
        // Predicated region
        $region41: #{tpu_custom_call.1} parent=39 // pred_check
          %p257 = pneg %p44
        $region42: #{tpu_custom_call.1} parent=39 // pred_check_branch
          %259 = sbr.rel (%p257) target = $region44
        $region43: #{tpu_custom_call.1} parent=39 // pred_region
          %261 = dma.done %s253, 32768
        $region44: #{tpu_custom_call.1} parent=39 // pred_fallthru
          _
        // Predicated region
        $region45: #{tpu_custom_call.1} parent=39 // pred_check
          %p262 = pneg %p65
        $region46: #{tpu_custom_call.1} parent=39 // pred_check_branch
          %264 = sbr.rel (%p262) target = $region48
        $region47: #{tpu_custom_call.1} parent=39 // pred_region
          %266 = dma.done [#allocation6], 32768
        $region48: #{tpu_custom_call.1} parent=39 // pred_fallthru
          _
        // Predicated region
        $region49: #{tpu_custom_call.1} parent=39 // pred_check
          %p267 = pneg %p86
        $region50: #{tpu_custom_call.1} parent=39 // pred_check_branch
          %269 = sbr.rel (%p267) target = $region52
        $region51: #{tpu_custom_call.1} parent=39 // pred_region
          %271 = dma.done [#allocation6], 32
        $region52: #{tpu_custom_call.1} parent=39 // pred_fallthru
          _
        // Predicated region
        $region53: #{tpu_custom_call.1} parent=39 // pred_check
          %p272 = pneg %p107
        $region54: #{tpu_custom_call.1} parent=39 // pred_check_branch
          %274 = sbr.rel (%p272) target = $region56
        $region55: #{tpu_custom_call.1} parent=39 // pred_region
          %276 = dma.done [#allocation9], 32
        $region56: #{tpu_custom_call.1} parent=39 // pred_fallthru
          _
        %s277 = sand.u32 %s31, 1
        %s278 = scalar_lea.sflag [#allocation4], %s277
        %s279 = sand.u32 %s31, 1
        %s280 = smul.addr %s279, 2048
        %s281 = scalar_lea.vmem [#allocation3], %s280
        %p282 = pneg %p44
        %p283 = pneg %p41
        %p284 = pneg %p65
        %p285 = pneg %p62
        %p286 = pneg %p86
        %p287 = pneg %p83
        %p288 = pneg %p107
        %p289 = pneg %p104
        %p290 = pneg %p128
        %p291 = pneg %p125
        %p292 = pneg %p154
        %p293 = pneg %p151
        %s294 = sand.u32 %s141, 1
        %s295 = sand.u32 %s141, 1
        %s296 = smul.addr %s295, 256
        %s297 = scalar_lea.vmem [#allocation10], %s296
        %s298 = smul.u32 32, %s23
        %s299 = ssub.s32 38, %s298
        %p300 = scmp.lt.s32.totalorder %s299, 32
        %s301 = scalar_select %p300, %s299, 32
        %s302 = smul.u32 8, %s301
        %s303 = smul.u32 %s302, 8
        %s304 = smul.u32 32, %s23
        %s305 = ssub.s32 38, %s304
        %p306 = scmp.lt.s32.totalorder %s305, 32
        %s307 = scalar_select %p306, %s305, 32
        %s308 = smul.u32 8, %s307
        %v309 = vld [vmem:[%s256] sm:$0xff]
        %v310 = vld [vmem:[%s256 + $0x8] sm:$0xff]
        %v311 = vld [vmem:[%s256 + $0x10] sm:$0xff]
        %v312 = vld [vmem:[%s256 + $0x18] sm:$0xff]
        %v313 = vld [vmem:[%s256 + $0x20] sm:$0xff]
        %v314 = vld [vmem:[%s256 + $0x28] sm:$0xff]
        %v315 = vld [vmem:[%s256 + $0x30] sm:$0xff]
        %v316 = vld [vmem:[%s256 + $0x38] sm:$0xff]
        %v317 = vld [vmem:[%s256 + $0x40] sm:$0xff]
        %v318 = vld [vmem:[%s256 + $0x48] sm:$0xff]
        %v319 = vld [vmem:[%s256 + $0x50] sm:$0xff]
        %v320 = vld [vmem:[%s256 + $0x58] sm:$0xff]
        %v321 = vld [vmem:[%s256 + $0x60] sm:$0xff]
        %v322 = vld [vmem:[%s256 + $0x68] sm:$0xff]
        %v323 = vld [vmem:[%s256 + $0x70] sm:$0xff]
        %v324 = vld [vmem:[%s256 + $0x78] sm:$0xff]
        %v325 = vld [vmem:[%s256 + $0x80] sm:$0xff]
        %v326 = vld [vmem:[%s256 + $0x88] sm:$0xff]
        %v327 = vld [vmem:[%s256 + $0x90] sm:$0xff]
        %v328 = vld [vmem:[%s256 + $0x98] sm:$0xff]
        %v329 = vld [vmem:[%s256 + $0xa0] sm:$0xff]
        %v330 = vld [vmem:[%s256 + $0xa8] sm:$0xff]
        %v331 = vld [vmem:[%s256 + $0xb0] sm:$0xff]
        %v332 = vld [vmem:[%s256 + $0xb8] sm:$0xff]
        %v333 = vld [vmem:[%s256 + $0xc0] sm:$0xff]
        %v334 = vld [vmem:[%s256 + $0xc8] sm:$0xff]
        %v335 = vld [vmem:[%s256 + $0xd0] sm:$0xff]
        %v336 = vld [vmem:[%s256 + $0xd8] sm:$0xff]
        %v337 = vld [vmem:[%s256 + $0xe0] sm:$0xff]
        %v338 = vld [vmem:[%s256 + $0xe8] sm:$0xff]
        %v339 = vld [vmem:[%s256 + $0xf0] sm:$0xff]
        %v340 = vld [vmem:[%s256 + $0xf8] sm:$0xff]
        %v341 = vld [vmem:[%s256 + $0x100] sm:$0xff]
        %v342 = vld [vmem:[%s256 + $0x108] sm:$0xff]
        %v343 = vld [vmem:[%s256 + $0x110] sm:$0xff]
        %v344 = vld [vmem:[%s256 + $0x118] sm:$0xff]
        %v345 = vld [vmem:[%s256 + $0x120] sm:$0xff]
        %v346 = vld [vmem:[%s256 + $0x128] sm:$0xff]
        %v347 = vld [vmem:[%s256 + $0x130] sm:$0xff]
        %v348 = vld [vmem:[%s256 + $0x138] sm:$0xff]
        %v349 = vld [vmem:[%s256 + $0x140] sm:$0xff]
        %v350 = vld [vmem:[%s256 + $0x148] sm:$0xff]
        %v351 = vld [vmem:[%s256 + $0x150] sm:$0xff]
        %v352 = vld [vmem:[%s256 + $0x158] sm:$0xff]
        %v353 = vld [vmem:[%s256 + $0x160] sm:$0xff]
        %v354 = vld [vmem:[%s256 + $0x168] sm:$0xff]
        %v355 = vld [vmem:[%s256 + $0x170] sm:$0xff]
        %v356 = vld [vmem:[%s256 + $0x178] sm:$0xff]
        %v357 = vld [vmem:[%s256 + $0x180] sm:$0xff]
        %v358 = vld [vmem:[%s256 + $0x188] sm:$0xff]
        %v359 = vld [vmem:[%s256 + $0x190] sm:$0xff]
        %v360 = vld [vmem:[%s256 + $0x198] sm:$0xff]
        %v361 = vld [vmem:[%s256 + $0x1a0] sm:$0xff]
        %v362 = vld [vmem:[%s256 + $0x1a8] sm:$0xff]
        %v363 = vld [vmem:[%s256 + $0x1b0] sm:$0xff]
        %v364 = vld [vmem:[%s256 + $0x1b8] sm:$0xff]
        %v365 = vld [vmem:[%s256 + $0x1c0] sm:$0xff]
        %v366 = vld [vmem:[%s256 + $0x1c8] sm:$0xff]
        %v367 = vld [vmem:[%s256 + $0x1d0] sm:$0xff]
        %v368 = vld [vmem:[%s256 + $0x1d8] sm:$0xff]
        %v369 = vld [vmem:[%s256 + $0x1e0] sm:$0xff]
        %v370 = vld [vmem:[%s256 + $0x1e8] sm:$0xff]
        %v371 = vld [vmem:[%s256 + $0x1f0] sm:$0xff]
        %v372 = vld [vmem:[%s256 + $0x1f8] sm:$0xff]
        %v373 = vld [vmem:[%s256 + $0x200] sm:$0xff]
        %v374 = vld [vmem:[%s256 + $0x208] sm:$0xff]
        %v375 = vld [vmem:[%s256 + $0x210] sm:$0xff]
        %v376 = vld [vmem:[%s256 + $0x218] sm:$0xff]
        %v377 = vld [vmem:[%s256 + $0x220] sm:$0xff]
        %v378 = vld [vmem:[%s256 + $0x228] sm:$0xff]
        %v379 = vld [vmem:[%s256 + $0x230] sm:$0xff]
        %v380 = vld [vmem:[%s256 + $0x238] sm:$0xff]
        %v381 = vld [vmem:[%s256 + $0x240] sm:$0xff]
        %v382 = vld [vmem:[%s256 + $0x248] sm:$0xff]
        %v383 = vld [vmem:[%s256 + $0x250] sm:$0xff]
        %v384 = vld [vmem:[%s256 + $0x258] sm:$0xff]
        %v385 = vld [vmem:[%s256 + $0x260] sm:$0xff]
        %v386 = vld [vmem:[%s256 + $0x268] sm:$0xff]
        %v387 = vld [vmem:[%s256 + $0x270] sm:$0xff]
        %v388 = vld [vmem:[%s256 + $0x278] sm:$0xff]
        %v389 = vld [vmem:[%s256 + $0x280] sm:$0xff]
        %v390 = vld [vmem:[%s256 + $0x288] sm:$0xff]
        %v391 = vld [vmem:[%s256 + $0x290] sm:$0xff]
        %v392 = vld [vmem:[%s256 + $0x298] sm:$0xff]
        %v393 = vld [vmem:[%s256 + $0x2a0] sm:$0xff]
        %v394 = vld [vmem:[%s256 + $0x2a8] sm:$0xff]
        %v395 = vld [vmem:[%s256 + $0x2b0] sm:$0xff]
        %v396 = vld [vmem:[%s256 + $0x2b8] sm:$0xff]
        %v397 = vld [vmem:[%s256 + $0x2c0] sm:$0xff]
        %v398 = vld [vmem:[%s256 + $0x2c8] sm:$0xff]
        %v399 = vld [vmem:[%s256 + $0x2d0] sm:$0xff]
        %v400 = vld [vmem:[%s256 + $0x2d8] sm:$0xff]
        %v401 = vld [vmem:[%s256 + $0x2e0] sm:$0xff]
        %v402 = vld [vmem:[%s256 + $0x2e8] sm:$0xff]
        %v403 = vld [vmem:[%s256 + $0x2f0] sm:$0xff]
        %v404 = vld [vmem:[%s256 + $0x2f8] sm:$0xff]
        %v405 = vld [vmem:[%s256 + $0x300] sm:$0xff]
        %v406 = vld [vmem:[%s256 + $0x308] sm:$0xff]
        %v407 = vld [vmem:[%s256 + $0x310] sm:$0xff]
        %v408 = vld [vmem:[%s256 + $0x318] sm:$0xff]
        %v409 = vld [vmem:[%s256 + $0x320] sm:$0xff]
        %v410 = vld [vmem:[%s256 + $0x328] sm:$0xff]
        %v411 = vld [vmem:[%s256 + $0x330] sm:$0xff]
        %v412 = vld [vmem:[%s256 + $0x338] sm:$0xff]
        %v413 = vld [vmem:[%s256 + $0x340] sm:$0xff]
        %v414 = vld [vmem:[%s256 + $0x348] sm:$0xff]
        %v415 = vld [vmem:[%s256 + $0x350] sm:$0xff]
        %v416 = vld [vmem:[%s256 + $0x358] sm:$0xff]
        %v417 = vld [vmem:[%s256 + $0x360] sm:$0xff]
        %v418 = vld [vmem:[%s256 + $0x368] sm:$0xff]
        %v419 = vld [vmem:[%s256 + $0x370] sm:$0xff]
        %v420 = vld [vmem:[%s256 + $0x378] sm:$0xff]
        %v421 = vld [vmem:[%s256 + $0x380] sm:$0xff]
        %v422 = vld [vmem:[%s256 + $0x388] sm:$0xff]
        %v423 = vld [vmem:[%s256 + $0x390] sm:$0xff]
        %v424 = vld [vmem:[%s256 + $0x398] sm:$0xff]
        %v425 = vld [vmem:[%s256 + $0x3a0] sm:$0xff]
        %v426 = vld [vmem:[%s256 + $0x3a8] sm:$0xff]
        %v427 = vld [vmem:[%s256 + $0x3b0] sm:$0xff]
        %v428 = vld [vmem:[%s256 + $0x3b8] sm:$0xff]
        %v429 = vld [vmem:[%s256 + $0x3c0] sm:$0xff]
        %v430 = vld [vmem:[%s256 + $0x3c8] sm:$0xff]
        %v431 = vld [vmem:[%s256 + $0x3d0] sm:$0xff]
        %v432 = vld [vmem:[%s256 + $0x3d8] sm:$0xff]
        %v433 = vld [vmem:[%s256 + $0x3e0] sm:$0xff]
        %v434 = vld [vmem:[%s256 + $0x3e8] sm:$0xff]
        %v435 = vld [vmem:[%s256 + $0x3f0] sm:$0xff]
        %v436 = vld [vmem:[%s256 + $0x3f8] sm:$0xff]
        %v437 = vld [vmem:[%s256 + $0x400] sm:$0xff]
        %v438 = vld [vmem:[%s256 + $0x408] sm:$0xff]
        %v439 = vld [vmem:[%s256 + $0x410] sm:$0xff]
        %v440 = vld [vmem:[%s256 + $0x418] sm:$0xff]
        %v441 = vld [vmem:[%s256 + $0x420] sm:$0xff]
        %v442 = vld [vmem:[%s256 + $0x428] sm:$0xff]
        %v443 = vld [vmem:[%s256 + $0x430] sm:$0xff]
        %v444 = vld [vmem:[%s256 + $0x438] sm:$0xff]
        %v445 = vld [vmem:[%s256 + $0x440] sm:$0xff]
        %v446 = vld [vmem:[%s256 + $0x448] sm:$0xff]
        %v447 = vld [vmem:[%s256 + $0x450] sm:$0xff]
        %v448 = vld [vmem:[%s256 + $0x458] sm:$0xff]
        %v449 = vld [vmem:[%s256 + $0x460] sm:$0xff]
        %v450 = vld [vmem:[%s256 + $0x468] sm:$0xff]
        %v451 = vld [vmem:[%s256 + $0x470] sm:$0xff]
        %v452 = vld [vmem:[%s256 + $0x478] sm:$0xff]
        %v453 = vld [vmem:[%s256 + $0x480] sm:$0xff]
        %v454 = vld [vmem:[%s256 + $0x488] sm:$0xff]
        %v455 = vld [vmem:[%s256 + $0x490] sm:$0xff]
        %v456 = vld [vmem:[%s256 + $0x498] sm:$0xff]
        %v457 = vld [vmem:[%s256 + $0x4a0] sm:$0xff]
        %v458 = vld [vmem:[%s256 + $0x4a8] sm:$0xff]
        %v459 = vld [vmem:[%s256 + $0x4b0] sm:$0xff]
        %v460 = vld [vmem:[%s256 + $0x4b8] sm:$0xff]
        %v461 = vld [vmem:[%s256 + $0x4c0] sm:$0xff]
        %v462 = vld [vmem:[%s256 + $0x4c8] sm:$0xff]
        %v463 = vld [vmem:[%s256 + $0x4d0] sm:$0xff]
        %v464 = vld [vmem:[%s256 + $0x4d8] sm:$0xff]
        %v465 = vld [vmem:[%s256 + $0x4e0] sm:$0xff]
        %v466 = vld [vmem:[%s256 + $0x4e8] sm:$0xff]
        %v467 = vld [vmem:[%s256 + $0x4f0] sm:$0xff]
        %v468 = vld [vmem:[%s256 + $0x4f8] sm:$0xff]
        %v469 = vld [vmem:[%s256 + $0x500] sm:$0xff]
        %v470 = vld [vmem:[%s256 + $0x508] sm:$0xff]
        %v471 = vld [vmem:[%s256 + $0x510] sm:$0xff]
        %v472 = vld [vmem:[%s256 + $0x518] sm:$0xff]
        %v473 = vld [vmem:[%s256 + $0x520] sm:$0xff]
        %v474 = vld [vmem:[%s256 + $0x528] sm:$0xff]
        %v475 = vld [vmem:[%s256 + $0x530] sm:$0xff]
        %v476 = vld [vmem:[%s256 + $0x538] sm:$0xff]
        %v477 = vld [vmem:[%s256 + $0x540] sm:$0xff]
        %v478 = vld [vmem:[%s256 + $0x548] sm:$0xff]
        %v479 = vld [vmem:[%s256 + $0x550] sm:$0xff]
        %v480 = vld [vmem:[%s256 + $0x558] sm:$0xff]
        %v481 = vld [vmem:[%s256 + $0x560] sm:$0xff]
        %v482 = vld [vmem:[%s256 + $0x568] sm:$0xff]
        %v483 = vld [vmem:[%s256 + $0x570] sm:$0xff]
        %v484 = vld [vmem:[%s256 + $0x578] sm:$0xff]
        %v485 = vld [vmem:[%s256 + $0x580] sm:$0xff]
        %v486 = vld [vmem:[%s256 + $0x588] sm:$0xff]
        %v487 = vld [vmem:[%s256 + $0x590] sm:$0xff]
        %v488 = vld [vmem:[%s256 + $0x598] sm:$0xff]
        %v489 = vld [vmem:[%s256 + $0x5a0] sm:$0xff]
        %v490 = vld [vmem:[%s256 + $0x5a8] sm:$0xff]
        %v491 = vld [vmem:[%s256 + $0x5b0] sm:$0xff]
        %v492 = vld [vmem:[%s256 + $0x5b8] sm:$0xff]
        %v493 = vld [vmem:[%s256 + $0x5c0] sm:$0xff]
        %v494 = vld [vmem:[%s256 + $0x5c8] sm:$0xff]
        %v495 = vld [vmem:[%s256 + $0x5d0] sm:$0xff]
        %v496 = vld [vmem:[%s256 + $0x5d8] sm:$0xff]
        %v497 = vld [vmem:[%s256 + $0x5e0] sm:$0xff]
        %v498 = vld [vmem:[%s256 + $0x5e8] sm:$0xff]
        %v499 = vld [vmem:[%s256 + $0x5f0] sm:$0xff]
        %v500 = vld [vmem:[%s256 + $0x5f8] sm:$0xff]
        %v501 = vld [vmem:[%s256 + $0x600] sm:$0xff]
        %v502 = vld [vmem:[%s256 + $0x608] sm:$0xff]
        %v503 = vld [vmem:[%s256 + $0x610] sm:$0xff]
        %v504 = vld [vmem:[%s256 + $0x618] sm:$0xff]
        %v505 = vld [vmem:[%s256 + $0x620] sm:$0xff]
        %v506 = vld [vmem:[%s256 + $0x628] sm:$0xff]
        %v507 = vld [vmem:[%s256 + $0x630] sm:$0xff]
        %v508 = vld [vmem:[%s256 + $0x638] sm:$0xff]
        %v509 = vld [vmem:[%s256 + $0x640] sm:$0xff]
        %v510 = vld [vmem:[%s256 + $0x648] sm:$0xff]
        %v511 = vld [vmem:[%s256 + $0x650] sm:$0xff]
        %v512 = vld [vmem:[%s256 + $0x658] sm:$0xff]
        %v513 = vld [vmem:[%s256 + $0x660] sm:$0xff]
        %v514 = vld [vmem:[%s256 + $0x668] sm:$0xff]
        %v515 = vld [vmem:[%s256 + $0x670] sm:$0xff]
        %v516 = vld [vmem:[%s256 + $0x678] sm:$0xff]
        %v517 = vld [vmem:[%s256 + $0x680] sm:$0xff]
        %v518 = vld [vmem:[%s256 + $0x688] sm:$0xff]
        %v519 = vld [vmem:[%s256 + $0x690] sm:$0xff]
        %v520 = vld [vmem:[%s256 + $0x698] sm:$0xff]
        %v521 = vld [vmem:[%s256 + $0x6a0] sm:$0xff]
        %v522 = vld [vmem:[%s256 + $0x6a8] sm:$0xff]
        %v523 = vld [vmem:[%s256 + $0x6b0] sm:$0xff]
        %v524 = vld [vmem:[%s256 + $0x6b8] sm:$0xff]
        %v525 = vld [vmem:[%s256 + $0x6c0] sm:$0xff]
        %v526 = vld [vmem:[%s256 + $0x6c8] sm:$0xff]
        %v527 = vld [vmem:[%s256 + $0x6d0] sm:$0xff]
        %v528 = vld [vmem:[%s256 + $0x6d8] sm:$0xff]
        %v529 = vld [vmem:[%s256 + $0x6e0] sm:$0xff]
        %v530 = vld [vmem:[%s256 + $0x6e8] sm:$0xff]
        %v531 = vld [vmem:[%s256 + $0x6f0] sm:$0xff]
        %v532 = vld [vmem:[%s256 + $0x6f8] sm:$0xff]
        %v533 = vld [vmem:[%s256 + $0x700] sm:$0xff]
        %v534 = vld [vmem:[%s256 + $0x708] sm:$0xff]
        %v535 = vld [vmem:[%s256 + $0x710] sm:$0xff]
        %v536 = vld [vmem:[%s256 + $0x718] sm:$0xff]
        %v537 = vld [vmem:[%s256 + $0x720] sm:$0xff]
        %v538 = vld [vmem:[%s256 + $0x728] sm:$0xff]
        %v539 = vld [vmem:[%s256 + $0x730] sm:$0xff]
        %v540 = vld [vmem:[%s256 + $0x738] sm:$0xff]
        %v541 = vld [vmem:[%s256 + $0x740] sm:$0xff]
        %v542 = vld [vmem:[%s256 + $0x748] sm:$0xff]
        %v543 = vld [vmem:[%s256 + $0x750] sm:$0xff]
        %v544 = vld [vmem:[%s256 + $0x758] sm:$0xff]
        %v545 = vld [vmem:[%s256 + $0x760] sm:$0xff]
        %v546 = vld [vmem:[%s256 + $0x768] sm:$0xff]
        %v547 = vld [vmem:[%s256 + $0x770] sm:$0xff]
        %v548 = vld [vmem:[%s256 + $0x778] sm:$0xff]
        %v549 = vld [vmem:[%s256 + $0x780] sm:$0xff]
        %v550 = vld [vmem:[%s256 + $0x788] sm:$0xff]
        %v551 = vld [vmem:[%s256 + $0x790] sm:$0xff]
        %v552 = vld [vmem:[%s256 + $0x798] sm:$0xff]
        %v553 = vld [vmem:[%s256 + $0x7a0] sm:$0xff]
        %v554 = vld [vmem:[%s256 + $0x7a8] sm:$0xff]
        %v555 = vld [vmem:[%s256 + $0x7b0] sm:$0xff]
        %v556 = vld [vmem:[%s256 + $0x7b8] sm:$0xff]
        %v557 = vld [vmem:[%s256 + $0x7c0] sm:$0xff]
        %v558 = vld [vmem:[%s256 + $0x7c8] sm:$0xff]
        %v559 = vld [vmem:[%s256 + $0x7d0] sm:$0xff]
        %v560 = vld [vmem:[%s256 + $0x7d8] sm:$0xff]
        %v561 = vld [vmem:[%s256 + $0x7e0] sm:$0xff]
        %v562 = vld [vmem:[%s256 + $0x7e8] sm:$0xff]
        %v563 = vld [vmem:[%s256 + $0x7f0] sm:$0xff]
        %v564 = vld [vmem:[%s256 + $0x7f8] sm:$0xff]
        %v565 = vld [vmem:[#allocation5] sm:$0xff]
        %v566 = vld [vmem:[#allocation5 + $0x8] sm:$0xff]
        %v567 = vld [vmem:[#allocation5 + $0x10] sm:$0xff]
        %v568 = vld [vmem:[#allocation5 + $0x18] sm:$0xff]
        %v569 = vld [vmem:[#allocation5 + $0x20] sm:$0xff]
        %v570 = vld [vmem:[#allocation5 + $0x28] sm:$0xff]
        %v571 = vld [vmem:[#allocation5 + $0x30] sm:$0xff]
        %v572 = vld [vmem:[#allocation5 + $0x38] sm:$0xff]
        %v573 = vld [vmem:[#allocation5 + $0x40] sm:$0xff]
        %v574 = vld [vmem:[#allocation5 + $0x48] sm:$0xff]
        %v575 = vld [vmem:[#allocation5 + $0x50] sm:$0xff]
        %v576 = vld [vmem:[#allocation5 + $0x58] sm:$0xff]
        %v577 = vld [vmem:[#allocation5 + $0x60] sm:$0xff]
        %v578 = vld [vmem:[#allocation5 + $0x68] sm:$0xff]
        %v579 = vld [vmem:[#allocation5 + $0x70] sm:$0xff]
        %v580 = vld [vmem:[#allocation5 + $0x78] sm:$0xff]
        %v581 = vld [vmem:[#allocation5 + $0x80] sm:$0xff]
        %v582 = vld [vmem:[#allocation5 + $0x88] sm:$0xff]
        %v583 = vld [vmem:[#allocation5 + $0x90] sm:$0xff]
        %v584 = vld [vmem:[#allocation5 + $0x98] sm:$0xff]
        %v585 = vld [vmem:[#allocation5 + $0xa0] sm:$0xff]
        %v586 = vld [vmem:[#allocation5 + $0xa8] sm:$0xff]
        %v587 = vld [vmem:[#allocation5 + $0xb0] sm:$0xff]
        %v588 = vld [vmem:[#allocation5 + $0xb8] sm:$0xff]
        %v589 = vld [vmem:[#allocation5 + $0xc0] sm:$0xff]
        %v590 = vld [vmem:[#allocation5 + $0xc8] sm:$0xff]
        %v591 = vld [vmem:[#allocation5 + $0xd0] sm:$0xff]
        %v592 = vld [vmem:[#allocation5 + $0xd8] sm:$0xff]
        %v593 = vld [vmem:[#allocation5 + $0xe0] sm:$0xff]
        %v594 = vld [vmem:[#allocation5 + $0xe8] sm:$0xff]
        %v595 = vld [vmem:[#allocation5 + $0xf0] sm:$0xff]
        %v596 = vld [vmem:[#allocation5 + $0xf8] sm:$0xff]
        %v597 = vld [vmem:[#allocation5 + $0x100] sm:$0xff]
        %v598 = vld [vmem:[#allocation5 + $0x108] sm:$0xff]
        %v599 = vld [vmem:[#allocation5 + $0x110] sm:$0xff]
        %v600 = vld [vmem:[#allocation5 + $0x118] sm:$0xff]
        %v601 = vld [vmem:[#allocation5 + $0x120] sm:$0xff]
        %v602 = vld [vmem:[#allocation5 + $0x128] sm:$0xff]
        %v603 = vld [vmem:[#allocation5 + $0x130] sm:$0xff]
        %v604 = vld [vmem:[#allocation5 + $0x138] sm:$0xff]
        %v605 = vld [vmem:[#allocation5 + $0x140] sm:$0xff]
        %v606 = vld [vmem:[#allocation5 + $0x148] sm:$0xff]
        %v607 = vld [vmem:[#allocation5 + $0x150] sm:$0xff]
        %v608 = vld [vmem:[#allocation5 + $0x158] sm:$0xff]
        %v609 = vld [vmem:[#allocation5 + $0x160] sm:$0xff]
        %v610 = vld [vmem:[#allocation5 + $0x168] sm:$0xff]
        %v611 = vld [vmem:[#allocation5 + $0x170] sm:$0xff]
        %v612 = vld [vmem:[#allocation5 + $0x178] sm:$0xff]
        %v613 = vld [vmem:[#allocation5 + $0x180] sm:$0xff]
        %v614 = vld [vmem:[#allocation5 + $0x188] sm:$0xff]
        %v615 = vld [vmem:[#allocation5 + $0x190] sm:$0xff]
        %v616 = vld [vmem:[#allocation5 + $0x198] sm:$0xff]
        %v617 = vld [vmem:[#allocation5 + $0x1a0] sm:$0xff]
        %v618 = vld [vmem:[#allocation5 + $0x1a8] sm:$0xff]
        %v619 = vld [vmem:[#allocation5 + $0x1b0] sm:$0xff]
        %v620 = vld [vmem:[#allocation5 + $0x1b8] sm:$0xff]
        %v621 = vld [vmem:[#allocation5 + $0x1c0] sm:$0xff]
        %v622 = vld [vmem:[#allocation5 + $0x1c8] sm:$0xff]
        %v623 = vld [vmem:[#allocation5 + $0x1d0] sm:$0xff]
        %v624 = vld [vmem:[#allocation5 + $0x1d8] sm:$0xff]
        %v625 = vld [vmem:[#allocation5 + $0x1e0] sm:$0xff]
        %v626 = vld [vmem:[#allocation5 + $0x1e8] sm:$0xff]
        %v627 = vld [vmem:[#allocation5 + $0x1f0] sm:$0xff]
        %v628 = vld [vmem:[#allocation5 + $0x1f8] sm:$0xff]
        %v629 = vld [vmem:[#allocation5 + $0x200] sm:$0xff]
        %v630 = vld [vmem:[#allocation5 + $0x208] sm:$0xff]
        %v631 = vld [vmem:[#allocation5 + $0x210] sm:$0xff]
        %v632 = vld [vmem:[#allocation5 + $0x218] sm:$0xff]
        %v633 = vld [vmem:[#allocation5 + $0x220] sm:$0xff]
        %v634 = vld [vmem:[#allocation5 + $0x228] sm:$0xff]
        %v635 = vld [vmem:[#allocation5 + $0x230] sm:$0xff]
        %v636 = vld [vmem:[#allocation5 + $0x238] sm:$0xff]
        %v637 = vld [vmem:[#allocation5 + $0x240] sm:$0xff]
        %v638 = vld [vmem:[#allocation5 + $0x248] sm:$0xff]
        %v639 = vld [vmem:[#allocation5 + $0x250] sm:$0xff]
        %v640 = vld [vmem:[#allocation5 + $0x258] sm:$0xff]
        %v641 = vld [vmem:[#allocation5 + $0x260] sm:$0xff]
        %v642 = vld [vmem:[#allocation5 + $0x268] sm:$0xff]
        %v643 = vld [vmem:[#allocation5 + $0x270] sm:$0xff]
        %v644 = vld [vmem:[#allocation5 + $0x278] sm:$0xff]
        %v645 = vld [vmem:[#allocation5 + $0x280] sm:$0xff]
        %v646 = vld [vmem:[#allocation5 + $0x288] sm:$0xff]
        %v647 = vld [vmem:[#allocation5 + $0x290] sm:$0xff]
        %v648 = vld [vmem:[#allocation5 + $0x298] sm:$0xff]
        %v649 = vld [vmem:[#allocation5 + $0x2a0] sm:$0xff]
        %v650 = vld [vmem:[#allocation5 + $0x2a8] sm:$0xff]
        %v651 = vld [vmem:[#allocation5 + $0x2b0] sm:$0xff]
        %v652 = vld [vmem:[#allocation5 + $0x2b8] sm:$0xff]
        %v653 = vld [vmem:[#allocation5 + $0x2c0] sm:$0xff]
        %v654 = vld [vmem:[#allocation5 + $0x2c8] sm:$0xff]
        %v655 = vld [vmem:[#allocation5 + $0x2d0] sm:$0xff]
        %v656 = vld [vmem:[#allocation5 + $0x2d8] sm:$0xff]
        %v657 = vld [vmem:[#allocation5 + $0x2e0] sm:$0xff]
        %v658 = vld [vmem:[#allocation5 + $0x2e8] sm:$0xff]
        %v659 = vld [vmem:[#allocation5 + $0x2f0] sm:$0xff]
        %v660 = vld [vmem:[#allocation5 + $0x2f8] sm:$0xff]
        %v661 = vld [vmem:[#allocation5 + $0x300] sm:$0xff]
        %v662 = vld [vmem:[#allocation5 + $0x308] sm:$0xff]
        %v663 = vld [vmem:[#allocation5 + $0x310] sm:$0xff]
        %v664 = vld [vmem:[#allocation5 + $0x318] sm:$0xff]
        %v665 = vld [vmem:[#allocation5 + $0x320] sm:$0xff]
        %v666 = vld [vmem:[#allocation5 + $0x328] sm:$0xff]
        %v667 = vld [vmem:[#allocation5 + $0x330] sm:$0xff]
        %v668 = vld [vmem:[#allocation5 + $0x338] sm:$0xff]
        %v669 = vld [vmem:[#allocation5 + $0x340] sm:$0xff]
        %v670 = vld [vmem:[#allocation5 + $0x348] sm:$0xff]
        %v671 = vld [vmem:[#allocation5 + $0x350] sm:$0xff]
        %v672 = vld [vmem:[#allocation5 + $0x358] sm:$0xff]
        %v673 = vld [vmem:[#allocation5 + $0x360] sm:$0xff]
        %v674 = vld [vmem:[#allocation5 + $0x368] sm:$0xff]
        %v675 = vld [vmem:[#allocation5 + $0x370] sm:$0xff]
        %v676 = vld [vmem:[#allocation5 + $0x378] sm:$0xff]
        %v677 = vld [vmem:[#allocation5 + $0x380] sm:$0xff]
        %v678 = vld [vmem:[#allocation5 + $0x388] sm:$0xff]
        %v679 = vld [vmem:[#allocation5 + $0x390] sm:$0xff]
        %v680 = vld [vmem:[#allocation5 + $0x398] sm:$0xff]
        %v681 = vld [vmem:[#allocation5 + $0x3a0] sm:$0xff]
        %v682 = vld [vmem:[#allocation5 + $0x3a8] sm:$0xff]
        %v683 = vld [vmem:[#allocation5 + $0x3b0] sm:$0xff]
        %v684 = vld [vmem:[#allocation5 + $0x3b8] sm:$0xff]
        %v685 = vld [vmem:[#allocation5 + $0x3c0] sm:$0xff]
        %v686 = vld [vmem:[#allocation5 + $0x3c8] sm:$0xff]
        %v687 = vld [vmem:[#allocation5 + $0x3d0] sm:$0xff]
        %v688 = vld [vmem:[#allocation5 + $0x3d8] sm:$0xff]
        %v689 = vld [vmem:[#allocation5 + $0x3e0] sm:$0xff]
        %v690 = vld [vmem:[#allocation5 + $0x3e8] sm:$0xff]
        %v691 = vld [vmem:[#allocation5 + $0x3f0] sm:$0xff]
        %v692 = vld [vmem:[#allocation5 + $0x3f8] sm:$0xff]
        %v693 = vld [vmem:[#allocation5 + $0x400] sm:$0xff]
        %v694 = vld [vmem:[#allocation5 + $0x408] sm:$0xff]
        %v695 = vld [vmem:[#allocation5 + $0x410] sm:$0xff]
        %v696 = vld [vmem:[#allocation5 + $0x418] sm:$0xff]
        %v697 = vld [vmem:[#allocation5 + $0x420] sm:$0xff]
        %v698 = vld [vmem:[#allocation5 + $0x428] sm:$0xff]
        %v699 = vld [vmem:[#allocation5 + $0x430] sm:$0xff]
        %v700 = vld [vmem:[#allocation5 + $0x438] sm:$0xff]
        %v701 = vld [vmem:[#allocation5 + $0x440] sm:$0xff]
        %v702 = vld [vmem:[#allocation5 + $0x448] sm:$0xff]
        %v703 = vld [vmem:[#allocation5 + $0x450] sm:$0xff]
        %v704 = vld [vmem:[#allocation5 + $0x458] sm:$0xff]
        %v705 = vld [vmem:[#allocation5 + $0x460] sm:$0xff]
        %v706 = vld [vmem:[#allocation5 + $0x468] sm:$0xff]
        %v707 = vld [vmem:[#allocation5 + $0x470] sm:$0xff]
        %v708 = vld [vmem:[#allocation5 + $0x478] sm:$0xff]
        %v709 = vld [vmem:[#allocation5 + $0x480] sm:$0xff]
        %v710 = vld [vmem:[#allocation5 + $0x488] sm:$0xff]
        %v711 = vld [vmem:[#allocation5 + $0x490] sm:$0xff]
        %v712 = vld [vmem:[#allocation5 + $0x498] sm:$0xff]
        %v713 = vld [vmem:[#allocation5 + $0x4a0] sm:$0xff]
        %v714 = vld [vmem:[#allocation5 + $0x4a8] sm:$0xff]
        %v715 = vld [vmem:[#allocation5 + $0x4b0] sm:$0xff]
        %v716 = vld [vmem:[#allocation5 + $0x4b8] sm:$0xff]
        %v717 = vld [vmem:[#allocation5 + $0x4c0] sm:$0xff]
        %v718 = vld [vmem:[#allocation5 + $0x4c8] sm:$0xff]
        %v719 = vld [vmem:[#allocation5 + $0x4d0] sm:$0xff]
        %v720 = vld [vmem:[#allocation5 + $0x4d8] sm:$0xff]
        %v721 = vld [vmem:[#allocation5 + $0x4e0] sm:$0xff]
        %v722 = vld [vmem:[#allocation5 + $0x4e8] sm:$0xff]
        %v723 = vld [vmem:[#allocation5 + $0x4f0] sm:$0xff]
        %v724 = vld [vmem:[#allocation5 + $0x4f8] sm:$0xff]
        %v725 = vld [vmem:[#allocation5 + $0x500] sm:$0xff]
        %v726 = vld [vmem:[#allocation5 + $0x508] sm:$0xff]
        %v727 = vld [vmem:[#allocation5 + $0x510] sm:$0xff]
        %v728 = vld [vmem:[#allocation5 + $0x518] sm:$0xff]
        %v729 = vld [vmem:[#allocation5 + $0x520] sm:$0xff]
        %v730 = vld [vmem:[#allocation5 + $0x528] sm:$0xff]
        %v731 = vld [vmem:[#allocation5 + $0x530] sm:$0xff]
        %v732 = vld [vmem:[#allocation5 + $0x538] sm:$0xff]
        %v733 = vld [vmem:[#allocation5 + $0x540] sm:$0xff]
        %v734 = vld [vmem:[#allocation5 + $0x548] sm:$0xff]
        %v735 = vld [vmem:[#allocation5 + $0x550] sm:$0xff]
        %v736 = vld [vmem:[#allocation5 + $0x558] sm:$0xff]
        %v737 = vld [vmem:[#allocation5 + $0x560] sm:$0xff]
        %v738 = vld [vmem:[#allocation5 + $0x568] sm:$0xff]
        %v739 = vld [vmem:[#allocation5 + $0x570] sm:$0xff]
        %v740 = vld [vmem:[#allocation5 + $0x578] sm:$0xff]
        %v741 = vld [vmem:[#allocation5 + $0x580] sm:$0xff]
        %v742 = vld [vmem:[#allocation5 + $0x588] sm:$0xff]
        %v743 = vld [vmem:[#allocation5 + $0x590] sm:$0xff]
        %v744 = vld [vmem:[#allocation5 + $0x598] sm:$0xff]
        %v745 = vld [vmem:[#allocation5 + $0x5a0] sm:$0xff]
        %v746 = vld [vmem:[#allocation5 + $0x5a8] sm:$0xff]
        %v747 = vld [vmem:[#allocation5 + $0x5b0] sm:$0xff]
        %v748 = vld [vmem:[#allocation5 + $0x5b8] sm:$0xff]
        %v749 = vld [vmem:[#allocation5 + $0x5c0] sm:$0xff]
        %v750 = vld [vmem:[#allocation5 + $0x5c8] sm:$0xff]
        %v751 = vld [vmem:[#allocation5 + $0x5d0] sm:$0xff]
        %v752 = vld [vmem:[#allocation5 + $0x5d8] sm:$0xff]
        %v753 = vld [vmem:[#allocation5 + $0x5e0] sm:$0xff]
        %v754 = vld [vmem:[#allocation5 + $0x5e8] sm:$0xff]
        %v755 = vld [vmem:[#allocation5 + $0x5f0] sm:$0xff]
        %v756 = vld [vmem:[#allocation5 + $0x5f8] sm:$0xff]
        %v757 = vld [vmem:[#allocation5 + $0x600] sm:$0xff]
        %v758 = vld [vmem:[#allocation5 + $0x608] sm:$0xff]
        %v759 = vld [vmem:[#allocation5 + $0x610] sm:$0xff]
        %v760 = vld [vmem:[#allocation5 + $0x618] sm:$0xff]
        %v761 = vld [vmem:[#allocation5 + $0x620] sm:$0xff]
        %v762 = vld [vmem:[#allocation5 + $0x628] sm:$0xff]
        %v763 = vld [vmem:[#allocation5 + $0x630] sm:$0xff]
        %v764 = vld [vmem:[#allocation5 + $0x638] sm:$0xff]
        %v765 = vld [vmem:[#allocation5 + $0x640] sm:$0xff]
        %v766 = vld [vmem:[#allocation5 + $0x648] sm:$0xff]
        %v767 = vld [vmem:[#allocation5 + $0x650] sm:$0xff]
        %v768 = vld [vmem:[#allocation5 + $0x658] sm:$0xff]
        %v769 = vld [vmem:[#allocation5 + $0x660] sm:$0xff]
        %v770 = vld [vmem:[#allocation5 + $0x668] sm:$0xff]
        %v771 = vld [vmem:[#allocation5 + $0x670] sm:$0xff]
        %v772 = vld [vmem:[#allocation5 + $0x678] sm:$0xff]
        %v773 = vld [vmem:[#allocation5 + $0x680] sm:$0xff]
        %v774 = vld [vmem:[#allocation5 + $0x688] sm:$0xff]
        %v775 = vld [vmem:[#allocation5 + $0x690] sm:$0xff]
        %v776 = vld [vmem:[#allocation5 + $0x698] sm:$0xff]
        %v777 = vld [vmem:[#allocation5 + $0x6a0] sm:$0xff]
        %v778 = vld [vmem:[#allocation5 + $0x6a8] sm:$0xff]
        %v779 = vld [vmem:[#allocation5 + $0x6b0] sm:$0xff]
        %v780 = vld [vmem:[#allocation5 + $0x6b8] sm:$0xff]
        %v781 = vld [vmem:[#allocation5 + $0x6c0] sm:$0xff]
        %v782 = vld [vmem:[#allocation5 + $0x6c8] sm:$0xff]
        %v783 = vld [vmem:[#allocation5 + $0x6d0] sm:$0xff]
        %v784 = vld [vmem:[#allocation5 + $0x6d8] sm:$0xff]
        %v785 = vld [vmem:[#allocation5 + $0x6e0] sm:$0xff]
        %v786 = vld [vmem:[#allocation5 + $0x6e8] sm:$0xff]
        %v787 = vld [vmem:[#allocation5 + $0x6f0] sm:$0xff]
        %v788 = vld [vmem:[#allocation5 + $0x6f8] sm:$0xff]
        %v789 = vld [vmem:[#allocation5 + $0x700] sm:$0xff]
        %v790 = vld [vmem:[#allocation5 + $0x708] sm:$0xff]
        %v791 = vld [vmem:[#allocation5 + $0x710] sm:$0xff]
        %v792 = vld [vmem:[#allocation5 + $0x718] sm:$0xff]
        %v793 = vld [vmem:[#allocation5 + $0x720] sm:$0xff]
        %v794 = vld [vmem:[#allocation5 + $0x728] sm:$0xff]
        %v795 = vld [vmem:[#allocation5 + $0x730] sm:$0xff]
        %v796 = vld [vmem:[#allocation5 + $0x738] sm:$0xff]
        %v797 = vld [vmem:[#allocation5 + $0x740] sm:$0xff]
        %v798 = vld [vmem:[#allocation5 + $0x748] sm:$0xff]
        %v799 = vld [vmem:[#allocation5 + $0x750] sm:$0xff]
        %v800 = vld [vmem:[#allocation5 + $0x758] sm:$0xff]
        %v801 = vld [vmem:[#allocation5 + $0x760] sm:$0xff]
        %v802 = vld [vmem:[#allocation5 + $0x768] sm:$0xff]
        %v803 = vld [vmem:[#allocation5 + $0x770] sm:$0xff]
        %v804 = vld [vmem:[#allocation5 + $0x778] sm:$0xff]
        %v805 = vld [vmem:[#allocation5 + $0x780] sm:$0xff]
        %v806 = vld [vmem:[#allocation5 + $0x788] sm:$0xff]
        %v807 = vld [vmem:[#allocation5 + $0x790] sm:$0xff]
        %v808 = vld [vmem:[#allocation5 + $0x798] sm:$0xff]
        %v809 = vld [vmem:[#allocation5 + $0x7a0] sm:$0xff]
        %v810 = vld [vmem:[#allocation5 + $0x7a8] sm:$0xff]
        %v811 = vld [vmem:[#allocation5 + $0x7b0] sm:$0xff]
        %v812 = vld [vmem:[#allocation5 + $0x7b8] sm:$0xff]
        %v813 = vld [vmem:[#allocation5 + $0x7c0] sm:$0xff]
        %v814 = vld [vmem:[#allocation5 + $0x7c8] sm:$0xff]
        %v815 = vld [vmem:[#allocation5 + $0x7d0] sm:$0xff]
        %v816 = vld [vmem:[#allocation5 + $0x7d8] sm:$0xff]
        %v817 = vld [vmem:[#allocation5 + $0x7e0] sm:$0xff]
        %v818 = vld [vmem:[#allocation5 + $0x7e8] sm:$0xff]
        %v819 = vld [vmem:[#allocation5 + $0x7f0] sm:$0xff]
        %v820 = vld [vmem:[#allocation5 + $0x7f8] sm:$0xff]
        %v821 = vld [vmem:[#allocation7] sm:$0x3]
        %v823 = vperm.slane %v821, 0
        %v824 = vperm.slane %v821, 1
        %827 = vmatpush.msra.mxu0 %v595
        %828 = vmatpush.msra.mxu0 %v593
        %829 = vmatpush.msra.mxu0 %v591
        %830 = vmatpush.msra.mxu0 %v589
        %831 = vmatpush.msra.mxu0 %v587
        %832 = vmatpush.msra.mxu0 %v585
        %833 = vmatpush.msra.mxu0 %v583
        %834 = vmatpush.msra.mxu0 %v581
        %835 = vmatpush.msra.mxu0 %v579
        %836 = vmatpush.msra.mxu0 %v577
        %837 = vmatpush.msra.mxu0 %v575
        %838 = vmatpush.msra.mxu0 %v573
        %839 = vmatpush.msra.mxu0 %v571
        %840 = vmatpush.msra.mxu0 %v569
        %841 = vmatpush.msra.mxu0 %v567
        %842 = vmatpush.msra.mxu0 %v565
        %843 = vmatmul.f32.gmra.mxu0 %v309
        %v844 = vpop.f32.mrf.mxu0
        %v845 = vadd.f32 %v823, %v844
        %846 = vmatmul.f32.gmra.mxu0 %v317
        %v847 = vpop.f32.mrf.mxu0
        %v848 = vadd.f32 %v823, %v847
        %849 = vmatmul.f32.gmra.mxu0 %v325
        %v850 = vpop.f32.mrf.mxu0
        %v851 = vadd.f32 %v823, %v850
        %852 = vmatmul.f32.gmra.mxu0 %v333
        %v853 = vpop.f32.mrf.mxu0
        %v854 = vadd.f32 %v823, %v853
        %855 = vmatmul.f32.gmra.mxu0 %v341
        %v856 = vpop.f32.mrf.mxu0
        %v857 = vadd.f32 %v823, %v856
        %858 = vmatmul.f32.gmra.mxu0 %v349
        %v859 = vpop.f32.mrf.mxu0
        %v860 = vadd.f32 %v823, %v859
        %861 = vmatmul.f32.gmra.mxu0 %v357
        %v862 = vpop.f32.mrf.mxu0
        %v863 = vadd.f32 %v823, %v862
        %864 = vmatmul.f32.gmra.mxu0 %v365
        %v865 = vpop.f32.mrf.mxu0
        %v866 = vadd.f32 %v823, %v865
        %867 = vmatmul.f32.gmra.mxu0 %v373
        %v868 = vpop.f32.mrf.mxu0
        %v869 = vadd.f32 %v823, %v868
        %870 = vmatmul.f32.gmra.mxu0 %v381
        %v871 = vpop.f32.mrf.mxu0
        %v872 = vadd.f32 %v823, %v871
        %873 = vmatmul.f32.gmra.mxu0 %v389
        %v874 = vpop.f32.mrf.mxu0
        %v875 = vadd.f32 %v823, %v874
        %876 = vmatmul.f32.gmra.mxu0 %v397
        %v877 = vpop.f32.mrf.mxu0
        %v878 = vadd.f32 %v823, %v877
        %879 = vmatmul.f32.gmra.mxu0 %v405
        %v880 = vpop.f32.mrf.mxu0
        %v881 = vadd.f32 %v823, %v880
        %882 = vmatmul.f32.gmra.mxu0 %v413
        %v883 = vpop.f32.mrf.mxu0
        %v884 = vadd.f32 %v823, %v883
        %885 = vmatmul.f32.gmra.mxu0 %v421
        %v886 = vpop.f32.mrf.mxu0
        %v887 = vadd.f32 %v823, %v886
        %888 = vmatmul.f32.gmra.mxu0 %v429
        %v889 = vpop.f32.mrf.mxu0
        %v890 = vadd.f32 %v823, %v889
        %891 = vmatmul.f32.gmra.mxu0 %v437
        %v892 = vpop.f32.mrf.mxu0
        %v893 = vadd.f32 %v823, %v892
        %894 = vmatmul.f32.gmra.mxu0 %v445
        %v895 = vpop.f32.mrf.mxu0
        %v896 = vadd.f32 %v823, %v895
        %897 = vmatmul.f32.gmra.mxu0 %v453
        %v898 = vpop.f32.mrf.mxu0
        %v899 = vadd.f32 %v823, %v898
        %900 = vmatmul.f32.gmra.mxu0 %v461
        %v901 = vpop.f32.mrf.mxu0
        %v902 = vadd.f32 %v823, %v901
        %903 = vmatmul.f32.gmra.mxu0 %v469
        %v904 = vpop.f32.mrf.mxu0
        %v905 = vadd.f32 %v823, %v904
        %906 = vmatmul.f32.gmra.mxu0 %v477
        %v907 = vpop.f32.mrf.mxu0
        %v908 = vadd.f32 %v823, %v907
        %909 = vmatmul.f32.gmra.mxu0 %v485
        %v910 = vpop.f32.mrf.mxu0
        %v911 = vadd.f32 %v823, %v910
        %912 = vmatmul.f32.gmra.mxu0 %v493
        %v913 = vpop.f32.mrf.mxu0
        %v914 = vadd.f32 %v823, %v913
        %915 = vmatmul.f32.gmra.mxu0 %v501
        %v916 = vpop.f32.mrf.mxu0
        %v917 = vadd.f32 %v823, %v916
        %918 = vmatmul.f32.gmra.mxu0 %v509
        %v919 = vpop.f32.mrf.mxu0
        %v920 = vadd.f32 %v823, %v919
        %921 = vmatmul.f32.gmra.mxu0 %v517
        %v922 = vpop.f32.mrf.mxu0
        %v923 = vadd.f32 %v823, %v922
        %924 = vmatmul.f32.gmra.mxu0 %v525
        %v925 = vpop.f32.mrf.mxu0
        %v926 = vadd.f32 %v823, %v925
        %927 = vmatmul.f32.gmra.mxu0 %v533
        %v928 = vpop.f32.mrf.mxu0
        %v929 = vadd.f32 %v823, %v928
        %930 = vmatmul.f32.gmra.mxu0 %v541
        %v931 = vpop.f32.mrf.mxu0
        %v932 = vadd.f32 %v823, %v931
        %933 = vmatmul.f32.gmra.mxu0 %v549
        %v934 = vpop.f32.mrf.mxu0
        %v935 = vadd.f32 %v823, %v934
        %936 = vmatmul.f32.gmra.mxu0 %v557
        %v937 = vpop.f32.mrf.mxu0
        %v938 = vadd.f32 %v823, %v937
        %939 = vdwg.mxu0
        %940 = vmatpush.msra.mxu0 %v627
        %941 = vmatpush.msra.mxu0 %v625
        %942 = vmatpush.msra.mxu0 %v623
        %943 = vmatpush.msra.mxu0 %v621
        %944 = vmatpush.msra.mxu0 %v619
        %945 = vmatpush.msra.mxu0 %v617
        %946 = vmatpush.msra.mxu0 %v615
        %947 = vmatpush.msra.mxu0 %v613
        %948 = vmatpush.msra.mxu0 %v611
        %949 = vmatpush.msra.mxu0 %v609
        %950 = vmatpush.msra.mxu0 %v607
        %951 = vmatpush.msra.mxu0 %v605
        %952 = vmatpush.msra.mxu0 %v603
        %953 = vmatpush.msra.mxu0 %v601
        %954 = vmatpush.msra.mxu0 %v599
        %955 = vmatpush.msra.mxu0 %v597
        %956 = vmatmul.f32.gmra.mxu0 %v310
        %v957 = vpop.f32.mrf.mxu0
        %v958 = vadd.f32 %v845, %v957
        %959 = vmatmul.f32.gmra.mxu0 %v318
        %v960 = vpop.f32.mrf.mxu0
        %v961 = vadd.f32 %v848, %v960
        %962 = vmatmul.f32.gmra.mxu0 %v326
        %v963 = vpop.f32.mrf.mxu0
        %v964 = vadd.f32 %v851, %v963
        %965 = vmatmul.f32.gmra.mxu0 %v334
        %v966 = vpop.f32.mrf.mxu0
        %v967 = vadd.f32 %v854, %v966
        %968 = vmatmul.f32.gmra.mxu0 %v342
        %v969 = vpop.f32.mrf.mxu0
        %v970 = vadd.f32 %v857, %v969
        %971 = vmatmul.f32.gmra.mxu0 %v350
        %v972 = vpop.f32.mrf.mxu0
        %v973 = vadd.f32 %v860, %v972
        %974 = vmatmul.f32.gmra.mxu0 %v358
        %v975 = vpop.f32.mrf.mxu0
        %v976 = vadd.f32 %v863, %v975
        %977 = vmatmul.f32.gmra.mxu0 %v366
        %v978 = vpop.f32.mrf.mxu0
        %v979 = vadd.f32 %v866, %v978
        %980 = vmatmul.f32.gmra.mxu0 %v374
        %v981 = vpop.f32.mrf.mxu0
        %v982 = vadd.f32 %v869, %v981
        %983 = vmatmul.f32.gmra.mxu0 %v382
        %v984 = vpop.f32.mrf.mxu0
        %v985 = vadd.f32 %v872, %v984
        %986 = vmatmul.f32.gmra.mxu0 %v390
        %v987 = vpop.f32.mrf.mxu0
        %v988 = vadd.f32 %v875, %v987
        %989 = vmatmul.f32.gmra.mxu0 %v398
        %v990 = vpop.f32.mrf.mxu0
        %v991 = vadd.f32 %v878, %v990
        %992 = vmatmul.f32.gmra.mxu0 %v406
        %v993 = vpop.f32.mrf.mxu0
        %v994 = vadd.f32 %v881, %v993
        %995 = vmatmul.f32.gmra.mxu0 %v414
        %v996 = vpop.f32.mrf.mxu0
        %v997 = vadd.f32 %v884, %v996
        %998 = vmatmul.f32.gmra.mxu0 %v422
        %v999 = vpop.f32.mrf.mxu0
        %v1000 = vadd.f32 %v887, %v999
        %1001 = vmatmul.f32.gmra.mxu0 %v430
        %v1002 = vpop.f32.mrf.mxu0
        %v1003 = vadd.f32 %v890, %v1002
        %1004 = vmatmul.f32.gmra.mxu0 %v438
        %v1005 = vpop.f32.mrf.mxu0
        %v1006 = vadd.f32 %v893, %v1005
        %1007 = vmatmul.f32.gmra.mxu0 %v446
        %v1008 = vpop.f32.mrf.mxu0
        %v1009 = vadd.f32 %v896, %v1008
        %1010 = vmatmul.f32.gmra.mxu0 %v454
        %v1011 = vpop.f32.mrf.mxu0
        %v1012 = vadd.f32 %v899, %v1011
        %1013 = vmatmul.f32.gmra.mxu0 %v462
        %v1014 = vpop.f32.mrf.mxu0
        %v1015 = vadd.f32 %v902, %v1014
        %1016 = vmatmul.f32.gmra.mxu0 %v470
        %v1017 = vpop.f32.mrf.mxu0
        %v1018 = vadd.f32 %v905, %v1017
        %1019 = vmatmul.f32.gmra.mxu0 %v478
        %v1020 = vpop.f32.mrf.mxu0
        %v1021 = vadd.f32 %v908, %v1020
        %1022 = vmatmul.f32.gmra.mxu0 %v486
        %v1023 = vpop.f32.mrf.mxu0
        %v1024 = vadd.f32 %v911, %v1023
        %1025 = vmatmul.f32.gmra.mxu0 %v494
        %v1026 = vpop.f32.mrf.mxu0
        %v1027 = vadd.f32 %v914, %v1026
        %1028 = vmatmul.f32.gmra.mxu0 %v502
        %v1029 = vpop.f32.mrf.mxu0
        %v1030 = vadd.f32 %v917, %v1029
        %1031 = vmatmul.f32.gmra.mxu0 %v510
        %v1032 = vpop.f32.mrf.mxu0
        %v1033 = vadd.f32 %v920, %v1032
        %1034 = vmatmul.f32.gmra.mxu0 %v518
        %v1035 = vpop.f32.mrf.mxu0
        %v1036 = vadd.f32 %v923, %v1035
        %1037 = vmatmul.f32.gmra.mxu0 %v526
        %v1038 = vpop.f32.mrf.mxu0
        %v1039 = vadd.f32 %v926, %v1038
        %1040 = vmatmul.f32.gmra.mxu0 %v534
        %v1041 = vpop.f32.mrf.mxu0
        %v1042 = vadd.f32 %v929, %v1041
        %1043 = vmatmul.f32.gmra.mxu0 %v542
        %v1044 = vpop.f32.mrf.mxu0
        %v1045 = vadd.f32 %v932, %v1044
        %1046 = vmatmul.f32.gmra.mxu0 %v550
        %v1047 = vpop.f32.mrf.mxu0
        %v1048 = vadd.f32 %v935, %v1047
        %1049 = vmatmul.f32.gmra.mxu0 %v558
        %v1050 = vpop.f32.mrf.mxu0
        %v1051 = vadd.f32 %v938, %v1050
        %1052 = vdwg.mxu0
        %1053 = vmatpush.msra.mxu0 %v659
        %1054 = vmatpush.msra.mxu0 %v657
        %1055 = vmatpush.msra.mxu0 %v655
        %1056 = vmatpush.msra.mxu0 %v653
        %1057 = vmatpush.msra.mxu0 %v651
        %1058 = vmatpush.msra.mxu0 %v649
        %1059 = vmatpush.msra.mxu0 %v647
        %1060 = vmatpush.msra.mxu0 %v645
        %1061 = vmatpush.msra.mxu0 %v643
        %1062 = vmatpush.msra.mxu0 %v641
        %1063 = vmatpush.msra.mxu0 %v639
        %1064 = vmatpush.msra.mxu0 %v637
        %1065 = vmatpush.msra.mxu0 %v635
        %1066 = vmatpush.msra.mxu0 %v633
        %1067 = vmatpush.msra.mxu0 %v631
        %1068 = vmatpush.msra.mxu0 %v629
        %1069 = vmatmul.f32.gmra.mxu0 %v311
        %v1070 = vpop.f32.mrf.mxu0
        %v1071 = vadd.f32 %v958, %v1070
        %1072 = vmatmul.f32.gmra.mxu0 %v319
        %v1073 = vpop.f32.mrf.mxu0
        %v1074 = vadd.f32 %v961, %v1073
        %1075 = vmatmul.f32.gmra.mxu0 %v327
        %v1076 = vpop.f32.mrf.mxu0
        %v1077 = vadd.f32 %v964, %v1076
        %1078 = vmatmul.f32.gmra.mxu0 %v335
        %v1079 = vpop.f32.mrf.mxu0
        %v1080 = vadd.f32 %v967, %v1079
        %1081 = vmatmul.f32.gmra.mxu0 %v343
        %v1082 = vpop.f32.mrf.mxu0
        %v1083 = vadd.f32 %v970, %v1082
        %1084 = vmatmul.f32.gmra.mxu0 %v351
        %v1085 = vpop.f32.mrf.mxu0
        %v1086 = vadd.f32 %v973, %v1085
        %1087 = vmatmul.f32.gmra.mxu0 %v359
        %v1088 = vpop.f32.mrf.mxu0
        %v1089 = vadd.f32 %v976, %v1088
        %1090 = vmatmul.f32.gmra.mxu0 %v367
        %v1091 = vpop.f32.mrf.mxu0
        %v1092 = vadd.f32 %v979, %v1091
        %1093 = vmatmul.f32.gmra.mxu0 %v375
        %v1094 = vpop.f32.mrf.mxu0
        %v1095 = vadd.f32 %v982, %v1094
        %1096 = vmatmul.f32.gmra.mxu0 %v383
        %v1097 = vpop.f32.mrf.mxu0
        %v1098 = vadd.f32 %v985, %v1097
        %1099 = vmatmul.f32.gmra.mxu0 %v391
        %v1100 = vpop.f32.mrf.mxu0
        %v1101 = vadd.f32 %v988, %v1100
        %1102 = vmatmul.f32.gmra.mxu0 %v399
        %v1103 = vpop.f32.mrf.mxu0
        %v1104 = vadd.f32 %v991, %v1103
        %1105 = vmatmul.f32.gmra.mxu0 %v407
        %v1106 = vpop.f32.mrf.mxu0
        %v1107 = vadd.f32 %v994, %v1106
        %1108 = vmatmul.f32.gmra.mxu0 %v415
        %v1109 = vpop.f32.mrf.mxu0
        %v1110 = vadd.f32 %v997, %v1109
        %1111 = vmatmul.f32.gmra.mxu0 %v423
        %v1112 = vpop.f32.mrf.mxu0
        %v1113 = vadd.f32 %v1000, %v1112
        %1114 = vmatmul.f32.gmra.mxu0 %v431
        %v1115 = vpop.f32.mrf.mxu0
        %v1116 = vadd.f32 %v1003, %v1115
        %1117 = vmatmul.f32.gmra.mxu0 %v439
        %v1118 = vpop.f32.mrf.mxu0
        %v1119 = vadd.f32 %v1006, %v1118
        %1120 = vmatmul.f32.gmra.mxu0 %v447
        %v1121 = vpop.f32.mrf.mxu0
        %v1122 = vadd.f32 %v1009, %v1121
        %1123 = vmatmul.f32.gmra.mxu0 %v455
        %v1124 = vpop.f32.mrf.mxu0
        %v1125 = vadd.f32 %v1012, %v1124
        %1126 = vmatmul.f32.gmra.mxu0 %v463
        %v1127 = vpop.f32.mrf.mxu0
        %v1128 = vadd.f32 %v1015, %v1127
        %1129 = vmatmul.f32.gmra.mxu0 %v471
        %v1130 = vpop.f32.mrf.mxu0
        %v1131 = vadd.f32 %v1018, %v1130
        %1132 = vmatmul.f32.gmra.mxu0 %v479
        %v1133 = vpop.f32.mrf.mxu0
        %v1134 = vadd.f32 %v1021, %v1133
        %1135 = vmatmul.f32.gmra.mxu0 %v487
        %v1136 = vpop.f32.mrf.mxu0
        %v1137 = vadd.f32 %v1024, %v1136
        %1138 = vmatmul.f32.gmra.mxu0 %v495
        %v1139 = vpop.f32.mrf.mxu0
        %v1140 = vadd.f32 %v1027, %v1139
        %1141 = vmatmul.f32.gmra.mxu0 %v503
        %v1142 = vpop.f32.mrf.mxu0
        %v1143 = vadd.f32 %v1030, %v1142
        %1144 = vmatmul.f32.gmra.mxu0 %v511
        %v1145 = vpop.f32.mrf.mxu0
        %v1146 = vadd.f32 %v1033, %v1145
        %1147 = vmatmul.f32.gmra.mxu0 %v519
        %v1148 = vpop.f32.mrf.mxu0
        %v1149 = vadd.f32 %v1036, %v1148
        %1150 = vmatmul.f32.gmra.mxu0 %v527
        %v1151 = vpop.f32.mrf.mxu0
        %v1152 = vadd.f32 %v1039, %v1151
        %1153 = vmatmul.f32.gmra.mxu0 %v535
        %v1154 = vpop.f32.mrf.mxu0
        %v1155 = vadd.f32 %v1042, %v1154
        %1156 = vmatmul.f32.gmra.mxu0 %v543
        %v1157 = vpop.f32.mrf.mxu0
        %v1158 = vadd.f32 %v1045, %v1157
        %1159 = vmatmul.f32.gmra.mxu0 %v551
        %v1160 = vpop.f32.mrf.mxu0
        %v1161 = vadd.f32 %v1048, %v1160
        %1162 = vmatmul.f32.gmra.mxu0 %v559
        %v1163 = vpop.f32.mrf.mxu0
        %v1164 = vadd.f32 %v1051, %v1163
        %1165 = vdwg.mxu0
        %1166 = vmatpush.msra.mxu0 %v691
        %1167 = vmatpush.msra.mxu0 %v689
        %1168 = vmatpush.msra.mxu0 %v687
        %1169 = vmatpush.msra.mxu0 %v685
        %1170 = vmatpush.msra.mxu0 %v683
        %1171 = vmatpush.msra.mxu0 %v681
        %1172 = vmatpush.msra.mxu0 %v679
        %1173 = vmatpush.msra.mxu0 %v677
        %1174 = vmatpush.msra.mxu0 %v675
        %1175 = vmatpush.msra.mxu0 %v673
        %1176 = vmatpush.msra.mxu0 %v671
        %1177 = vmatpush.msra.mxu0 %v669
        %1178 = vmatpush.msra.mxu0 %v667
        %1179 = vmatpush.msra.mxu0 %v665
        %1180 = vmatpush.msra.mxu0 %v663
        %1181 = vmatpush.msra.mxu0 %v661
        %1182 = vmatmul.f32.gmra.mxu0 %v312
        %v1183 = vpop.f32.mrf.mxu0
        %v1184 = vadd.f32 %v1071, %v1183
        %1185 = vmatmul.f32.gmra.mxu0 %v320
        %v1186 = vpop.f32.mrf.mxu0
        %v1187 = vadd.f32 %v1074, %v1186
        %1188 = vmatmul.f32.gmra.mxu0 %v328
        %v1189 = vpop.f32.mrf.mxu0
        %v1190 = vadd.f32 %v1077, %v1189
        %1191 = vmatmul.f32.gmra.mxu0 %v336
        %v1192 = vpop.f32.mrf.mxu0
        %v1193 = vadd.f32 %v1080, %v1192
        %1194 = vmatmul.f32.gmra.mxu0 %v344
        %v1195 = vpop.f32.mrf.mxu0
        %v1196 = vadd.f32 %v1083, %v1195
        %1197 = vmatmul.f32.gmra.mxu0 %v352
        %v1198 = vpop.f32.mrf.mxu0
        %v1199 = vadd.f32 %v1086, %v1198
        %1200 = vmatmul.f32.gmra.mxu0 %v360
        %v1201 = vpop.f32.mrf.mxu0
        %v1202 = vadd.f32 %v1089, %v1201
        %1203 = vmatmul.f32.gmra.mxu0 %v368
        %v1204 = vpop.f32.mrf.mxu0
        %v1205 = vadd.f32 %v1092, %v1204
        %1206 = vmatmul.f32.gmra.mxu0 %v376
        %v1207 = vpop.f32.mrf.mxu0
        %v1208 = vadd.f32 %v1095, %v1207
        %1209 = vmatmul.f32.gmra.mxu0 %v384
        %v1210 = vpop.f32.mrf.mxu0
        %v1211 = vadd.f32 %v1098, %v1210
        %1212 = vmatmul.f32.gmra.mxu0 %v392
        %v1213 = vpop.f32.mrf.mxu0
        %v1214 = vadd.f32 %v1101, %v1213
        %1215 = vmatmul.f32.gmra.mxu0 %v400
        %v1216 = vpop.f32.mrf.mxu0
        %v1217 = vadd.f32 %v1104, %v1216
        %1218 = vmatmul.f32.gmra.mxu0 %v408
        %v1219 = vpop.f32.mrf.mxu0
        %v1220 = vadd.f32 %v1107, %v1219
        %1221 = vmatmul.f32.gmra.mxu0 %v416
        %v1222 = vpop.f32.mrf.mxu0
        %v1223 = vadd.f32 %v1110, %v1222
        %1224 = vmatmul.f32.gmra.mxu0 %v424
        %v1225 = vpop.f32.mrf.mxu0
        %v1226 = vadd.f32 %v1113, %v1225
        %1227 = vmatmul.f32.gmra.mxu0 %v432
        %v1228 = vpop.f32.mrf.mxu0
        %v1229 = vadd.f32 %v1116, %v1228
        %1230 = vmatmul.f32.gmra.mxu0 %v440
        %v1231 = vpop.f32.mrf.mxu0
        %v1232 = vadd.f32 %v1119, %v1231
        %1233 = vmatmul.f32.gmra.mxu0 %v448
        %v1234 = vpop.f32.mrf.mxu0
        %v1235 = vadd.f32 %v1122, %v1234
        %1236 = vmatmul.f32.gmra.mxu0 %v456
        %v1237 = vpop.f32.mrf.mxu0
        %v1238 = vadd.f32 %v1125, %v1237
        %1239 = vmatmul.f32.gmra.mxu0 %v464
        %v1240 = vpop.f32.mrf.mxu0
        %v1241 = vadd.f32 %v1128, %v1240
        %1242 = vmatmul.f32.gmra.mxu0 %v472
        %v1243 = vpop.f32.mrf.mxu0
        %v1244 = vadd.f32 %v1131, %v1243
        %1245 = vmatmul.f32.gmra.mxu0 %v480
        %v1246 = vpop.f32.mrf.mxu0
        %v1247 = vadd.f32 %v1134, %v1246
        %1248 = vmatmul.f32.gmra.mxu0 %v488
        %v1249 = vpop.f32.mrf.mxu0
        %v1250 = vadd.f32 %v1137, %v1249
        %1251 = vmatmul.f32.gmra.mxu0 %v496
        %v1252 = vpop.f32.mrf.mxu0
        %v1253 = vadd.f32 %v1140, %v1252
        %1254 = vmatmul.f32.gmra.mxu0 %v504
        %v1255 = vpop.f32.mrf.mxu0
        %v1256 = vadd.f32 %v1143, %v1255
        %1257 = vmatmul.f32.gmra.mxu0 %v512
        %v1258 = vpop.f32.mrf.mxu0
        %v1259 = vadd.f32 %v1146, %v1258
        %1260 = vmatmul.f32.gmra.mxu0 %v520
        %v1261 = vpop.f32.mrf.mxu0
        %v1262 = vadd.f32 %v1149, %v1261
        %1263 = vmatmul.f32.gmra.mxu0 %v528
        %v1264 = vpop.f32.mrf.mxu0
        %v1265 = vadd.f32 %v1152, %v1264
        %1266 = vmatmul.f32.gmra.mxu0 %v536
        %v1267 = vpop.f32.mrf.mxu0
        %v1268 = vadd.f32 %v1155, %v1267
        %1269 = vmatmul.f32.gmra.mxu0 %v544
        %v1270 = vpop.f32.mrf.mxu0
        %v1271 = vadd.f32 %v1158, %v1270
        %1272 = vmatmul.f32.gmra.mxu0 %v552
        %v1273 = vpop.f32.mrf.mxu0
        %v1274 = vadd.f32 %v1161, %v1273
        %1275 = vmatmul.f32.gmra.mxu0 %v560
        %v1276 = vpop.f32.mrf.mxu0
        %v1277 = vadd.f32 %v1164, %v1276
        %1278 = vdwg.mxu0
        %1279 = vmatpush.msra.mxu0 %v723
        %1280 = vmatpush.msra.mxu0 %v721
        %1281 = vmatpush.msra.mxu0 %v719
        %1282 = vmatpush.msra.mxu0 %v717
        %1283 = vmatpush.msra.mxu0 %v715
        %1284 = vmatpush.msra.mxu0 %v713
        %1285 = vmatpush.msra.mxu0 %v711
        %1286 = vmatpush.msra.mxu0 %v709
        %1287 = vmatpush.msra.mxu0 %v707
        %1288 = vmatpush.msra.mxu0 %v705
        %1289 = vmatpush.msra.mxu0 %v703
        %1290 = vmatpush.msra.mxu0 %v701
        %1291 = vmatpush.msra.mxu0 %v699
        %1292 = vmatpush.msra.mxu0 %v697
        %1293 = vmatpush.msra.mxu0 %v695
        %1294 = vmatpush.msra.mxu0 %v693
        %1295 = vmatmul.f32.gmra.mxu0 %v313
        %v1296 = vpop.f32.mrf.mxu0
        %v1297 = vadd.f32 %v1184, %v1296
        %1298 = vmatmul.f32.gmra.mxu0 %v321
        %v1299 = vpop.f32.mrf.mxu0
        %v1300 = vadd.f32 %v1187, %v1299
        %1301 = vmatmul.f32.gmra.mxu0 %v329
        %v1302 = vpop.f32.mrf.mxu0
        %v1303 = vadd.f32 %v1190, %v1302
        %1304 = vmatmul.f32.gmra.mxu0 %v337
        %v1305 = vpop.f32.mrf.mxu0
        %v1306 = vadd.f32 %v1193, %v1305
        %1307 = vmatmul.f32.gmra.mxu0 %v345
        %v1308 = vpop.f32.mrf.mxu0
        %v1309 = vadd.f32 %v1196, %v1308
        %1310 = vmatmul.f32.gmra.mxu0 %v353
        %v1311 = vpop.f32.mrf.mxu0
        %v1312 = vadd.f32 %v1199, %v1311
        %1313 = vmatmul.f32.gmra.mxu0 %v361
        %v1314 = vpop.f32.mrf.mxu0
        %v1315 = vadd.f32 %v1202, %v1314
        %1316 = vmatmul.f32.gmra.mxu0 %v369
        %v1317 = vpop.f32.mrf.mxu0
        %v1318 = vadd.f32 %v1205, %v1317
        %1319 = vmatmul.f32.gmra.mxu0 %v377
        %v1320 = vpop.f32.mrf.mxu0
        %v1321 = vadd.f32 %v1208, %v1320
        %1322 = vmatmul.f32.gmra.mxu0 %v385
        %v1323 = vpop.f32.mrf.mxu0
        %v1324 = vadd.f32 %v1211, %v1323
        %1325 = vmatmul.f32.gmra.mxu0 %v393
        %v1326 = vpop.f32.mrf.mxu0
        %v1327 = vadd.f32 %v1214, %v1326
        %1328 = vmatmul.f32.gmra.mxu0 %v401
        %v1329 = vpop.f32.mrf.mxu0
        %v1330 = vadd.f32 %v1217, %v1329
        %1331 = vmatmul.f32.gmra.mxu0 %v409
        %v1332 = vpop.f32.mrf.mxu0
        %v1333 = vadd.f32 %v1220, %v1332
        %1334 = vmatmul.f32.gmra.mxu0 %v417
        %v1335 = vpop.f32.mrf.mxu0
        %v1336 = vadd.f32 %v1223, %v1335
        %1337 = vmatmul.f32.gmra.mxu0 %v425
        %v1338 = vpop.f32.mrf.mxu0
        %v1339 = vadd.f32 %v1226, %v1338
        %1340 = vmatmul.f32.gmra.mxu0 %v433
        %v1341 = vpop.f32.mrf.mxu0
        %v1342 = vadd.f32 %v1229, %v1341
        %1343 = vmatmul.f32.gmra.mxu0 %v441
        %v1344 = vpop.f32.mrf.mxu0
        %v1345 = vadd.f32 %v1232, %v1344
        %1346 = vmatmul.f32.gmra.mxu0 %v449
        %v1347 = vpop.f32.mrf.mxu0
        %v1348 = vadd.f32 %v1235, %v1347
        %1349 = vmatmul.f32.gmra.mxu0 %v457
        %v1350 = vpop.f32.mrf.mxu0
        %v1351 = vadd.f32 %v1238, %v1350
        %1352 = vmatmul.f32.gmra.mxu0 %v465
        %v1353 = vpop.f32.mrf.mxu0
        %v1354 = vadd.f32 %v1241, %v1353
        %1355 = vmatmul.f32.gmra.mxu0 %v473
        %v1356 = vpop.f32.mrf.mxu0
        %v1357 = vadd.f32 %v1244, %v1356
        %1358 = vmatmul.f32.gmra.mxu0 %v481
        %v1359 = vpop.f32.mrf.mxu0
        %v1360 = vadd.f32 %v1247, %v1359
        %1361 = vmatmul.f32.gmra.mxu0 %v489
        %v1362 = vpop.f32.mrf.mxu0
        %v1363 = vadd.f32 %v1250, %v1362
        %1364 = vmatmul.f32.gmra.mxu0 %v497
        %v1365 = vpop.f32.mrf.mxu0
        %v1366 = vadd.f32 %v1253, %v1365
        %1367 = vmatmul.f32.gmra.mxu0 %v505
        %v1368 = vpop.f32.mrf.mxu0
        %v1369 = vadd.f32 %v1256, %v1368
        %1370 = vmatmul.f32.gmra.mxu0 %v513
        %v1371 = vpop.f32.mrf.mxu0
        %v1372 = vadd.f32 %v1259, %v1371
        %1373 = vmatmul.f32.gmra.mxu0 %v521
        %v1374 = vpop.f32.mrf.mxu0
        %v1375 = vadd.f32 %v1262, %v1374
        %1376 = vmatmul.f32.gmra.mxu0 %v529
        %v1377 = vpop.f32.mrf.mxu0
        %v1378 = vadd.f32 %v1265, %v1377
        %1379 = vmatmul.f32.gmra.mxu0 %v537
        %v1380 = vpop.f32.mrf.mxu0
        %v1381 = vadd.f32 %v1268, %v1380
        %1382 = vmatmul.f32.gmra.mxu0 %v545
        %v1383 = vpop.f32.mrf.mxu0
        %v1384 = vadd.f32 %v1271, %v1383
        %1385 = vmatmul.f32.gmra.mxu0 %v553
        %v1386 = vpop.f32.mrf.mxu0
        %v1387 = vadd.f32 %v1274, %v1386
        %1388 = vmatmul.f32.gmra.mxu0 %v561
        %v1389 = vpop.f32.mrf.mxu0
        %v1390 = vadd.f32 %v1277, %v1389
        %1391 = vdwg.mxu0
        %1392 = vmatpush.msra.mxu0 %v755
        %1393 = vmatpush.msra.mxu0 %v753
        %1394 = vmatpush.msra.mxu0 %v751
        %1395 = vmatpush.msra.mxu0 %v749
        %1396 = vmatpush.msra.mxu0 %v747
        %1397 = vmatpush.msra.mxu0 %v745
        %1398 = vmatpush.msra.mxu0 %v743
        %1399 = vmatpush.msra.mxu0 %v741
        %1400 = vmatpush.msra.mxu0 %v739
        %1401 = vmatpush.msra.mxu0 %v737
        %1402 = vmatpush.msra.mxu0 %v735
        %1403 = vmatpush.msra.mxu0 %v733
        %1404 = vmatpush.msra.mxu0 %v731
        %1405 = vmatpush.msra.mxu0 %v729
        %1406 = vmatpush.msra.mxu0 %v727
        %1407 = vmatpush.msra.mxu0 %v725
        %1408 = vmatmul.f32.gmra.mxu0 %v314
        %v1409 = vpop.f32.mrf.mxu0
        %v1410 = vadd.f32 %v1297, %v1409
        %1411 = vmatmul.f32.gmra.mxu0 %v322
        %v1412 = vpop.f32.mrf.mxu0
        %v1413 = vadd.f32 %v1300, %v1412
        %1414 = vmatmul.f32.gmra.mxu0 %v330
        %v1415 = vpop.f32.mrf.mxu0
        %v1416 = vadd.f32 %v1303, %v1415
        %1417 = vmatmul.f32.gmra.mxu0 %v338
        %v1418 = vpop.f32.mrf.mxu0
        %v1419 = vadd.f32 %v1306, %v1418
        %1420 = vmatmul.f32.gmra.mxu0 %v346
        %v1421 = vpop.f32.mrf.mxu0
        %v1422 = vadd.f32 %v1309, %v1421
        %1423 = vmatmul.f32.gmra.mxu0 %v354
        %v1424 = vpop.f32.mrf.mxu0
        %v1425 = vadd.f32 %v1312, %v1424
        %1426 = vmatmul.f32.gmra.mxu0 %v362
        %v1427 = vpop.f32.mrf.mxu0
        %v1428 = vadd.f32 %v1315, %v1427
        %1429 = vmatmul.f32.gmra.mxu0 %v370
        %v1430 = vpop.f32.mrf.mxu0
        %v1431 = vadd.f32 %v1318, %v1430
        %1432 = vmatmul.f32.gmra.mxu0 %v378
        %v1433 = vpop.f32.mrf.mxu0
        %v1434 = vadd.f32 %v1321, %v1433
        %1435 = vmatmul.f32.gmra.mxu0 %v386
        %v1436 = vpop.f32.mrf.mxu0
        %v1437 = vadd.f32 %v1324, %v1436
        %1438 = vmatmul.f32.gmra.mxu0 %v394
        %v1439 = vpop.f32.mrf.mxu0
        %v1440 = vadd.f32 %v1327, %v1439
        %1441 = vmatmul.f32.gmra.mxu0 %v402
        %v1442 = vpop.f32.mrf.mxu0
        %v1443 = vadd.f32 %v1330, %v1442
        %1444 = vmatmul.f32.gmra.mxu0 %v410
        %v1445 = vpop.f32.mrf.mxu0
        %v1446 = vadd.f32 %v1333, %v1445
        %1447 = vmatmul.f32.gmra.mxu0 %v418
        %v1448 = vpop.f32.mrf.mxu0
        %v1449 = vadd.f32 %v1336, %v1448
        %1450 = vmatmul.f32.gmra.mxu0 %v426
        %v1451 = vpop.f32.mrf.mxu0
        %v1452 = vadd.f32 %v1339, %v1451
        %1453 = vmatmul.f32.gmra.mxu0 %v434
        %v1454 = vpop.f32.mrf.mxu0
        %v1455 = vadd.f32 %v1342, %v1454
        %1456 = vmatmul.f32.gmra.mxu0 %v442
        %v1457 = vpop.f32.mrf.mxu0
        %v1458 = vadd.f32 %v1345, %v1457
        %1459 = vmatmul.f32.gmra.mxu0 %v450
        %v1460 = vpop.f32.mrf.mxu0
        %v1461 = vadd.f32 %v1348, %v1460
        %1462 = vmatmul.f32.gmra.mxu0 %v458
        %v1463 = vpop.f32.mrf.mxu0
        %v1464 = vadd.f32 %v1351, %v1463
        %1465 = vmatmul.f32.gmra.mxu0 %v466
        %v1466 = vpop.f32.mrf.mxu0
        %v1467 = vadd.f32 %v1354, %v1466
        %1468 = vmatmul.f32.gmra.mxu0 %v474
        %v1469 = vpop.f32.mrf.mxu0
        %v1470 = vadd.f32 %v1357, %v1469
        %1471 = vmatmul.f32.gmra.mxu0 %v482
        %v1472 = vpop.f32.mrf.mxu0
        %v1473 = vadd.f32 %v1360, %v1472
        %1474 = vmatmul.f32.gmra.mxu0 %v490
        %v1475 = vpop.f32.mrf.mxu0
        %v1476 = vadd.f32 %v1363, %v1475
        %1477 = vmatmul.f32.gmra.mxu0 %v498
        %v1478 = vpop.f32.mrf.mxu0
        %v1479 = vadd.f32 %v1366, %v1478
        %1480 = vmatmul.f32.gmra.mxu0 %v506
        %v1481 = vpop.f32.mrf.mxu0
        %v1482 = vadd.f32 %v1369, %v1481
        %1483 = vmatmul.f32.gmra.mxu0 %v514
        %v1484 = vpop.f32.mrf.mxu0
        %v1485 = vadd.f32 %v1372, %v1484
        %1486 = vmatmul.f32.gmra.mxu0 %v522
        %v1487 = vpop.f32.mrf.mxu0
        %v1488 = vadd.f32 %v1375, %v1487
        %1489 = vmatmul.f32.gmra.mxu0 %v530
        %v1490 = vpop.f32.mrf.mxu0
        %v1491 = vadd.f32 %v1378, %v1490
        %1492 = vmatmul.f32.gmra.mxu0 %v538
        %v1493 = vpop.f32.mrf.mxu0
        %v1494 = vadd.f32 %v1381, %v1493
        %1495 = vmatmul.f32.gmra.mxu0 %v546
        %v1496 = vpop.f32.mrf.mxu0
        %v1497 = vadd.f32 %v1384, %v1496
        %1498 = vmatmul.f32.gmra.mxu0 %v554
        %v1499 = vpop.f32.mrf.mxu0
        %v1500 = vadd.f32 %v1387, %v1499
        %1501 = vmatmul.f32.gmra.mxu0 %v562
        %v1502 = vpop.f32.mrf.mxu0
        %v1503 = vadd.f32 %v1390, %v1502
        %1504 = vdwg.mxu0
        %1505 = vmatpush.msra.mxu0 %v787
        %1506 = vmatpush.msra.mxu0 %v785
        %1507 = vmatpush.msra.mxu0 %v783
        %1508 = vmatpush.msra.mxu0 %v781
        %1509 = vmatpush.msra.mxu0 %v779
        %1510 = vmatpush.msra.mxu0 %v777
        %1511 = vmatpush.msra.mxu0 %v775
        %1512 = vmatpush.msra.mxu0 %v773
        %1513 = vmatpush.msra.mxu0 %v771
        %1514 = vmatpush.msra.mxu0 %v769
        %1515 = vmatpush.msra.mxu0 %v767
        %1516 = vmatpush.msra.mxu0 %v765
        %1517 = vmatpush.msra.mxu0 %v763
        %1518 = vmatpush.msra.mxu0 %v761
        %1519 = vmatpush.msra.mxu0 %v759
        %1520 = vmatpush.msra.mxu0 %v757
        %1521 = vmatmul.f32.gmra.mxu0 %v315
        %v1522 = vpop.f32.mrf.mxu0
        %v1523 = vadd.f32 %v1410, %v1522
        %1524 = vmatmul.f32.gmra.mxu0 %v323
        %v1525 = vpop.f32.mrf.mxu0
        %v1526 = vadd.f32 %v1413, %v1525
        %1527 = vmatmul.f32.gmra.mxu0 %v331
        %v1528 = vpop.f32.mrf.mxu0
        %v1529 = vadd.f32 %v1416, %v1528
        %1530 = vmatmul.f32.gmra.mxu0 %v339
        %v1531 = vpop.f32.mrf.mxu0
        %v1532 = vadd.f32 %v1419, %v1531
        %1533 = vmatmul.f32.gmra.mxu0 %v347
        %v1534 = vpop.f32.mrf.mxu0
        %v1535 = vadd.f32 %v1422, %v1534
        %1536 = vmatmul.f32.gmra.mxu0 %v355
        %v1537 = vpop.f32.mrf.mxu0
        %v1538 = vadd.f32 %v1425, %v1537
        %1539 = vmatmul.f32.gmra.mxu0 %v363
        %v1540 = vpop.f32.mrf.mxu0
        %v1541 = vadd.f32 %v1428, %v1540
        %1542 = vmatmul.f32.gmra.mxu0 %v371
        %v1543 = vpop.f32.mrf.mxu0
        %v1544 = vadd.f32 %v1431, %v1543
        %1545 = vmatmul.f32.gmra.mxu0 %v379
        %v1546 = vpop.f32.mrf.mxu0
        %v1547 = vadd.f32 %v1434, %v1546
        %1548 = vmatmul.f32.gmra.mxu0 %v387
        %v1549 = vpop.f32.mrf.mxu0
        %v1550 = vadd.f32 %v1437, %v1549
        %1551 = vmatmul.f32.gmra.mxu0 %v395
        %v1552 = vpop.f32.mrf.mxu0
        %v1553 = vadd.f32 %v1440, %v1552
        %1554 = vmatmul.f32.gmra.mxu0 %v403
        %v1555 = vpop.f32.mrf.mxu0
        %v1556 = vadd.f32 %v1443, %v1555
        %1557 = vmatmul.f32.gmra.mxu0 %v411
        %v1558 = vpop.f32.mrf.mxu0
        %v1559 = vadd.f32 %v1446, %v1558
        %1560 = vmatmul.f32.gmra.mxu0 %v419
        %v1561 = vpop.f32.mrf.mxu0
        %v1562 = vadd.f32 %v1449, %v1561
        %1563 = vmatmul.f32.gmra.mxu0 %v427
        %v1564 = vpop.f32.mrf.mxu0
        %v1565 = vadd.f32 %v1452, %v1564
        %1566 = vmatmul.f32.gmra.mxu0 %v435
        %v1567 = vpop.f32.mrf.mxu0
        %v1568 = vadd.f32 %v1455, %v1567
        %1569 = vmatmul.f32.gmra.mxu0 %v443
        %v1570 = vpop.f32.mrf.mxu0
        %v1571 = vadd.f32 %v1458, %v1570
        %1572 = vmatmul.f32.gmra.mxu0 %v451
        %v1573 = vpop.f32.mrf.mxu0
        %v1574 = vadd.f32 %v1461, %v1573
        %1575 = vmatmul.f32.gmra.mxu0 %v459
        %v1576 = vpop.f32.mrf.mxu0
        %v1577 = vadd.f32 %v1464, %v1576
        %1578 = vmatmul.f32.gmra.mxu0 %v467
        %v1579 = vpop.f32.mrf.mxu0
        %v1580 = vadd.f32 %v1467, %v1579
        %1581 = vmatmul.f32.gmra.mxu0 %v475
        %v1582 = vpop.f32.mrf.mxu0
        %v1583 = vadd.f32 %v1470, %v1582
        %1584 = vmatmul.f32.gmra.mxu0 %v483
        %v1585 = vpop.f32.mrf.mxu0
        %v1586 = vadd.f32 %v1473, %v1585
        %1587 = vmatmul.f32.gmra.mxu0 %v491
        %v1588 = vpop.f32.mrf.mxu0
        %v1589 = vadd.f32 %v1476, %v1588
        %1590 = vmatmul.f32.gmra.mxu0 %v499
        %v1591 = vpop.f32.mrf.mxu0
        %v1592 = vadd.f32 %v1479, %v1591
        %1593 = vmatmul.f32.gmra.mxu0 %v507
        %v1594 = vpop.f32.mrf.mxu0
        %v1595 = vadd.f32 %v1482, %v1594
        %1596 = vmatmul.f32.gmra.mxu0 %v515
        %v1597 = vpop.f32.mrf.mxu0
        %v1598 = vadd.f32 %v1485, %v1597
        %1599 = vmatmul.f32.gmra.mxu0 %v523
        %v1600 = vpop.f32.mrf.mxu0
        %v1601 = vadd.f32 %v1488, %v1600
        %1602 = vmatmul.f32.gmra.mxu0 %v531
        %v1603 = vpop.f32.mrf.mxu0
        %v1604 = vadd.f32 %v1491, %v1603
        %1605 = vmatmul.f32.gmra.mxu0 %v539
        %v1606 = vpop.f32.mrf.mxu0
        %v1607 = vadd.f32 %v1494, %v1606
        %1608 = vmatmul.f32.gmra.mxu0 %v547
        %v1609 = vpop.f32.mrf.mxu0
        %v1610 = vadd.f32 %v1497, %v1609
        %1611 = vmatmul.f32.gmra.mxu0 %v555
        %v1612 = vpop.f32.mrf.mxu0
        %v1613 = vadd.f32 %v1500, %v1612
        %1614 = vmatmul.f32.gmra.mxu0 %v563
        %v1615 = vpop.f32.mrf.mxu0
        %v1616 = vadd.f32 %v1503, %v1615
        %1617 = vdwg.mxu0
        %1618 = vmatpush.msra.mxu0 %v819
        %1619 = vmatpush.msra.mxu0 %v817
        %1620 = vmatpush.msra.mxu0 %v815
        %1621 = vmatpush.msra.mxu0 %v813
        %1622 = vmatpush.msra.mxu0 %v811
        %1623 = vmatpush.msra.mxu0 %v809
        %1624 = vmatpush.msra.mxu0 %v807
        %1625 = vmatpush.msra.mxu0 %v805
        %1626 = vmatpush.msra.mxu0 %v803
        %1627 = vmatpush.msra.mxu0 %v801
        %1628 = vmatpush.msra.mxu0 %v799
        %1629 = vmatpush.msra.mxu0 %v797
        %1630 = vmatpush.msra.mxu0 %v795
        %1631 = vmatpush.msra.mxu0 %v793
        %1632 = vmatpush.msra.mxu0 %v791
        %1633 = vmatpush.msra.mxu0 %v789
        %1634 = vmatmul.f32.gmra.mxu0 %v316
        %v1635 = vpop.f32.mrf.mxu0
        %v1636 = vadd.f32 %v1523, %v1635
        %1637 = vmatmul.f32.gmra.mxu0 %v324
        %v1638 = vpop.f32.mrf.mxu0
        %v1639 = vadd.f32 %v1526, %v1638
        %1640 = vmatmul.f32.gmra.mxu0 %v332
        %v1641 = vpop.f32.mrf.mxu0
        %v1642 = vadd.f32 %v1529, %v1641
        %1643 = vmatmul.f32.gmra.mxu0 %v340
        %v1644 = vpop.f32.mrf.mxu0
        %v1645 = vadd.f32 %v1532, %v1644
        %1646 = vmatmul.f32.gmra.mxu0 %v348
        %v1647 = vpop.f32.mrf.mxu0
        %v1648 = vadd.f32 %v1535, %v1647
        %1649 = vmatmul.f32.gmra.mxu0 %v356
        %v1650 = vpop.f32.mrf.mxu0
        %v1651 = vadd.f32 %v1538, %v1650
        %1652 = vmatmul.f32.gmra.mxu0 %v364
        %v1653 = vpop.f32.mrf.mxu0
        %v1654 = vadd.f32 %v1541, %v1653
        %1655 = vmatmul.f32.gmra.mxu0 %v372
        %v1656 = vpop.f32.mrf.mxu0
        %v1657 = vadd.f32 %v1544, %v1656
        %1658 = vmatmul.f32.gmra.mxu0 %v380
        %v1659 = vpop.f32.mrf.mxu0
        %v1660 = vadd.f32 %v1547, %v1659
        %1661 = vmatmul.f32.gmra.mxu0 %v388
        %v1662 = vpop.f32.mrf.mxu0
        %v1663 = vadd.f32 %v1550, %v1662
        %1664 = vmatmul.f32.gmra.mxu0 %v396
        %v1665 = vpop.f32.mrf.mxu0
        %v1666 = vadd.f32 %v1553, %v1665
        %1667 = vmatmul.f32.gmra.mxu0 %v404
        %v1668 = vpop.f32.mrf.mxu0
        %v1669 = vadd.f32 %v1556, %v1668
        %1670 = vmatmul.f32.gmra.mxu0 %v412
        %v1671 = vpop.f32.mrf.mxu0
        %v1672 = vadd.f32 %v1559, %v1671
        %1673 = vmatmul.f32.gmra.mxu0 %v420
        %v1674 = vpop.f32.mrf.mxu0
        %v1675 = vadd.f32 %v1562, %v1674
        %1676 = vmatmul.f32.gmra.mxu0 %v428
        %v1677 = vpop.f32.mrf.mxu0
        %v1678 = vadd.f32 %v1565, %v1677
        %1679 = vmatmul.f32.gmra.mxu0 %v436
        %v1680 = vpop.f32.mrf.mxu0
        %v1681 = vadd.f32 %v1568, %v1680
        %1682 = vmatmul.f32.gmra.mxu0 %v444
        %v1683 = vpop.f32.mrf.mxu0
        %v1684 = vadd.f32 %v1571, %v1683
        %1685 = vmatmul.f32.gmra.mxu0 %v452
        %v1686 = vpop.f32.mrf.mxu0
        %v1687 = vadd.f32 %v1574, %v1686
        %1688 = vmatmul.f32.gmra.mxu0 %v460
        %v1689 = vpop.f32.mrf.mxu0
        %v1690 = vadd.f32 %v1577, %v1689
        %1691 = vmatmul.f32.gmra.mxu0 %v468
        %v1692 = vpop.f32.mrf.mxu0
        %v1693 = vadd.f32 %v1580, %v1692
        %1694 = vmatmul.f32.gmra.mxu0 %v476
        %v1695 = vpop.f32.mrf.mxu0
        %v1696 = vadd.f32 %v1583, %v1695
        %1697 = vmatmul.f32.gmra.mxu0 %v484
        %v1698 = vpop.f32.mrf.mxu0
        %v1699 = vadd.f32 %v1586, %v1698
        %1700 = vmatmul.f32.gmra.mxu0 %v492
        %v1701 = vpop.f32.mrf.mxu0
        %v1702 = vadd.f32 %v1589, %v1701
        %1703 = vmatmul.f32.gmra.mxu0 %v500
        %v1704 = vpop.f32.mrf.mxu0
        %v1705 = vadd.f32 %v1592, %v1704
        %1706 = vmatmul.f32.gmra.mxu0 %v508
        %v1707 = vpop.f32.mrf.mxu0
        %v1708 = vadd.f32 %v1595, %v1707
        %1709 = vmatmul.f32.gmra.mxu0 %v516
        %v1710 = vpop.f32.mrf.mxu0
        %v1711 = vadd.f32 %v1598, %v1710
        %1712 = vmatmul.f32.gmra.mxu0 %v524
        %v1713 = vpop.f32.mrf.mxu0
        %v1714 = vadd.f32 %v1601, %v1713
        %1715 = vmatmul.f32.gmra.mxu0 %v532
        %v1716 = vpop.f32.mrf.mxu0
        %v1717 = vadd.f32 %v1604, %v1716
        %1718 = vmatmul.f32.gmra.mxu0 %v540
        %v1719 = vpop.f32.mrf.mxu0
        %v1720 = vadd.f32 %v1607, %v1719
        %1721 = vmatmul.f32.gmra.mxu0 %v548
        %v1722 = vpop.f32.mrf.mxu0
        %v1723 = vadd.f32 %v1610, %v1722
        %1724 = vmatmul.f32.gmra.mxu0 %v556
        %v1725 = vpop.f32.mrf.mxu0
        %v1726 = vadd.f32 %v1613, %v1725
        %1727 = vmatmul.f32.gmra.mxu0 %v564
        %v1728 = vpop.f32.mrf.mxu0
        %v1729 = vadd.f32 %v1616, %v1728
        %1730 = vdwg.mxu0
        %1731 = vmatpush.msra.mxu0 %v596
        %1732 = vmatpush.msra.mxu0 %v594
        %1733 = vmatpush.msra.mxu0 %v592
        %1734 = vmatpush.msra.mxu0 %v590
        %1735 = vmatpush.msra.mxu0 %v588
        %1736 = vmatpush.msra.mxu0 %v586
        %1737 = vmatpush.msra.mxu0 %v584
        %1738 = vmatpush.msra.mxu0 %v582
        %1739 = vmatpush.msra.mxu0 %v580
        %1740 = vmatpush.msra.mxu0 %v578
        %1741 = vmatpush.msra.mxu0 %v576
        %1742 = vmatpush.msra.mxu0 %v574
        %1743 = vmatpush.msra.mxu0 %v572
        %1744 = vmatpush.msra.mxu0 %v570
        %1745 = vmatpush.msra.mxu0 %v568
        %1746 = vmatpush.msra.mxu0 %v566
        %1747 = vmatmul.f32.gmra.mxu0 %v309
        %v1748 = vpop.f32.mrf.mxu0
        %v1749 = vadd.f32 %v824, %v1748
        %1750 = vmatmul.f32.gmra.mxu0 %v317
        %v1751 = vpop.f32.mrf.mxu0
        %v1752 = vadd.f32 %v824, %v1751
        %1753 = vmatmul.f32.gmra.mxu0 %v325
        %v1754 = vpop.f32.mrf.mxu0
        %v1755 = vadd.f32 %v824, %v1754
        %1756 = vmatmul.f32.gmra.mxu0 %v333
        %v1757 = vpop.f32.mrf.mxu0
        %v1758 = vadd.f32 %v824, %v1757
        %1759 = vmatmul.f32.gmra.mxu0 %v341
        %v1760 = vpop.f32.mrf.mxu0
        %v1761 = vadd.f32 %v824, %v1760
        %1762 = vmatmul.f32.gmra.mxu0 %v349
        %v1763 = vpop.f32.mrf.mxu0
        %v1764 = vadd.f32 %v824, %v1763
        %1765 = vmatmul.f32.gmra.mxu0 %v357
        %v1766 = vpop.f32.mrf.mxu0
        %v1767 = vadd.f32 %v824, %v1766
        %1768 = vmatmul.f32.gmra.mxu0 %v365
        %v1769 = vpop.f32.mrf.mxu0
        %v1770 = vadd.f32 %v824, %v1769
        %1771 = vmatmul.f32.gmra.mxu0 %v373
        %v1772 = vpop.f32.mrf.mxu0
        %v1773 = vadd.f32 %v824, %v1772
        %1774 = vmatmul.f32.gmra.mxu0 %v381
        %v1775 = vpop.f32.mrf.mxu0
        %v1776 = vadd.f32 %v824, %v1775
        %1777 = vmatmul.f32.gmra.mxu0 %v389
        %v1778 = vpop.f32.mrf.mxu0
        %v1779 = vadd.f32 %v824, %v1778
        %1780 = vmatmul.f32.gmra.mxu0 %v397
        %v1781 = vpop.f32.mrf.mxu0
        %v1782 = vadd.f32 %v824, %v1781
        %1783 = vmatmul.f32.gmra.mxu0 %v405
        %v1784 = vpop.f32.mrf.mxu0
        %v1785 = vadd.f32 %v824, %v1784
        %1786 = vmatmul.f32.gmra.mxu0 %v413
        %v1787 = vpop.f32.mrf.mxu0
        %v1788 = vadd.f32 %v824, %v1787
        %1789 = vmatmul.f32.gmra.mxu0 %v421
        %v1790 = vpop.f32.mrf.mxu0
        %v1791 = vadd.f32 %v824, %v1790
        %1792 = vmatmul.f32.gmra.mxu0 %v429
        %v1793 = vpop.f32.mrf.mxu0
        %v1794 = vadd.f32 %v824, %v1793
        %1795 = vmatmul.f32.gmra.mxu0 %v437
        %v1796 = vpop.f32.mrf.mxu0
        %v1797 = vadd.f32 %v824, %v1796
        %1798 = vmatmul.f32.gmra.mxu0 %v445
        %v1799 = vpop.f32.mrf.mxu0
        %v1800 = vadd.f32 %v824, %v1799
        %1801 = vmatmul.f32.gmra.mxu0 %v453
        %v1802 = vpop.f32.mrf.mxu0
        %v1803 = vadd.f32 %v824, %v1802
        %1804 = vmatmul.f32.gmra.mxu0 %v461
        %v1805 = vpop.f32.mrf.mxu0
        %v1806 = vadd.f32 %v824, %v1805
        %1807 = vmatmul.f32.gmra.mxu0 %v469
        %v1808 = vpop.f32.mrf.mxu0
        %v1809 = vadd.f32 %v824, %v1808
        %1810 = vmatmul.f32.gmra.mxu0 %v477
        %v1811 = vpop.f32.mrf.mxu0
        %v1812 = vadd.f32 %v824, %v1811
        %1813 = vmatmul.f32.gmra.mxu0 %v485
        %v1814 = vpop.f32.mrf.mxu0
        %v1815 = vadd.f32 %v824, %v1814
        %1816 = vmatmul.f32.gmra.mxu0 %v493
        %v1817 = vpop.f32.mrf.mxu0
        %v1818 = vadd.f32 %v824, %v1817
        %1819 = vmatmul.f32.gmra.mxu0 %v501
        %v1820 = vpop.f32.mrf.mxu0
        %v1821 = vadd.f32 %v824, %v1820
        %1822 = vmatmul.f32.gmra.mxu0 %v509
        %v1823 = vpop.f32.mrf.mxu0
        %v1824 = vadd.f32 %v824, %v1823
        %1825 = vmatmul.f32.gmra.mxu0 %v517
        %v1826 = vpop.f32.mrf.mxu0
        %v1827 = vadd.f32 %v824, %v1826
        %1828 = vmatmul.f32.gmra.mxu0 %v525
        %v1829 = vpop.f32.mrf.mxu0
        %v1830 = vadd.f32 %v824, %v1829
        %1831 = vmatmul.f32.gmra.mxu0 %v533
        %v1832 = vpop.f32.mrf.mxu0
        %v1833 = vadd.f32 %v824, %v1832
        %1834 = vmatmul.f32.gmra.mxu0 %v541
        %v1835 = vpop.f32.mrf.mxu0
        %v1836 = vadd.f32 %v824, %v1835
        %1837 = vmatmul.f32.gmra.mxu0 %v549
        %v1838 = vpop.f32.mrf.mxu0
        %v1839 = vadd.f32 %v824, %v1838
        %1840 = vmatmul.f32.gmra.mxu0 %v557
        %v1841 = vpop.f32.mrf.mxu0
        %v1842 = vadd.f32 %v824, %v1841
        %1843 = vdwg.mxu0
        %1844 = vmatpush.msra.mxu0 %v628
        %1845 = vmatpush.msra.mxu0 %v626
        %1846 = vmatpush.msra.mxu0 %v624
        %1847 = vmatpush.msra.mxu0 %v622
        %1848 = vmatpush.msra.mxu0 %v620
        %1849 = vmatpush.msra.mxu0 %v618
        %1850 = vmatpush.msra.mxu0 %v616
        %1851 = vmatpush.msra.mxu0 %v614
        %1852 = vmatpush.msra.mxu0 %v612
        %1853 = vmatpush.msra.mxu0 %v610
        %1854 = vmatpush.msra.mxu0 %v608
        %1855 = vmatpush.msra.mxu0 %v606
        %1856 = vmatpush.msra.mxu0 %v604
        %1857 = vmatpush.msra.mxu0 %v602
        %1858 = vmatpush.msra.mxu0 %v600
        %1859 = vmatpush.msra.mxu0 %v598
        %1860 = vmatmul.f32.gmra.mxu0 %v310
        %v1861 = vpop.f32.mrf.mxu0
        %v1862 = vadd.f32 %v1749, %v1861
        %1863 = vmatmul.f32.gmra.mxu0 %v318
        %v1864 = vpop.f32.mrf.mxu0
        %v1865 = vadd.f32 %v1752, %v1864
        %1866 = vmatmul.f32.gmra.mxu0 %v326
        %v1867 = vpop.f32.mrf.mxu0
        %v1868 = vadd.f32 %v1755, %v1867
        %1869 = vmatmul.f32.gmra.mxu0 %v334
        %v1870 = vpop.f32.mrf.mxu0
        %v1871 = vadd.f32 %v1758, %v1870
        %1872 = vmatmul.f32.gmra.mxu0 %v342
        %v1873 = vpop.f32.mrf.mxu0
        %v1874 = vadd.f32 %v1761, %v1873
        %1875 = vmatmul.f32.gmra.mxu0 %v350
        %v1876 = vpop.f32.mrf.mxu0
        %v1877 = vadd.f32 %v1764, %v1876
        %1878 = vmatmul.f32.gmra.mxu0 %v358
        %v1879 = vpop.f32.mrf.mxu0
        %v1880 = vadd.f32 %v1767, %v1879
        %1881 = vmatmul.f32.gmra.mxu0 %v366
        %v1882 = vpop.f32.mrf.mxu0
        %v1883 = vadd.f32 %v1770, %v1882
        %1884 = vmatmul.f32.gmra.mxu0 %v374
        %v1885 = vpop.f32.mrf.mxu0
        %v1886 = vadd.f32 %v1773, %v1885
        %1887 = vmatmul.f32.gmra.mxu0 %v382
        %v1888 = vpop.f32.mrf.mxu0
        %v1889 = vadd.f32 %v1776, %v1888
        %1890 = vmatmul.f32.gmra.mxu0 %v390
        %v1891 = vpop.f32.mrf.mxu0
        %v1892 = vadd.f32 %v1779, %v1891
        %1893 = vmatmul.f32.gmra.mxu0 %v398
        %v1894 = vpop.f32.mrf.mxu0
        %v1895 = vadd.f32 %v1782, %v1894
        %1896 = vmatmul.f32.gmra.mxu0 %v406
        %v1897 = vpop.f32.mrf.mxu0
        %v1898 = vadd.f32 %v1785, %v1897
        %1899 = vmatmul.f32.gmra.mxu0 %v414
        %v1900 = vpop.f32.mrf.mxu0
        %v1901 = vadd.f32 %v1788, %v1900
        %1902 = vmatmul.f32.gmra.mxu0 %v422
        %v1903 = vpop.f32.mrf.mxu0
        %v1904 = vadd.f32 %v1791, %v1903
        %1905 = vmatmul.f32.gmra.mxu0 %v430
        %v1906 = vpop.f32.mrf.mxu0
        %v1907 = vadd.f32 %v1794, %v1906
        %1908 = vmatmul.f32.gmra.mxu0 %v438
        %v1909 = vpop.f32.mrf.mxu0
        %v1910 = vadd.f32 %v1797, %v1909
        %1911 = vmatmul.f32.gmra.mxu0 %v446
        %v1912 = vpop.f32.mrf.mxu0
        %v1913 = vadd.f32 %v1800, %v1912
        %1914 = vmatmul.f32.gmra.mxu0 %v454
        %v1915 = vpop.f32.mrf.mxu0
        %v1916 = vadd.f32 %v1803, %v1915
        %1917 = vmatmul.f32.gmra.mxu0 %v462
        %v1918 = vpop.f32.mrf.mxu0
        %v1919 = vadd.f32 %v1806, %v1918
        %1920 = vmatmul.f32.gmra.mxu0 %v470
        %v1921 = vpop.f32.mrf.mxu0
        %v1922 = vadd.f32 %v1809, %v1921
        %1923 = vmatmul.f32.gmra.mxu0 %v478
        %v1924 = vpop.f32.mrf.mxu0
        %v1925 = vadd.f32 %v1812, %v1924
        %1926 = vmatmul.f32.gmra.mxu0 %v486
        %v1927 = vpop.f32.mrf.mxu0
        %v1928 = vadd.f32 %v1815, %v1927
        %1929 = vmatmul.f32.gmra.mxu0 %v494
        %v1930 = vpop.f32.mrf.mxu0
        %v1931 = vadd.f32 %v1818, %v1930
        %1932 = vmatmul.f32.gmra.mxu0 %v502
        %v1933 = vpop.f32.mrf.mxu0
        %v1934 = vadd.f32 %v1821, %v1933
        %1935 = vmatmul.f32.gmra.mxu0 %v510
        %v1936 = vpop.f32.mrf.mxu0
        %v1937 = vadd.f32 %v1824, %v1936
        %1938 = vmatmul.f32.gmra.mxu0 %v518
        %v1939 = vpop.f32.mrf.mxu0
        %v1940 = vadd.f32 %v1827, %v1939
        %1941 = vmatmul.f32.gmra.mxu0 %v526
        %v1942 = vpop.f32.mrf.mxu0
        %v1943 = vadd.f32 %v1830, %v1942
        %1944 = vmatmul.f32.gmra.mxu0 %v534
        %v1945 = vpop.f32.mrf.mxu0
        %v1946 = vadd.f32 %v1833, %v1945
        %1947 = vmatmul.f32.gmra.mxu0 %v542
        %v1948 = vpop.f32.mrf.mxu0
        %v1949 = vadd.f32 %v1836, %v1948
        %1950 = vmatmul.f32.gmra.mxu0 %v550
        %v1951 = vpop.f32.mrf.mxu0
        %v1952 = vadd.f32 %v1839, %v1951
        %1953 = vmatmul.f32.gmra.mxu0 %v558
        %v1954 = vpop.f32.mrf.mxu0
        %v1955 = vadd.f32 %v1842, %v1954
        %1956 = vdwg.mxu0
        %1957 = vmatpush.msra.mxu0 %v660
        %1958 = vmatpush.msra.mxu0 %v658
        %1959 = vmatpush.msra.mxu0 %v656
        %1960 = vmatpush.msra.mxu0 %v654
        %1961 = vmatpush.msra.mxu0 %v652
        %1962 = vmatpush.msra.mxu0 %v650
        %1963 = vmatpush.msra.mxu0 %v648
        %1964 = vmatpush.msra.mxu0 %v646
        %1965 = vmatpush.msra.mxu0 %v644
        %1966 = vmatpush.msra.mxu0 %v642
        %1967 = vmatpush.msra.mxu0 %v640
        %1968 = vmatpush.msra.mxu0 %v638
        %1969 = vmatpush.msra.mxu0 %v636
        %1970 = vmatpush.msra.mxu0 %v634
        %1971 = vmatpush.msra.mxu0 %v632
        %1972 = vmatpush.msra.mxu0 %v630
        %1973 = vmatmul.f32.gmra.mxu0 %v311
        %v1974 = vpop.f32.mrf.mxu0
        %v1975 = vadd.f32 %v1862, %v1974
        %1976 = vmatmul.f32.gmra.mxu0 %v319
        %v1977 = vpop.f32.mrf.mxu0
        %v1978 = vadd.f32 %v1865, %v1977
        %1979 = vmatmul.f32.gmra.mxu0 %v327
        %v1980 = vpop.f32.mrf.mxu0
        %v1981 = vadd.f32 %v1868, %v1980
        %1982 = vmatmul.f32.gmra.mxu0 %v335
        %v1983 = vpop.f32.mrf.mxu0
        %v1984 = vadd.f32 %v1871, %v1983
        %1985 = vmatmul.f32.gmra.mxu0 %v343
        %v1986 = vpop.f32.mrf.mxu0
        %v1987 = vadd.f32 %v1874, %v1986
        %1988 = vmatmul.f32.gmra.mxu0 %v351
        %v1989 = vpop.f32.mrf.mxu0
        %v1990 = vadd.f32 %v1877, %v1989
        %1991 = vmatmul.f32.gmra.mxu0 %v359
        %v1992 = vpop.f32.mrf.mxu0
        %v1993 = vadd.f32 %v1880, %v1992
        %1994 = vmatmul.f32.gmra.mxu0 %v367
        %v1995 = vpop.f32.mrf.mxu0
        %v1996 = vadd.f32 %v1883, %v1995
        %1997 = vmatmul.f32.gmra.mxu0 %v375
        %v1998 = vpop.f32.mrf.mxu0
        %v1999 = vadd.f32 %v1886, %v1998
        %2000 = vmatmul.f32.gmra.mxu0 %v383
        %v2001 = vpop.f32.mrf.mxu0
        %v2002 = vadd.f32 %v1889, %v2001
        %2003 = vmatmul.f32.gmra.mxu0 %v391
        %v2004 = vpop.f32.mrf.mxu0
        %v2005 = vadd.f32 %v1892, %v2004
        %2006 = vmatmul.f32.gmra.mxu0 %v399
        %v2007 = vpop.f32.mrf.mxu0
        %v2008 = vadd.f32 %v1895, %v2007
        %2009 = vmatmul.f32.gmra.mxu0 %v407
        %v2010 = vpop.f32.mrf.mxu0
        %v2011 = vadd.f32 %v1898, %v2010
        %2012 = vmatmul.f32.gmra.mxu0 %v415
        %v2013 = vpop.f32.mrf.mxu0
        %v2014 = vadd.f32 %v1901, %v2013
        %2015 = vmatmul.f32.gmra.mxu0 %v423
        %v2016 = vpop.f32.mrf.mxu0
        %v2017 = vadd.f32 %v1904, %v2016
        %2018 = vmatmul.f32.gmra.mxu0 %v431
        %v2019 = vpop.f32.mrf.mxu0
        %v2020 = vadd.f32 %v1907, %v2019
        %2021 = vmatmul.f32.gmra.mxu0 %v439
        %v2022 = vpop.f32.mrf.mxu0
        %v2023 = vadd.f32 %v1910, %v2022
        %2024 = vmatmul.f32.gmra.mxu0 %v447
        %v2025 = vpop.f32.mrf.mxu0
        %v2026 = vadd.f32 %v1913, %v2025
        %2027 = vmatmul.f32.gmra.mxu0 %v455
        %v2028 = vpop.f32.mrf.mxu0
        %v2029 = vadd.f32 %v1916, %v2028
        %2030 = vmatmul.f32.gmra.mxu0 %v463
        %v2031 = vpop.f32.mrf.mxu0
        %v2032 = vadd.f32 %v1919, %v2031
        %2033 = vmatmul.f32.gmra.mxu0 %v471
        %v2034 = vpop.f32.mrf.mxu0
        %v2035 = vadd.f32 %v1922, %v2034
        %2036 = vmatmul.f32.gmra.mxu0 %v479
        %v2037 = vpop.f32.mrf.mxu0
        %v2038 = vadd.f32 %v1925, %v2037
        %2039 = vmatmul.f32.gmra.mxu0 %v487
        %v2040 = vpop.f32.mrf.mxu0
        %v2041 = vadd.f32 %v1928, %v2040
        %2042 = vmatmul.f32.gmra.mxu0 %v495
        %v2043 = vpop.f32.mrf.mxu0
        %v2044 = vadd.f32 %v1931, %v2043
        %2045 = vmatmul.f32.gmra.mxu0 %v503
        %v2046 = vpop.f32.mrf.mxu0
        %v2047 = vadd.f32 %v1934, %v2046
        %2048 = vmatmul.f32.gmra.mxu0 %v511
        %v2049 = vpop.f32.mrf.mxu0
        %v2050 = vadd.f32 %v1937, %v2049
        %2051 = vmatmul.f32.gmra.mxu0 %v519
        %v2052 = vpop.f32.mrf.mxu0
        %v2053 = vadd.f32 %v1940, %v2052
        %2054 = vmatmul.f32.gmra.mxu0 %v527
        %v2055 = vpop.f32.mrf.mxu0
        %v2056 = vadd.f32 %v1943, %v2055
        %2057 = vmatmul.f32.gmra.mxu0 %v535
        %v2058 = vpop.f32.mrf.mxu0
        %v2059 = vadd.f32 %v1946, %v2058
        %2060 = vmatmul.f32.gmra.mxu0 %v543
        %v2061 = vpop.f32.mrf.mxu0
        %v2062 = vadd.f32 %v1949, %v2061
        %2063 = vmatmul.f32.gmra.mxu0 %v551
        %v2064 = vpop.f32.mrf.mxu0
        %v2065 = vadd.f32 %v1952, %v2064
        %2066 = vmatmul.f32.gmra.mxu0 %v559
        %v2067 = vpop.f32.mrf.mxu0
        %v2068 = vadd.f32 %v1955, %v2067
        %2069 = vdwg.mxu0
        %2070 = vmatpush.msra.mxu0 %v692
        %2071 = vmatpush.msra.mxu0 %v690
        %2072 = vmatpush.msra.mxu0 %v688
        %2073 = vmatpush.msra.mxu0 %v686
        %2074 = vmatpush.msra.mxu0 %v684
        %2075 = vmatpush.msra.mxu0 %v682
        %2076 = vmatpush.msra.mxu0 %v680
        %2077 = vmatpush.msra.mxu0 %v678
        %2078 = vmatpush.msra.mxu0 %v676
        %2079 = vmatpush.msra.mxu0 %v674
        %2080 = vmatpush.msra.mxu0 %v672
        %2081 = vmatpush.msra.mxu0 %v670
        %2082 = vmatpush.msra.mxu0 %v668
        %2083 = vmatpush.msra.mxu0 %v666
        %2084 = vmatpush.msra.mxu0 %v664
        %2085 = vmatpush.msra.mxu0 %v662
        %2086 = vmatmul.f32.gmra.mxu0 %v312
        %v2087 = vpop.f32.mrf.mxu0
        %v2088 = vadd.f32 %v1975, %v2087
        %2089 = vmatmul.f32.gmra.mxu0 %v320
        %v2090 = vpop.f32.mrf.mxu0
        %v2091 = vadd.f32 %v1978, %v2090
        %2092 = vmatmul.f32.gmra.mxu0 %v328
        %v2093 = vpop.f32.mrf.mxu0
        %v2094 = vadd.f32 %v1981, %v2093
        %2095 = vmatmul.f32.gmra.mxu0 %v336
        %v2096 = vpop.f32.mrf.mxu0
        %v2097 = vadd.f32 %v1984, %v2096
        %2098 = vmatmul.f32.gmra.mxu0 %v344
        %v2099 = vpop.f32.mrf.mxu0
        %v2100 = vadd.f32 %v1987, %v2099
        %2101 = vmatmul.f32.gmra.mxu0 %v352
        %v2102 = vpop.f32.mrf.mxu0
        %v2103 = vadd.f32 %v1990, %v2102
        %2104 = vmatmul.f32.gmra.mxu0 %v360
        %v2105 = vpop.f32.mrf.mxu0
        %v2106 = vadd.f32 %v1993, %v2105
        %2107 = vmatmul.f32.gmra.mxu0 %v368
        %v2108 = vpop.f32.mrf.mxu0
        %v2109 = vadd.f32 %v1996, %v2108
        %2110 = vmatmul.f32.gmra.mxu0 %v376
        %v2111 = vpop.f32.mrf.mxu0
        %v2112 = vadd.f32 %v1999, %v2111
        %2113 = vmatmul.f32.gmra.mxu0 %v384
        %v2114 = vpop.f32.mrf.mxu0
        %v2115 = vadd.f32 %v2002, %v2114
        %2116 = vmatmul.f32.gmra.mxu0 %v392
        %v2117 = vpop.f32.mrf.mxu0
        %v2118 = vadd.f32 %v2005, %v2117
        %2119 = vmatmul.f32.gmra.mxu0 %v400
        %v2120 = vpop.f32.mrf.mxu0
        %v2121 = vadd.f32 %v2008, %v2120
        %2122 = vmatmul.f32.gmra.mxu0 %v408
        %v2123 = vpop.f32.mrf.mxu0
        %v2124 = vadd.f32 %v2011, %v2123
        %2125 = vmatmul.f32.gmra.mxu0 %v416
        %v2126 = vpop.f32.mrf.mxu0
        %v2127 = vadd.f32 %v2014, %v2126
        %2128 = vmatmul.f32.gmra.mxu0 %v424
        %v2129 = vpop.f32.mrf.mxu0
        %v2130 = vadd.f32 %v2017, %v2129
        %2131 = vmatmul.f32.gmra.mxu0 %v432
        %v2132 = vpop.f32.mrf.mxu0
        %v2133 = vadd.f32 %v2020, %v2132
        %2134 = vmatmul.f32.gmra.mxu0 %v440
        %v2135 = vpop.f32.mrf.mxu0
        %v2136 = vadd.f32 %v2023, %v2135
        %2137 = vmatmul.f32.gmra.mxu0 %v448
        %v2138 = vpop.f32.mrf.mxu0
        %v2139 = vadd.f32 %v2026, %v2138
        %2140 = vmatmul.f32.gmra.mxu0 %v456
        %v2141 = vpop.f32.mrf.mxu0
        %v2142 = vadd.f32 %v2029, %v2141
        %2143 = vmatmul.f32.gmra.mxu0 %v464
        %v2144 = vpop.f32.mrf.mxu0
        %v2145 = vadd.f32 %v2032, %v2144
        %2146 = vmatmul.f32.gmra.mxu0 %v472
        %v2147 = vpop.f32.mrf.mxu0
        %v2148 = vadd.f32 %v2035, %v2147
        %2149 = vmatmul.f32.gmra.mxu0 %v480
        %v2150 = vpop.f32.mrf.mxu0
        %v2151 = vadd.f32 %v2038, %v2150
        %2152 = vmatmul.f32.gmra.mxu0 %v488
        %v2153 = vpop.f32.mrf.mxu0
        %v2154 = vadd.f32 %v2041, %v2153
        %2155 = vmatmul.f32.gmra.mxu0 %v496
        %v2156 = vpop.f32.mrf.mxu0
        %v2157 = vadd.f32 %v2044, %v2156
        %2158 = vmatmul.f32.gmra.mxu0 %v504
        %v2159 = vpop.f32.mrf.mxu0
        %v2160 = vadd.f32 %v2047, %v2159
        %2161 = vmatmul.f32.gmra.mxu0 %v512
        %v2162 = vpop.f32.mrf.mxu0
        %v2163 = vadd.f32 %v2050, %v2162
        %2164 = vmatmul.f32.gmra.mxu0 %v520
        %v2165 = vpop.f32.mrf.mxu0
        %v2166 = vadd.f32 %v2053, %v2165
        %2167 = vmatmul.f32.gmra.mxu0 %v528
        %v2168 = vpop.f32.mrf.mxu0
        %v2169 = vadd.f32 %v2056, %v2168
        %2170 = vmatmul.f32.gmra.mxu0 %v536
        %v2171 = vpop.f32.mrf.mxu0
        %v2172 = vadd.f32 %v2059, %v2171
        %2173 = vmatmul.f32.gmra.mxu0 %v544
        %v2174 = vpop.f32.mrf.mxu0
        %v2175 = vadd.f32 %v2062, %v2174
        %2176 = vmatmul.f32.gmra.mxu0 %v552
        %v2177 = vpop.f32.mrf.mxu0
        %v2178 = vadd.f32 %v2065, %v2177
        %2179 = vmatmul.f32.gmra.mxu0 %v560
        %v2180 = vpop.f32.mrf.mxu0
        %v2181 = vadd.f32 %v2068, %v2180
        %2182 = vdwg.mxu0
        %2183 = vmatpush.msra.mxu0 %v724
        %2184 = vmatpush.msra.mxu0 %v722
        %2185 = vmatpush.msra.mxu0 %v720
        %2186 = vmatpush.msra.mxu0 %v718
        %2187 = vmatpush.msra.mxu0 %v716
        %2188 = vmatpush.msra.mxu0 %v714
        %2189 = vmatpush.msra.mxu0 %v712
        %2190 = vmatpush.msra.mxu0 %v710
        %2191 = vmatpush.msra.mxu0 %v708
        %2192 = vmatpush.msra.mxu0 %v706
        %2193 = vmatpush.msra.mxu0 %v704
        %2194 = vmatpush.msra.mxu0 %v702
        %2195 = vmatpush.msra.mxu0 %v700
        %2196 = vmatpush.msra.mxu0 %v698
        %2197 = vmatpush.msra.mxu0 %v696
        %2198 = vmatpush.msra.mxu0 %v694
        %2199 = vmatmul.f32.gmra.mxu0 %v313
        %v2200 = vpop.f32.mrf.mxu0
        %v2201 = vadd.f32 %v2088, %v2200
        %2202 = vmatmul.f32.gmra.mxu0 %v321
        %v2203 = vpop.f32.mrf.mxu0
        %v2204 = vadd.f32 %v2091, %v2203
        %2205 = vmatmul.f32.gmra.mxu0 %v329
        %v2206 = vpop.f32.mrf.mxu0
        %v2207 = vadd.f32 %v2094, %v2206
        %2208 = vmatmul.f32.gmra.mxu0 %v337
        %v2209 = vpop.f32.mrf.mxu0
        %v2210 = vadd.f32 %v2097, %v2209
        %2211 = vmatmul.f32.gmra.mxu0 %v345
        %v2212 = vpop.f32.mrf.mxu0
        %v2213 = vadd.f32 %v2100, %v2212
        %2214 = vmatmul.f32.gmra.mxu0 %v353
        %v2215 = vpop.f32.mrf.mxu0
        %v2216 = vadd.f32 %v2103, %v2215
        %2217 = vmatmul.f32.gmra.mxu0 %v361
        %v2218 = vpop.f32.mrf.mxu0
        %v2219 = vadd.f32 %v2106, %v2218
        %2220 = vmatmul.f32.gmra.mxu0 %v369
        %v2221 = vpop.f32.mrf.mxu0
        %v2222 = vadd.f32 %v2109, %v2221
        %2223 = vmatmul.f32.gmra.mxu0 %v377
        %v2224 = vpop.f32.mrf.mxu0
        %v2225 = vadd.f32 %v2112, %v2224
        %2226 = vmatmul.f32.gmra.mxu0 %v385
        %v2227 = vpop.f32.mrf.mxu0
        %v2228 = vadd.f32 %v2115, %v2227
        %2229 = vmatmul.f32.gmra.mxu0 %v393
        %v2230 = vpop.f32.mrf.mxu0
        %v2231 = vadd.f32 %v2118, %v2230
        %2232 = vmatmul.f32.gmra.mxu0 %v401
        %v2233 = vpop.f32.mrf.mxu0
        %v2234 = vadd.f32 %v2121, %v2233
        %2235 = vmatmul.f32.gmra.mxu0 %v409
        %v2236 = vpop.f32.mrf.mxu0
        %v2237 = vadd.f32 %v2124, %v2236
        %2238 = vmatmul.f32.gmra.mxu0 %v417
        %v2239 = vpop.f32.mrf.mxu0
        %v2240 = vadd.f32 %v2127, %v2239
        %2241 = vmatmul.f32.gmra.mxu0 %v425
        %v2242 = vpop.f32.mrf.mxu0
        %v2243 = vadd.f32 %v2130, %v2242
        %2244 = vmatmul.f32.gmra.mxu0 %v433
        %v2245 = vpop.f32.mrf.mxu0
        %v2246 = vadd.f32 %v2133, %v2245
        %2247 = vmatmul.f32.gmra.mxu0 %v441
        %v2248 = vpop.f32.mrf.mxu0
        %v2249 = vadd.f32 %v2136, %v2248
        %2250 = vmatmul.f32.gmra.mxu0 %v449
        %v2251 = vpop.f32.mrf.mxu0
        %v2252 = vadd.f32 %v2139, %v2251
        %2253 = vmatmul.f32.gmra.mxu0 %v457
        %v2254 = vpop.f32.mrf.mxu0
        %v2255 = vadd.f32 %v2142, %v2254
        %2256 = vmatmul.f32.gmra.mxu0 %v465
        %v2257 = vpop.f32.mrf.mxu0
        %v2258 = vadd.f32 %v2145, %v2257
        %2259 = vmatmul.f32.gmra.mxu0 %v473
        %v2260 = vpop.f32.mrf.mxu0
        %v2261 = vadd.f32 %v2148, %v2260
        %2262 = vmatmul.f32.gmra.mxu0 %v481
        %v2263 = vpop.f32.mrf.mxu0
        %v2264 = vadd.f32 %v2151, %v2263
        %2265 = vmatmul.f32.gmra.mxu0 %v489
        %v2266 = vpop.f32.mrf.mxu0
        %v2267 = vadd.f32 %v2154, %v2266
        %2268 = vmatmul.f32.gmra.mxu0 %v497
        %v2269 = vpop.f32.mrf.mxu0
        %v2270 = vadd.f32 %v2157, %v2269
        %2271 = vmatmul.f32.gmra.mxu0 %v505
        %v2272 = vpop.f32.mrf.mxu0
        %v2273 = vadd.f32 %v2160, %v2272
        %2274 = vmatmul.f32.gmra.mxu0 %v513
        %v2275 = vpop.f32.mrf.mxu0
        %v2276 = vadd.f32 %v2163, %v2275
        %2277 = vmatmul.f32.gmra.mxu0 %v521
        %v2278 = vpop.f32.mrf.mxu0
        %v2279 = vadd.f32 %v2166, %v2278
        %2280 = vmatmul.f32.gmra.mxu0 %v529
        %v2281 = vpop.f32.mrf.mxu0
        %v2282 = vadd.f32 %v2169, %v2281
        %2283 = vmatmul.f32.gmra.mxu0 %v537
        %v2284 = vpop.f32.mrf.mxu0
        %v2285 = vadd.f32 %v2172, %v2284
        %2286 = vmatmul.f32.gmra.mxu0 %v545
        %v2287 = vpop.f32.mrf.mxu0
        %v2288 = vadd.f32 %v2175, %v2287
        %2289 = vmatmul.f32.gmra.mxu0 %v553
        %v2290 = vpop.f32.mrf.mxu0
        %v2291 = vadd.f32 %v2178, %v2290
        %2292 = vmatmul.f32.gmra.mxu0 %v561
        %v2293 = vpop.f32.mrf.mxu0
        %v2294 = vadd.f32 %v2181, %v2293
        %2295 = vdwg.mxu0
        %2296 = vmatpush.msra.mxu0 %v756
        %2297 = vmatpush.msra.mxu0 %v754
        %2298 = vmatpush.msra.mxu0 %v752
        %2299 = vmatpush.msra.mxu0 %v750
        %2300 = vmatpush.msra.mxu0 %v748
        %2301 = vmatpush.msra.mxu0 %v746
        %2302 = vmatpush.msra.mxu0 %v744
        %2303 = vmatpush.msra.mxu0 %v742
        %2304 = vmatpush.msra.mxu0 %v740
        %2305 = vmatpush.msra.mxu0 %v738
        %2306 = vmatpush.msra.mxu0 %v736
        %2307 = vmatpush.msra.mxu0 %v734
        %2308 = vmatpush.msra.mxu0 %v732
        %2309 = vmatpush.msra.mxu0 %v730
        %2310 = vmatpush.msra.mxu0 %v728
        %2311 = vmatpush.msra.mxu0 %v726
        %2312 = vmatmul.f32.gmra.mxu0 %v314
        %v2313 = vpop.f32.mrf.mxu0
        %v2314 = vadd.f32 %v2201, %v2313
        %2315 = vmatmul.f32.gmra.mxu0 %v322
        %v2316 = vpop.f32.mrf.mxu0
        %v2317 = vadd.f32 %v2204, %v2316
        %2318 = vmatmul.f32.gmra.mxu0 %v330
        %v2319 = vpop.f32.mrf.mxu0
        %v2320 = vadd.f32 %v2207, %v2319
        %2321 = vmatmul.f32.gmra.mxu0 %v338
        %v2322 = vpop.f32.mrf.mxu0
        %v2323 = vadd.f32 %v2210, %v2322
        %2324 = vmatmul.f32.gmra.mxu0 %v346
        %v2325 = vpop.f32.mrf.mxu0
        %v2326 = vadd.f32 %v2213, %v2325
        %2327 = vmatmul.f32.gmra.mxu0 %v354
        %v2328 = vpop.f32.mrf.mxu0
        %v2329 = vadd.f32 %v2216, %v2328
        %2330 = vmatmul.f32.gmra.mxu0 %v362
        %v2331 = vpop.f32.mrf.mxu0
        %v2332 = vadd.f32 %v2219, %v2331
        %2333 = vmatmul.f32.gmra.mxu0 %v370
        %v2334 = vpop.f32.mrf.mxu0
        %v2335 = vadd.f32 %v2222, %v2334
        %2336 = vmatmul.f32.gmra.mxu0 %v378
        %v2337 = vpop.f32.mrf.mxu0
        %v2338 = vadd.f32 %v2225, %v2337
        %2339 = vmatmul.f32.gmra.mxu0 %v386
        %v2340 = vpop.f32.mrf.mxu0
        %v2341 = vadd.f32 %v2228, %v2340
        %2342 = vmatmul.f32.gmra.mxu0 %v394
        %v2343 = vpop.f32.mrf.mxu0
        %v2344 = vadd.f32 %v2231, %v2343
        %2345 = vmatmul.f32.gmra.mxu0 %v402
        %v2346 = vpop.f32.mrf.mxu0
        %v2347 = vadd.f32 %v2234, %v2346
        %2348 = vmatmul.f32.gmra.mxu0 %v410
        %v2349 = vpop.f32.mrf.mxu0
        %v2350 = vadd.f32 %v2237, %v2349
        %2351 = vmatmul.f32.gmra.mxu0 %v418
        %v2352 = vpop.f32.mrf.mxu0
        %v2353 = vadd.f32 %v2240, %v2352
        %2354 = vmatmul.f32.gmra.mxu0 %v426
        %v2355 = vpop.f32.mrf.mxu0
        %v2356 = vadd.f32 %v2243, %v2355
        %2357 = vmatmul.f32.gmra.mxu0 %v434
        %v2358 = vpop.f32.mrf.mxu0
        %v2359 = vadd.f32 %v2246, %v2358
        %2360 = vmatmul.f32.gmra.mxu0 %v442
        %v2361 = vpop.f32.mrf.mxu0
        %v2362 = vadd.f32 %v2249, %v2361
        %2363 = vmatmul.f32.gmra.mxu0 %v450
        %v2364 = vpop.f32.mrf.mxu0
        %v2365 = vadd.f32 %v2252, %v2364
        %2366 = vmatmul.f32.gmra.mxu0 %v458
        %v2367 = vpop.f32.mrf.mxu0
        %v2368 = vadd.f32 %v2255, %v2367
        %2369 = vmatmul.f32.gmra.mxu0 %v466
        %v2370 = vpop.f32.mrf.mxu0
        %v2371 = vadd.f32 %v2258, %v2370
        %2372 = vmatmul.f32.gmra.mxu0 %v474
        %v2373 = vpop.f32.mrf.mxu0
        %v2374 = vadd.f32 %v2261, %v2373
        %2375 = vmatmul.f32.gmra.mxu0 %v482
        %v2376 = vpop.f32.mrf.mxu0
        %v2377 = vadd.f32 %v2264, %v2376
        %2378 = vmatmul.f32.gmra.mxu0 %v490
        %v2379 = vpop.f32.mrf.mxu0
        %v2380 = vadd.f32 %v2267, %v2379
        %2381 = vmatmul.f32.gmra.mxu0 %v498
        %v2382 = vpop.f32.mrf.mxu0
        %v2383 = vadd.f32 %v2270, %v2382
        %2384 = vmatmul.f32.gmra.mxu0 %v506
        %v2385 = vpop.f32.mrf.mxu0
        %v2386 = vadd.f32 %v2273, %v2385
        %2387 = vmatmul.f32.gmra.mxu0 %v514
        %v2388 = vpop.f32.mrf.mxu0
        %v2389 = vadd.f32 %v2276, %v2388
        %2390 = vmatmul.f32.gmra.mxu0 %v522
        %v2391 = vpop.f32.mrf.mxu0
        %v2392 = vadd.f32 %v2279, %v2391
        %2393 = vmatmul.f32.gmra.mxu0 %v530
        %v2394 = vpop.f32.mrf.mxu0
        %v2395 = vadd.f32 %v2282, %v2394
        %2396 = vmatmul.f32.gmra.mxu0 %v538
        %v2397 = vpop.f32.mrf.mxu0
        %v2398 = vadd.f32 %v2285, %v2397
        %2399 = vmatmul.f32.gmra.mxu0 %v546
        %v2400 = vpop.f32.mrf.mxu0
        %v2401 = vadd.f32 %v2288, %v2400
        %2402 = vmatmul.f32.gmra.mxu0 %v554
        %v2403 = vpop.f32.mrf.mxu0
        %v2404 = vadd.f32 %v2291, %v2403
        %2405 = vmatmul.f32.gmra.mxu0 %v562
        %v2406 = vpop.f32.mrf.mxu0
        %v2407 = vadd.f32 %v2294, %v2406
        %2408 = vdwg.mxu0
        %2409 = vmatpush.msra.mxu0 %v788
        %2410 = vmatpush.msra.mxu0 %v786
        %2411 = vmatpush.msra.mxu0 %v784
        %2412 = vmatpush.msra.mxu0 %v782
        %2413 = vmatpush.msra.mxu0 %v780
        %2414 = vmatpush.msra.mxu0 %v778
        %2415 = vmatpush.msra.mxu0 %v776
        %2416 = vmatpush.msra.mxu0 %v774
        %2417 = vmatpush.msra.mxu0 %v772
        %2418 = vmatpush.msra.mxu0 %v770
        %2419 = vmatpush.msra.mxu0 %v768
        %2420 = vmatpush.msra.mxu0 %v766
        %2421 = vmatpush.msra.mxu0 %v764
        %2422 = vmatpush.msra.mxu0 %v762
        %2423 = vmatpush.msra.mxu0 %v760
        %2424 = vmatpush.msra.mxu0 %v758
        %2425 = vmatmul.f32.gmra.mxu0 %v315
        %v2426 = vpop.f32.mrf.mxu0
        %v2427 = vadd.f32 %v2314, %v2426
        %2428 = vmatmul.f32.gmra.mxu0 %v323
        %v2429 = vpop.f32.mrf.mxu0
        %v2430 = vadd.f32 %v2317, %v2429
        %2431 = vmatmul.f32.gmra.mxu0 %v331
        %v2432 = vpop.f32.mrf.mxu0
        %v2433 = vadd.f32 %v2320, %v2432
        %2434 = vmatmul.f32.gmra.mxu0 %v339
        %v2435 = vpop.f32.mrf.mxu0
        %v2436 = vadd.f32 %v2323, %v2435
        %2437 = vmatmul.f32.gmra.mxu0 %v347
        %v2438 = vpop.f32.mrf.mxu0
        %v2439 = vadd.f32 %v2326, %v2438
        %2440 = vmatmul.f32.gmra.mxu0 %v355
        %v2441 = vpop.f32.mrf.mxu0
        %v2442 = vadd.f32 %v2329, %v2441
        %2443 = vmatmul.f32.gmra.mxu0 %v363
        %v2444 = vpop.f32.mrf.mxu0
        %v2445 = vadd.f32 %v2332, %v2444
        %2446 = vmatmul.f32.gmra.mxu0 %v371
        %v2447 = vpop.f32.mrf.mxu0
        %v2448 = vadd.f32 %v2335, %v2447
        %2449 = vmatmul.f32.gmra.mxu0 %v379
        %v2450 = vpop.f32.mrf.mxu0
        %v2451 = vadd.f32 %v2338, %v2450
        %2452 = vmatmul.f32.gmra.mxu0 %v387
        %v2453 = vpop.f32.mrf.mxu0
        %v2454 = vadd.f32 %v2341, %v2453
        %2455 = vmatmul.f32.gmra.mxu0 %v395
        %v2456 = vpop.f32.mrf.mxu0
        %v2457 = vadd.f32 %v2344, %v2456
        %2458 = vmatmul.f32.gmra.mxu0 %v403
        %v2459 = vpop.f32.mrf.mxu0
        %v2460 = vadd.f32 %v2347, %v2459
        %2461 = vmatmul.f32.gmra.mxu0 %v411
        %v2462 = vpop.f32.mrf.mxu0
        %v2463 = vadd.f32 %v2350, %v2462
        %2464 = vmatmul.f32.gmra.mxu0 %v419
        %v2465 = vpop.f32.mrf.mxu0
        %v2466 = vadd.f32 %v2353, %v2465
        %2467 = vmatmul.f32.gmra.mxu0 %v427
        %v2468 = vpop.f32.mrf.mxu0
        %v2469 = vadd.f32 %v2356, %v2468
        %2470 = vmatmul.f32.gmra.mxu0 %v435
        %v2471 = vpop.f32.mrf.mxu0
        %v2472 = vadd.f32 %v2359, %v2471
        %2473 = vmatmul.f32.gmra.mxu0 %v443
        %v2474 = vpop.f32.mrf.mxu0
        %v2475 = vadd.f32 %v2362, %v2474
        %2476 = vmatmul.f32.gmra.mxu0 %v451
        %v2477 = vpop.f32.mrf.mxu0
        %v2478 = vadd.f32 %v2365, %v2477
        %2479 = vmatmul.f32.gmra.mxu0 %v459
        %v2480 = vpop.f32.mrf.mxu0
        %v2481 = vadd.f32 %v2368, %v2480
        %2482 = vmatmul.f32.gmra.mxu0 %v467
        %v2483 = vpop.f32.mrf.mxu0
        %v2484 = vadd.f32 %v2371, %v2483
        %2485 = vmatmul.f32.gmra.mxu0 %v475
        %v2486 = vpop.f32.mrf.mxu0
        %v2487 = vadd.f32 %v2374, %v2486
        %2488 = vmatmul.f32.gmra.mxu0 %v483
        %v2489 = vpop.f32.mrf.mxu0
        %v2490 = vadd.f32 %v2377, %v2489
        %2491 = vmatmul.f32.gmra.mxu0 %v491
        %v2492 = vpop.f32.mrf.mxu0
        %v2493 = vadd.f32 %v2380, %v2492
        %2494 = vmatmul.f32.gmra.mxu0 %v499
        %v2495 = vpop.f32.mrf.mxu0
        %v2496 = vadd.f32 %v2383, %v2495
        %2497 = vmatmul.f32.gmra.mxu0 %v507
        %v2498 = vpop.f32.mrf.mxu0
        %v2499 = vadd.f32 %v2386, %v2498
        %2500 = vmatmul.f32.gmra.mxu0 %v515
        %v2501 = vpop.f32.mrf.mxu0
        %v2502 = vadd.f32 %v2389, %v2501
        %2503 = vmatmul.f32.gmra.mxu0 %v523
        %v2504 = vpop.f32.mrf.mxu0
        %v2505 = vadd.f32 %v2392, %v2504
        %2506 = vmatmul.f32.gmra.mxu0 %v531
        %v2507 = vpop.f32.mrf.mxu0
        %v2508 = vadd.f32 %v2395, %v2507
        %2509 = vmatmul.f32.gmra.mxu0 %v539
        %v2510 = vpop.f32.mrf.mxu0
        %v2511 = vadd.f32 %v2398, %v2510
        %2512 = vmatmul.f32.gmra.mxu0 %v547
        %v2513 = vpop.f32.mrf.mxu0
        %v2514 = vadd.f32 %v2401, %v2513
        %2515 = vmatmul.f32.gmra.mxu0 %v555
        %v2516 = vpop.f32.mrf.mxu0
        %v2517 = vadd.f32 %v2404, %v2516
        %2518 = vmatmul.f32.gmra.mxu0 %v563
        %v2519 = vpop.f32.mrf.mxu0
        %v2520 = vadd.f32 %v2407, %v2519
        %2521 = vdwg.mxu0
        %2522 = vmatpush.msra.mxu0 %v820
        %2523 = vmatpush.msra.mxu0 %v818
        %2524 = vmatpush.msra.mxu0 %v816
        %2525 = vmatpush.msra.mxu0 %v814
        %2526 = vmatpush.msra.mxu0 %v812
        %2527 = vmatpush.msra.mxu0 %v810
        %2528 = vmatpush.msra.mxu0 %v808
        %2529 = vmatpush.msra.mxu0 %v806
        %2530 = vmatpush.msra.mxu0 %v804
        %2531 = vmatpush.msra.mxu0 %v802
        %2532 = vmatpush.msra.mxu0 %v800
        %2533 = vmatpush.msra.mxu0 %v798
        %2534 = vmatpush.msra.mxu0 %v796
        %2535 = vmatpush.msra.mxu0 %v794
        %2536 = vmatpush.msra.mxu0 %v792
        %2537 = vmatpush.msra.mxu0 %v790
        %2538 = vmatmul.f32.gmra.mxu0 %v316
        %v2539 = vpop.f32.mrf.mxu0
        %v2540 = vadd.f32 %v2427, %v2539
        %2541 = vmatmul.f32.gmra.mxu0 %v324
        %v2542 = vpop.f32.mrf.mxu0
        %v2543 = vadd.f32 %v2430, %v2542
        %2544 = vmatmul.f32.gmra.mxu0 %v332
        %v2545 = vpop.f32.mrf.mxu0
        %v2546 = vadd.f32 %v2433, %v2545
        %2547 = vmatmul.f32.gmra.mxu0 %v340
        %v2548 = vpop.f32.mrf.mxu0
        %v2549 = vadd.f32 %v2436, %v2548
        %2550 = vmatmul.f32.gmra.mxu0 %v348
        %v2551 = vpop.f32.mrf.mxu0
        %v2552 = vadd.f32 %v2439, %v2551
        %2553 = vmatmul.f32.gmra.mxu0 %v356
        %v2554 = vpop.f32.mrf.mxu0
        %v2555 = vadd.f32 %v2442, %v2554
        %2556 = vmatmul.f32.gmra.mxu0 %v364
        %v2557 = vpop.f32.mrf.mxu0
        %v2558 = vadd.f32 %v2445, %v2557
        %2559 = vmatmul.f32.gmra.mxu0 %v372
        %v2560 = vpop.f32.mrf.mxu0
        %v2561 = vadd.f32 %v2448, %v2560
        %2562 = vmatmul.f32.gmra.mxu0 %v380
        %v2563 = vpop.f32.mrf.mxu0
        %v2564 = vadd.f32 %v2451, %v2563
        %2565 = vmatmul.f32.gmra.mxu0 %v388
        %v2566 = vpop.f32.mrf.mxu0
        %v2567 = vadd.f32 %v2454, %v2566
        %2568 = vmatmul.f32.gmra.mxu0 %v396
        %v2569 = vpop.f32.mrf.mxu0
        %v2570 = vadd.f32 %v2457, %v2569
        %2571 = vmatmul.f32.gmra.mxu0 %v404
        %v2572 = vpop.f32.mrf.mxu0
        %v2573 = vadd.f32 %v2460, %v2572
        %2574 = vmatmul.f32.gmra.mxu0 %v412
        %v2575 = vpop.f32.mrf.mxu0
        %v2576 = vadd.f32 %v2463, %v2575
        %2577 = vmatmul.f32.gmra.mxu0 %v420
        %v2578 = vpop.f32.mrf.mxu0
        %v2579 = vadd.f32 %v2466, %v2578
        %2580 = vmatmul.f32.gmra.mxu0 %v428
        %v2581 = vpop.f32.mrf.mxu0
        %v2582 = vadd.f32 %v2469, %v2581
        %2583 = vmatmul.f32.gmra.mxu0 %v436
        %v2584 = vpop.f32.mrf.mxu0
        %v2585 = vadd.f32 %v2472, %v2584
        %2586 = vmatmul.f32.gmra.mxu0 %v444
        %v2587 = vpop.f32.mrf.mxu0
        %v2588 = vadd.f32 %v2475, %v2587
        %2589 = vmatmul.f32.gmra.mxu0 %v452
        %v2590 = vpop.f32.mrf.mxu0
        %v2591 = vadd.f32 %v2478, %v2590
        %2592 = vmatmul.f32.gmra.mxu0 %v460
        %v2593 = vpop.f32.mrf.mxu0
        %v2594 = vadd.f32 %v2481, %v2593
        %2595 = vmatmul.f32.gmra.mxu0 %v468
        %v2596 = vpop.f32.mrf.mxu0
        %v2597 = vadd.f32 %v2484, %v2596
        %2598 = vmatmul.f32.gmra.mxu0 %v476
        %v2599 = vpop.f32.mrf.mxu0
        %v2600 = vadd.f32 %v2487, %v2599
        %2601 = vmatmul.f32.gmra.mxu0 %v484
        %v2602 = vpop.f32.mrf.mxu0
        %v2603 = vadd.f32 %v2490, %v2602
        %2604 = vmatmul.f32.gmra.mxu0 %v492
        %v2605 = vpop.f32.mrf.mxu0
        %v2606 = vadd.f32 %v2493, %v2605
        %2607 = vmatmul.f32.gmra.mxu0 %v500
        %v2608 = vpop.f32.mrf.mxu0
        %v2609 = vadd.f32 %v2496, %v2608
        %2610 = vmatmul.f32.gmra.mxu0 %v508
        %v2611 = vpop.f32.mrf.mxu0
        %v2612 = vadd.f32 %v2499, %v2611
        %2613 = vmatmul.f32.gmra.mxu0 %v516
        %v2614 = vpop.f32.mrf.mxu0
        %v2615 = vadd.f32 %v2502, %v2614
        %2616 = vmatmul.f32.gmra.mxu0 %v524
        %v2617 = vpop.f32.mrf.mxu0
        %v2618 = vadd.f32 %v2505, %v2617
        %2619 = vmatmul.f32.gmra.mxu0 %v532
        %v2620 = vpop.f32.mrf.mxu0
        %v2621 = vadd.f32 %v2508, %v2620
        %2622 = vmatmul.f32.gmra.mxu0 %v540
        %v2623 = vpop.f32.mrf.mxu0
        %v2624 = vadd.f32 %v2511, %v2623
        %2625 = vmatmul.f32.gmra.mxu0 %v548
        %v2626 = vpop.f32.mrf.mxu0
        %v2627 = vadd.f32 %v2514, %v2626
        %2628 = vmatmul.f32.gmra.mxu0 %v556
        %v2629 = vpop.f32.mrf.mxu0
        %v2630 = vadd.f32 %v2517, %v2629
        %2631 = vmatmul.f32.gmra.mxu0 %v564
        %v2632 = vpop.f32.mrf.mxu0
        %v2633 = vadd.f32 %v2520, %v2632
        %2634 = vdwg.mxu0
        %v2635 = vtanh.pop %v1636
        %v2636 = vtanh.pop %v2540
        %v2637 = vtanh.pop %v1639
        %v2638 = vtanh.pop %v2543
        %v2639 = vtanh.pop %v1642
        %v2640 = vtanh.pop %v2546
        %v2641 = vtanh.pop %v1645
        %v2642 = vtanh.pop %v2549
        %v2643 = vtanh.pop %v1648
        %v2644 = vtanh.pop %v2552
        %v2645 = vtanh.pop %v1651
        %v2646 = vtanh.pop %v2555
        %v2647 = vtanh.pop %v1654
        %v2648 = vtanh.pop %v2558
        %v2649 = vtanh.pop %v1657
        %v2650 = vtanh.pop %v2561
        %v2651 = vtanh.pop %v1660
        %v2652 = vtanh.pop %v2564
        %v2653 = vtanh.pop %v1663
        %v2654 = vtanh.pop %v2567
        %v2655 = vtanh.pop %v1666
        %v2656 = vtanh.pop %v2570
        %v2657 = vtanh.pop %v1669
        %v2658 = vtanh.pop %v2573
        %v2659 = vtanh.pop %v1672
        %v2660 = vtanh.pop %v2576
        %v2661 = vtanh.pop %v1675
        %v2662 = vtanh.pop %v2579
        %v2663 = vtanh.pop %v1678
        %v2664 = vtanh.pop %v2582
        %v2665 = vtanh.pop %v1681
        %v2666 = vtanh.pop %v2585
        %v2667 = vtanh.pop %v1684
        %v2668 = vtanh.pop %v2588
        %v2669 = vtanh.pop %v1687
        %v2670 = vtanh.pop %v2591
        %v2671 = vtanh.pop %v1690
        %v2672 = vtanh.pop %v2594
        %v2673 = vtanh.pop %v1693
        %v2674 = vtanh.pop %v2597
        %v2675 = vtanh.pop %v1696
        %v2676 = vtanh.pop %v2600
        %v2677 = vtanh.pop %v1699
        %v2678 = vtanh.pop %v2603
        %v2679 = vtanh.pop %v1702
        %v2680 = vtanh.pop %v2606
        %v2681 = vtanh.pop %v1705
        %v2682 = vtanh.pop %v2609
        %v2683 = vtanh.pop %v1708
        %v2684 = vtanh.pop %v2612
        %v2685 = vtanh.pop %v1711
        %v2686 = vtanh.pop %v2615
        %v2687 = vtanh.pop %v1714
        %v2688 = vtanh.pop %v2618
        %v2689 = vtanh.pop %v1717
        %v2690 = vtanh.pop %v2621
        %v2691 = vtanh.pop %v1720
        %v2692 = vtanh.pop %v2624
        %v2693 = vtanh.pop %v1723
        %v2694 = vtanh.pop %v2627
        %v2695 = vtanh.pop %v1726
        %v2696 = vtanh.pop %v2630
        %v2697 = vtanh.pop %v1729
        %v2698 = vtanh.pop %v2633
        %v2699 = vld [vmem:[#allocation8] sm:$0x3]
        %v2701 = vperm.slane %v2699, 0
        %v2702 = vperm.slane %v2699, 1
        %v2705 = vmul.f32 %v2635, %v2701
        %v2706 = vmul.f32 %v2636, %v2702
        %v2707 = vmul.f32 %v2637, %v2701
        %v2708 = vmul.f32 %v2638, %v2702
        %v2709 = vmul.f32 %v2639, %v2701
        %v2710 = vmul.f32 %v2640, %v2702
        %v2711 = vmul.f32 %v2641, %v2701
        %v2712 = vmul.f32 %v2642, %v2702
        %v2713 = vmul.f32 %v2643, %v2701
        %v2714 = vmul.f32 %v2644, %v2702
        %v2715 = vmul.f32 %v2645, %v2701
        %v2716 = vmul.f32 %v2646, %v2702
        %v2717 = vmul.f32 %v2647, %v2701
        %v2718 = vmul.f32 %v2648, %v2702
        %v2719 = vmul.f32 %v2649, %v2701
        %v2720 = vmul.f32 %v2650, %v2702
        %v2721 = vmul.f32 %v2651, %v2701
        %v2722 = vmul.f32 %v2652, %v2702
        %v2723 = vmul.f32 %v2653, %v2701
        %v2724 = vmul.f32 %v2654, %v2702
        %v2725 = vmul.f32 %v2655, %v2701
        %v2726 = vmul.f32 %v2656, %v2702
        %v2727 = vmul.f32 %v2657, %v2701
        %v2728 = vmul.f32 %v2658, %v2702
        %v2729 = vmul.f32 %v2659, %v2701
        %v2730 = vmul.f32 %v2660, %v2702
        %v2731 = vmul.f32 %v2661, %v2701
        %v2732 = vmul.f32 %v2662, %v2702
        %v2733 = vmul.f32 %v2663, %v2701
        %v2734 = vmul.f32 %v2664, %v2702
        %v2735 = vmul.f32 %v2665, %v2701
        %v2736 = vmul.f32 %v2666, %v2702
        %v2737 = vmul.f32 %v2667, %v2701
        %v2738 = vmul.f32 %v2668, %v2702
        %v2739 = vmul.f32 %v2669, %v2701
        %v2740 = vmul.f32 %v2670, %v2702
        %v2741 = vmul.f32 %v2671, %v2701
        %v2742 = vmul.f32 %v2672, %v2702
        %v2743 = vmul.f32 %v2673, %v2701
        %v2744 = vmul.f32 %v2674, %v2702
        %v2745 = vmul.f32 %v2675, %v2701
        %v2746 = vmul.f32 %v2676, %v2702
        %v2747 = vmul.f32 %v2677, %v2701
        %v2748 = vmul.f32 %v2678, %v2702
        %v2749 = vmul.f32 %v2679, %v2701
        %v2750 = vmul.f32 %v2680, %v2702
        %v2751 = vmul.f32 %v2681, %v2701
        %v2752 = vmul.f32 %v2682, %v2702
        %v2753 = vmul.f32 %v2683, %v2701
        %v2754 = vmul.f32 %v2684, %v2702
        %v2755 = vmul.f32 %v2685, %v2701
        %v2756 = vmul.f32 %v2686, %v2702
        %v2757 = vmul.f32 %v2687, %v2701
        %v2758 = vmul.f32 %v2688, %v2702
        %v2759 = vmul.f32 %v2689, %v2701
        %v2760 = vmul.f32 %v2690, %v2702
        %v2761 = vmul.f32 %v2691, %v2701
        %v2762 = vmul.f32 %v2692, %v2702
        %v2763 = vmul.f32 %v2693, %v2701
        %v2764 = vmul.f32 %v2694, %v2702
        %v2765 = vmul.f32 %v2695, %v2701
        %v2766 = vmul.f32 %v2696, %v2702
        %v2767 = vmul.f32 %v2697, %v2701
        %v2768 = vmul.f32 %v2698, %v2702
        %v2769 = vadd.f32 %v2705, %v2706
        %2770 = vadd.xlane.f32.xlu0 %v2769
        %v2771 = vpop.xlane.xlu0 %2770
        %v2772 = vadd.f32 %v2707, %v2708
        %2773 = vadd.xlane.f32.xlu0 %v2772
        %v2774 = vpop.xlane.xlu0 %2773
        %v2775 = vadd.f32 %v2709, %v2710
        %2776 = vadd.xlane.f32.xlu0 %v2775
        %v2777 = vpop.xlane.xlu0 %2776
        %v2778 = vadd.f32 %v2711, %v2712
        %2779 = vadd.xlane.f32.xlu0 %v2778
        %v2780 = vpop.xlane.xlu0 %2779
        %v2781 = vadd.f32 %v2713, %v2714
        %2782 = vadd.xlane.f32.xlu0 %v2781
        %v2783 = vpop.xlane.xlu0 %2782
        %v2784 = vadd.f32 %v2715, %v2716
        %2785 = vadd.xlane.f32.xlu0 %v2784
        %v2786 = vpop.xlane.xlu0 %2785
        %v2787 = vadd.f32 %v2717, %v2718
        %2788 = vadd.xlane.f32.xlu0 %v2787
        %v2789 = vpop.xlane.xlu0 %2788
        %v2790 = vadd.f32 %v2719, %v2720
        %2791 = vadd.xlane.f32.xlu0 %v2790
        %v2792 = vpop.xlane.xlu0 %2791
        %v2793 = vadd.f32 %v2721, %v2722
        %2794 = vadd.xlane.f32.xlu0 %v2793
        %v2795 = vpop.xlane.xlu0 %2794
        %v2796 = vadd.f32 %v2723, %v2724
        %2797 = vadd.xlane.f32.xlu0 %v2796
        %v2798 = vpop.xlane.xlu0 %2797
        %v2799 = vadd.f32 %v2725, %v2726
        %2800 = vadd.xlane.f32.xlu0 %v2799
        %v2801 = vpop.xlane.xlu0 %2800
        %v2802 = vadd.f32 %v2727, %v2728
        %2803 = vadd.xlane.f32.xlu0 %v2802
        %v2804 = vpop.xlane.xlu0 %2803
        %v2805 = vadd.f32 %v2729, %v2730
        %2806 = vadd.xlane.f32.xlu0 %v2805
        %v2807 = vpop.xlane.xlu0 %2806
        %v2808 = vadd.f32 %v2731, %v2732
        %2809 = vadd.xlane.f32.xlu0 %v2808
        %v2810 = vpop.xlane.xlu0 %2809
        %v2811 = vadd.f32 %v2733, %v2734
        %2812 = vadd.xlane.f32.xlu0 %v2811
        %v2813 = vpop.xlane.xlu0 %2812
        %v2814 = vadd.f32 %v2735, %v2736
        %2815 = vadd.xlane.f32.xlu0 %v2814
        %v2816 = vpop.xlane.xlu0 %2815
        %v2817 = vadd.f32 %v2737, %v2738
        %2818 = vadd.xlane.f32.xlu0 %v2817
        %v2819 = vpop.xlane.xlu0 %2818
        %v2820 = vadd.f32 %v2739, %v2740
        %2821 = vadd.xlane.f32.xlu0 %v2820
        %v2822 = vpop.xlane.xlu0 %2821
        %v2823 = vadd.f32 %v2741, %v2742
        %2824 = vadd.xlane.f32.xlu0 %v2823
        %v2825 = vpop.xlane.xlu0 %2824
        %v2826 = vadd.f32 %v2743, %v2744
        %2827 = vadd.xlane.f32.xlu0 %v2826
        %v2828 = vpop.xlane.xlu0 %2827
        %v2829 = vadd.f32 %v2745, %v2746
        %2830 = vadd.xlane.f32.xlu0 %v2829
        %v2831 = vpop.xlane.xlu0 %2830
        %v2832 = vadd.f32 %v2747, %v2748
        %2833 = vadd.xlane.f32.xlu0 %v2832
        %v2834 = vpop.xlane.xlu0 %2833
        %v2835 = vadd.f32 %v2749, %v2750
        %2836 = vadd.xlane.f32.xlu0 %v2835
        %v2837 = vpop.xlane.xlu0 %2836
        %v2838 = vadd.f32 %v2751, %v2752
        %2839 = vadd.xlane.f32.xlu0 %v2838
        %v2840 = vpop.xlane.xlu0 %2839
        %v2841 = vadd.f32 %v2753, %v2754
        %2842 = vadd.xlane.f32.xlu0 %v2841
        %v2843 = vpop.xlane.xlu0 %2842
        %v2844 = vadd.f32 %v2755, %v2756
        %2845 = vadd.xlane.f32.xlu0 %v2844
        %v2846 = vpop.xlane.xlu0 %2845
        %v2847 = vadd.f32 %v2757, %v2758
        %2848 = vadd.xlane.f32.xlu0 %v2847
        %v2849 = vpop.xlane.xlu0 %2848
        %v2850 = vadd.f32 %v2759, %v2760
        %2851 = vadd.xlane.f32.xlu0 %v2850
        %v2852 = vpop.xlane.xlu0 %2851
        %v2853 = vadd.f32 %v2761, %v2762
        %2854 = vadd.xlane.f32.xlu0 %v2853
        %v2855 = vpop.xlane.xlu0 %2854
        %v2856 = vadd.f32 %v2763, %v2764
        %2857 = vadd.xlane.f32.xlu0 %v2856
        %v2858 = vpop.xlane.xlu0 %2857
        %v2859 = vadd.f32 %v2765, %v2766
        %2860 = vadd.xlane.f32.xlu0 %v2859
        %v2861 = vpop.xlane.xlu0 %2860
        %v2862 = vadd.f32 %v2767, %v2768
        %2863 = vadd.xlane.f32.xlu0 %v2862
        %v2864 = vpop.xlane.xlu0 %2863
        %v2865 = vld [vmem:[#allocation2] sm:$0x1]
        %v2867 = vperm.slane %v2865, 0
        %v2869 = vadd.f32 %v2771, %v2867
        %v2870 = vadd.f32 %v2774, %v2867
        %v2871 = vadd.f32 %v2777, %v2867
        %v2872 = vadd.f32 %v2780, %v2867
        %v2873 = vadd.f32 %v2783, %v2867
        %v2874 = vadd.f32 %v2786, %v2867
        %v2875 = vadd.f32 %v2789, %v2867
        %v2876 = vadd.f32 %v2792, %v2867
        %v2877 = vadd.f32 %v2795, %v2867
        %v2878 = vadd.f32 %v2798, %v2867
        %v2879 = vadd.f32 %v2801, %v2867
        %v2880 = vadd.f32 %v2804, %v2867
        %v2881 = vadd.f32 %v2807, %v2867
        %v2882 = vadd.f32 %v2810, %v2867
        %v2883 = vadd.f32 %v2813, %v2867
        %v2884 = vadd.f32 %v2816, %v2867
        %v2885 = vadd.f32 %v2819, %v2867
        %v2886 = vadd.f32 %v2822, %v2867
        %v2887 = vadd.f32 %v2825, %v2867
        %v2888 = vadd.f32 %v2828, %v2867
        %v2889 = vadd.f32 %v2831, %v2867
        %v2890 = vadd.f32 %v2834, %v2867
        %v2891 = vadd.f32 %v2837, %v2867
        %v2892 = vadd.f32 %v2840, %v2867
        %v2893 = vadd.f32 %v2843, %v2867
        %v2894 = vadd.f32 %v2846, %v2867
        %v2895 = vadd.f32 %v2849, %v2867
        %v2896 = vadd.f32 %v2852, %v2867
        %v2897 = vadd.f32 %v2855, %v2867
        %v2898 = vadd.f32 %v2858, %v2867
        %v2899 = vadd.f32 %v2861, %v2867
        %v2900 = vadd.f32 %v2864, %v2867
        %vm2901 = vcmask 7168
        %2902 = vst.msk [vmem:[%s297] sm:$0xff] %vm2901, %v2869
        %2903 = vst.msk [vmem:[%s297 + $0x8] sm:$0xff] %vm2901, %v2870
        %2904 = vst.msk [vmem:[%s297 + $0x10] sm:$0xff] %vm2901, %v2871
        %2905 = vst.msk [vmem:[%s297 + $0x18] sm:$0xff] %vm2901, %v2872
        %2906 = vst.msk [vmem:[%s297 + $0x20] sm:$0xff] %vm2901, %v2873
        %2907 = vst.msk [vmem:[%s297 + $0x28] sm:$0xff] %vm2901, %v2874
        %2908 = vst.msk [vmem:[%s297 + $0x30] sm:$0xff] %vm2901, %v2875
        %2909 = vst.msk [vmem:[%s297 + $0x38] sm:$0xff] %vm2901, %v2876
        %2910 = vst.msk [vmem:[%s297 + $0x40] sm:$0xff] %vm2901, %v2877
        %2911 = vst.msk [vmem:[%s297 + $0x48] sm:$0xff] %vm2901, %v2878
        %2912 = vst.msk [vmem:[%s297 + $0x50] sm:$0xff] %vm2901, %v2879
        %2913 = vst.msk [vmem:[%s297 + $0x58] sm:$0xff] %vm2901, %v2880
        %2914 = vst.msk [vmem:[%s297 + $0x60] sm:$0xff] %vm2901, %v2881
        %2915 = vst.msk [vmem:[%s297 + $0x68] sm:$0xff] %vm2901, %v2882
        %2916 = vst.msk [vmem:[%s297 + $0x70] sm:$0xff] %vm2901, %v2883
        %2917 = vst.msk [vmem:[%s297 + $0x78] sm:$0xff] %vm2901, %v2884
        %2918 = vst.msk [vmem:[%s297 + $0x80] sm:$0xff] %vm2901, %v2885
        %2919 = vst.msk [vmem:[%s297 + $0x88] sm:$0xff] %vm2901, %v2886
        %2920 = vst.msk [vmem:[%s297 + $0x90] sm:$0xff] %vm2901, %v2887
        %2921 = vst.msk [vmem:[%s297 + $0x98] sm:$0xff] %vm2901, %v2888
        %2922 = vst.msk [vmem:[%s297 + $0xa0] sm:$0xff] %vm2901, %v2889
        %2923 = vst.msk [vmem:[%s297 + $0xa8] sm:$0xff] %vm2901, %v2890
        %2924 = vst.msk [vmem:[%s297 + $0xb0] sm:$0xff] %vm2901, %v2891
        %2925 = vst.msk [vmem:[%s297 + $0xb8] sm:$0xff] %vm2901, %v2892
        %2926 = vst.msk [vmem:[%s297 + $0xc0] sm:$0xff] %vm2901, %v2893
        %2927 = vst.msk [vmem:[%s297 + $0xc8] sm:$0xff] %vm2901, %v2894
        %2928 = vst.msk [vmem:[%s297 + $0xd0] sm:$0xff] %vm2901, %v2895
        %2929 = vst.msk [vmem:[%s297 + $0xd8] sm:$0xff] %vm2901, %v2896
        %2930 = vst.msk [vmem:[%s297 + $0xe0] sm:$0xff] %vm2901, %v2897
        %2931 = vst.msk [vmem:[%s297 + $0xe8] sm:$0xff] %vm2901, %v2898
        %2932 = vst.msk [vmem:[%s297 + $0xf0] sm:$0xff] %vm2901, %v2899
        %2933 = vst.msk [vmem:[%s297 + $0xf8] sm:$0xff] %vm2901, %v2900
        %s2934 = sand.u32 %s141, 1
        %s2935 = sand.u32 %s141, 1
        %s2936 = smul.addr %s2935, 256
        %s2937 = scalar_lea.vmem [#allocation10], %s2936
        // Predicated region
        $region57: #{tpu_custom_call.1} parent=39 // pred_check
          %p2938 = pneg %p151
        $region58: #{tpu_custom_call.1} parent=39 // pred_check_branch
          %2940 = sbr.rel (%p2938) target = $region60
        $region59: #{tpu_custom_call.1} parent=39 // pred_region
          %s2941 = smul.u32 32, %s23
          %s2942 = ssub.s32 38, %s2941
          %p2943 = scmp.lt.s32.totalorder %s2942, 32
          %s2944 = scalar_select %p2943, %s2942, 32
          %s2945 = smul.u32 8, %s2944
          %p2946 = scmp.ne.s32.totalorder 0, %s2945
          %s2947 = smul.addr %s2941, 8
          %s2948 = scalar_lea.vmem %s5, %s2947
          // Predicated region
          $region61: #{tpu_custom_call.1} parent=59 // pred_check
            %p2949 = pneg %p2946
          $region62: #{tpu_custom_call.1} parent=59 // pred_check_branch
            %2951 = sbr.rel (%p2949) target = $region64
          $region63: #{tpu_custom_call.1} parent=59 // pred_region
            // Predicated region
            $region65: #{tpu_custom_call.1} parent=63 // pred_check
              _
            $region66: #{tpu_custom_call.1} parent=63 // pred_check_branch
              %2953 = sbr.rel (0) target = $region68
            $region67: #{tpu_custom_call.1} parent=63 // pred_region
              // Predicated region
              $region87: #{tpu_custom_call.1} parent=67 // pred_check
                _
              $region88: #{tpu_custom_call.1} parent=67 // pred_check_branch
                %3065 = sbr.rel (0) target = $region90
              $region89: #{tpu_custom_call.1} parent=67 // pred_region
                %s3066 = sshrl.u32 %s2944, 5
                // While loop
                $region91: #{tpu_custom_call.1} parent=89 // loop_pre_header
                  _
                $region92: #{tpu_custom_call.1} parent=89 // loop_header
                  %s3068 = sphi 0, %s3070
                  %p3069 = scmp.ge.s32.totalorder %s3068, %s3066
                  %s3073 = sphi 0, %s3142
                  %s3074 = sphi %s2937, %s3145
                  %s3075 = sphi %s2948, %s3146
                $region93: #{tpu_custom_call.1} parent=89 // loop_header_branch
                  %3072 = sbr.rel (%p3069) target = $region97
                $region94: #{tpu_custom_call.1} parent=89 // loop_body
                  %v3076 = vld [vmem:[%s3074] sm:$0xff]
                  %3077 = vst [vmem:[%s3075] sm:$0xff] %v3076
                  %v3078 = vld [vmem:[%s3074 + $0x8] sm:$0xff]
                  %3079 = vst [vmem:[%s3075 + $0x8] sm:$0xff] %v3078
                  %v3080 = vld [vmem:[%s3074 + $0x10] sm:$0xff]
                  %3081 = vst [vmem:[%s3075 + $0x10] sm:$0xff] %v3080
                  %v3082 = vld [vmem:[%s3074 + $0x18] sm:$0xff]
                  %3083 = vst [vmem:[%s3075 + $0x18] sm:$0xff] %v3082
                  %v3084 = vld [vmem:[%s3074 + $0x20] sm:$0xff]
                  %3085 = vst [vmem:[%s3075 + $0x20] sm:$0xff] %v3084
                  %v3086 = vld [vmem:[%s3074 + $0x28] sm:$0xff]
                  %3087 = vst [vmem:[%s3075 + $0x28] sm:$0xff] %v3086
                  %v3088 = vld [vmem:[%s3074 + $0x30] sm:$0xff]
                  %3089 = vst [vmem:[%s3075 + $0x30] sm:$0xff] %v3088
                  %v3090 = vld [vmem:[%s3074 + $0x38] sm:$0xff]
                  %3091 = vst [vmem:[%s3075 + $0x38] sm:$0xff] %v3090
                  %v3092 = vld [vmem:[%s3074 + $0x40] sm:$0xff]
                  %3093 = vst [vmem:[%s3075 + $0x40] sm:$0xff] %v3092
                  %v3094 = vld [vmem:[%s3074 + $0x48] sm:$0xff]
                  %3095 = vst [vmem:[%s3075 + $0x48] sm:$0xff] %v3094
                  %v3096 = vld [vmem:[%s3074 + $0x50] sm:$0xff]
                  %3097 = vst [vmem:[%s3075 + $0x50] sm:$0xff] %v3096
                  %v3098 = vld [vmem:[%s3074 + $0x58] sm:$0xff]
                  %3099 = vst [vmem:[%s3075 + $0x58] sm:$0xff] %v3098
                  %v3100 = vld [vmem:[%s3074 + $0x60] sm:$0xff]
                  %3101 = vst [vmem:[%s3075 + $0x60] sm:$0xff] %v3100
                  %v3102 = vld [vmem:[%s3074 + $0x68] sm:$0xff]
                  %3103 = vst [vmem:[%s3075 + $0x68] sm:$0xff] %v3102
                  %v3104 = vld [vmem:[%s3074 + $0x70] sm:$0xff]
                  %3105 = vst [vmem:[%s3075 + $0x70] sm:$0xff] %v3104
                  %v3106 = vld [vmem:[%s3074 + $0x78] sm:$0xff]
                  %3107 = vst [vmem:[%s3075 + $0x78] sm:$0xff] %v3106
                  %v3108 = vld [vmem:[%s3074 + $0x80] sm:$0xff]
                  %3109 = vst [vmem:[%s3075 + $0x80] sm:$0xff] %v3108
                  %v3110 = vld [vmem:[%s3074 + $0x88] sm:$0xff]
                  %3111 = vst [vmem:[%s3075 + $0x88] sm:$0xff] %v3110
                  %v3112 = vld [vmem:[%s3074 + $0x90] sm:$0xff]
                  %3113 = vst [vmem:[%s3075 + $0x90] sm:$0xff] %v3112
                  %v3114 = vld [vmem:[%s3074 + $0x98] sm:$0xff]
                  %3115 = vst [vmem:[%s3075 + $0x98] sm:$0xff] %v3114
                  %v3116 = vld [vmem:[%s3074 + $0xa0] sm:$0xff]
                  %3117 = vst [vmem:[%s3075 + $0xa0] sm:$0xff] %v3116
                  %v3118 = vld [vmem:[%s3074 + $0xa8] sm:$0xff]
                  %3119 = vst [vmem:[%s3075 + $0xa8] sm:$0xff] %v3118
                  %v3120 = vld [vmem:[%s3074 + $0xb0] sm:$0xff]
                  %3121 = vst [vmem:[%s3075 + $0xb0] sm:$0xff] %v3120
                  %v3122 = vld [vmem:[%s3074 + $0xb8] sm:$0xff]
                  %3123 = vst [vmem:[%s3075 + $0xb8] sm:$0xff] %v3122
                  %v3124 = vld [vmem:[%s3074 + $0xc0] sm:$0xff]
                  %3125 = vst [vmem:[%s3075 + $0xc0] sm:$0xff] %v3124
                  %v3126 = vld [vmem:[%s3074 + $0xc8] sm:$0xff]
                  %3127 = vst [vmem:[%s3075 + $0xc8] sm:$0xff] %v3126
                  %v3128 = vld [vmem:[%s3074 + $0xd0] sm:$0xff]
                  %3129 = vst [vmem:[%s3075 + $0xd0] sm:$0xff] %v3128
                  %v3130 = vld [vmem:[%s3074 + $0xd8] sm:$0xff]
                  %3131 = vst [vmem:[%s3075 + $0xd8] sm:$0xff] %v3130
                  %v3132 = vld [vmem:[%s3074 + $0xe0] sm:$0xff]
                  %3133 = vst [vmem:[%s3075 + $0xe0] sm:$0xff] %v3132
                  %v3134 = vld [vmem:[%s3074 + $0xe8] sm:$0xff]
                  %3135 = vst [vmem:[%s3075 + $0xe8] sm:$0xff] %v3134
                  %v3136 = vld [vmem:[%s3074 + $0xf0] sm:$0xff]
                  %3137 = vst [vmem:[%s3075 + $0xf0] sm:$0xff] %v3136
                  %v3138 = vld [vmem:[%s3074 + $0xf8] sm:$0xff]
                  %3139 = vst [vmem:[%s3075 + $0xf8] sm:$0xff] %v3138
                  %s3140 = sadd.s32 1, %s3073
                  %p3141 = scmp.ge.s32.totalorder %s3140, %s3066
                  %s3142 = scalar_select %p3141, 0, %s3140
                  %s3143 = smul.u32 %s3142, 256
                  %s3144 = smul.u32 %s3142, 256
                  %s3145 = scalar_lea.vmem %s2937, %s3143 [#allocation10]
                  %s3146 = scalar_lea.vmem %s2948, %s3144
                $region95: #{tpu_custom_call.1} parent=89 // loop_footer
                  %s3070 = sadd.s32 %s3068, 1
                $region96: #{tpu_custom_call.1} parent=89 // loop_footer_branch
                  %3067 = sbr.rel target = $region92
                $region97: #{tpu_custom_call.1} parent=89 // loop_exit
                  _
                %s3147 = sshrl.u32 %s2944, 5
                %s3148 = sand.u32 %s2944, 31
                %s3149 = smul.u32 %s3147, 32
                %s3150 = smul.u32 8, %s3149
                %s3151 = scalar_lea.vmem %s2937, %s3150 [#allocation10]
                %s3152 = smul.u32 8, %s3149
                %s3153 = scalar_lea.vmem %s2948, %s3152
                // While loop
                $region98: #{tpu_custom_call.1} parent=89 // loop_pre_header
                  _
                $region99: #{tpu_custom_call.1} parent=89 // loop_header
                  %s3155 = sphi 0, %s3157
                  %p3156 = scmp.ge.s32.totalorder %s3155, %s3148
                  %s3160 = sphi 0, %s3167
                  %s3161 = sphi %s3151, %s3170
                  %s3162 = sphi %s3153, %s3171
                $region100: #{tpu_custom_call.1} parent=89 // loop_header_branch
                  %3159 = sbr.rel (%p3156) target = $region104
                $region101: #{tpu_custom_call.1} parent=89 // loop_body
                  %v3163 = vld [vmem:[%s3161] sm:$0xff]
                  %3164 = vst [vmem:[%s3162] sm:$0xff] %v3163
                  %s3165 = sadd.s32 1, %s3160
                  %p3166 = scmp.ge.s32.totalorder %s3165, %s3148
                  %s3167 = scalar_select %p3166, 0, %s3165
                  %s3168 = smul.u32 %s3167, 8
                  %s3169 = smul.u32 %s3167, 8
                  %s3170 = scalar_lea.vmem %s3151, %s3168 [#allocation10]
                  %s3171 = scalar_lea.vmem %s3153, %s3169
                $region102: #{tpu_custom_call.1} parent=89 // loop_footer
                  %s3157 = sadd.s32 %s3155, 1
                $region103: #{tpu_custom_call.1} parent=89 // loop_footer_branch
                  %3154 = sbr.rel target = $region99
                $region104: #{tpu_custom_call.1} parent=89 // loop_exit
                  _
              $region90: #{tpu_custom_call.1} parent=67 // pred_fallthru
                _
              // Predicated region
              $region105: #{tpu_custom_call.1} parent=67 // pred_check
                _
              $region106: #{tpu_custom_call.1} parent=67 // pred_check_branch
                %3173 = sbr.rel target = $region108
              $region107: #{tpu_custom_call.1} parent=67 // pred_region
                _
              $region108: #{tpu_custom_call.1} parent=67 // pred_fallthru
                _
            $region68: #{tpu_custom_call.1} parent=63 // pred_fallthru
              _
            // Predicated region
            $region69: #{tpu_custom_call.1} parent=63 // pred_check
              _
            $region70: #{tpu_custom_call.1} parent=63 // pred_check_branch
              %2955 = sbr.rel target = $region72
            $region71: #{tpu_custom_call.1} parent=63 // pred_region
              %s2957 = ssub.s32 256, 1
              %s2958 = sshrl.u32 %s2944, 5
              // While loop
              $region73: #{tpu_custom_call.1} parent=71 // loop_pre_header
                _
              $region74: #{tpu_custom_call.1} parent=71 // loop_header
                %s2960 = sphi 0, %s2962
                %p2961 = scmp.ge.s32.totalorder %s2960, %s2958
                %s2965 = sphi 0, %s3034
                %s2966 = sphi %s2937, %s3037
                %s2967 = sphi %s2948, %s3038
              $region75: #{tpu_custom_call.1} parent=71 // loop_header_branch
                %2964 = sbr.rel (%p2961) target = $region79
              $region76: #{tpu_custom_call.1} parent=71 // loop_body
                %v2968 = vld [vmem:[%s2966] sm:%s2957]
                %2969 = vst [vmem:[%s2967] sm:%s2957] %v2968
                %v2970 = vld [vmem:[%s2966 + $0x8] sm:%s2957]
                %2971 = vst [vmem:[%s2967 + $0x8] sm:%s2957] %v2970
                %v2972 = vld [vmem:[%s2966 + $0x10] sm:%s2957]
                %2973 = vst [vmem:[%s2967 + $0x10] sm:%s2957] %v2972
                %v2974 = vld [vmem:[%s2966 + $0x18] sm:%s2957]
                %2975 = vst [vmem:[%s2967 + $0x18] sm:%s2957] %v2974
                %v2976 = vld [vmem:[%s2966 + $0x20] sm:%s2957]
                %2977 = vst [vmem:[%s2967 + $0x20] sm:%s2957] %v2976
                %v2978 = vld [vmem:[%s2966 + $0x28] sm:%s2957]
                %2979 = vst [vmem:[%s2967 + $0x28] sm:%s2957] %v2978
                %v2980 = vld [vmem:[%s2966 + $0x30] sm:%s2957]
                %2981 = vst [vmem:[%s2967 + $0x30] sm:%s2957] %v2980
                %v2982 = vld [vmem:[%s2966 + $0x38] sm:%s2957]
                %2983 = vst [vmem:[%s2967 + $0x38] sm:%s2957] %v2982
                %v2984 = vld [vmem:[%s2966 + $0x40] sm:%s2957]
                %2985 = vst [vmem:[%s2967 + $0x40] sm:%s2957] %v2984
                %v2986 = vld [vmem:[%s2966 + $0x48] sm:%s2957]
                %2987 = vst [vmem:[%s2967 + $0x48] sm:%s2957] %v2986
                %v2988 = vld [vmem:[%s2966 + $0x50] sm:%s2957]
                %2989 = vst [vmem:[%s2967 + $0x50] sm:%s2957] %v2988
                %v2990 = vld [vmem:[%s2966 + $0x58] sm:%s2957]
                %2991 = vst [vmem:[%s2967 + $0x58] sm:%s2957] %v2990
                %v2992 = vld [vmem:[%s2966 + $0x60] sm:%s2957]
                %2993 = vst [vmem:[%s2967 + $0x60] sm:%s2957] %v2992
                %v2994 = vld [vmem:[%s2966 + $0x68] sm:%s2957]
                %2995 = vst [vmem:[%s2967 + $0x68] sm:%s2957] %v2994
                %v2996 = vld [vmem:[%s2966 + $0x70] sm:%s2957]
                %2997 = vst [vmem:[%s2967 + $0x70] sm:%s2957] %v2996
                %v2998 = vld [vmem:[%s2966 + $0x78] sm:%s2957]
                %2999 = vst [vmem:[%s2967 + $0x78] sm:%s2957] %v2998
                %v3000 = vld [vmem:[%s2966 + $0x80] sm:%s2957]
                %3001 = vst [vmem:[%s2967 + $0x80] sm:%s2957] %v3000
                %v3002 = vld [vmem:[%s2966 + $0x88] sm:%s2957]
                %3003 = vst [vmem:[%s2967 + $0x88] sm:%s2957] %v3002
                %v3004 = vld [vmem:[%s2966 + $0x90] sm:%s2957]
                %3005 = vst [vmem:[%s2967 + $0x90] sm:%s2957] %v3004
                %v3006 = vld [vmem:[%s2966 + $0x98] sm:%s2957]
                %3007 = vst [vmem:[%s2967 + $0x98] sm:%s2957] %v3006
                %v3008 = vld [vmem:[%s2966 + $0xa0] sm:%s2957]
                %3009 = vst [vmem:[%s2967 + $0xa0] sm:%s2957] %v3008
                %v3010 = vld [vmem:[%s2966 + $0xa8] sm:%s2957]
                %3011 = vst [vmem:[%s2967 + $0xa8] sm:%s2957] %v3010
                %v3012 = vld [vmem:[%s2966 + $0xb0] sm:%s2957]
                %3013 = vst [vmem:[%s2967 + $0xb0] sm:%s2957] %v3012
                %v3014 = vld [vmem:[%s2966 + $0xb8] sm:%s2957]
                %3015 = vst [vmem:[%s2967 + $0xb8] sm:%s2957] %v3014
                %v3016 = vld [vmem:[%s2966 + $0xc0] sm:%s2957]
                %3017 = vst [vmem:[%s2967 + $0xc0] sm:%s2957] %v3016
                %v3018 = vld [vmem:[%s2966 + $0xc8] sm:%s2957]
                %3019 = vst [vmem:[%s2967 + $0xc8] sm:%s2957] %v3018
                %v3020 = vld [vmem:[%s2966 + $0xd0] sm:%s2957]
                %3021 = vst [vmem:[%s2967 + $0xd0] sm:%s2957] %v3020
                %v3022 = vld [vmem:[%s2966 + $0xd8] sm:%s2957]
                %3023 = vst [vmem:[%s2967 + $0xd8] sm:%s2957] %v3022
                %v3024 = vld [vmem:[%s2966 + $0xe0] sm:%s2957]
                %3025 = vst [vmem:[%s2967 + $0xe0] sm:%s2957] %v3024
                %v3026 = vld [vmem:[%s2966 + $0xe8] sm:%s2957]
                %3027 = vst [vmem:[%s2967 + $0xe8] sm:%s2957] %v3026
                %v3028 = vld [vmem:[%s2966 + $0xf0] sm:%s2957]
                %3029 = vst [vmem:[%s2967 + $0xf0] sm:%s2957] %v3028
                %v3030 = vld [vmem:[%s2966 + $0xf8] sm:%s2957]
                %3031 = vst [vmem:[%s2967 + $0xf8] sm:%s2957] %v3030
                %s3032 = sadd.s32 1, %s2965
                %p3033 = scmp.ge.s32.totalorder %s3032, %s2958
                %s3034 = scalar_select %p3033, 0, %s3032
                %s3035 = smul.u32 %s3034, 256
                %s3036 = smul.u32 %s3034, 256
                %s3037 = scalar_lea.vmem %s2937, %s3035 [#allocation10]
                %s3038 = scalar_lea.vmem %s2948, %s3036
              $region77: #{tpu_custom_call.1} parent=71 // loop_footer
                %s2962 = sadd.s32 %s2960, 1
              $region78: #{tpu_custom_call.1} parent=71 // loop_footer_branch
                %2959 = sbr.rel target = $region74
              $region79: #{tpu_custom_call.1} parent=71 // loop_exit
                _
              %s3039 = sshrl.u32 %s2944, 5
              %s3040 = sand.u32 %s2944, 31
              %s3041 = smul.u32 %s3039, 32
              %s3042 = smul.u32 8, %s3041
              %s3043 = scalar_lea.vmem %s2937, %s3042 [#allocation10]
              %s3044 = smul.u32 8, %s3041
              %s3045 = scalar_lea.vmem %s2948, %s3044
              // While loop
              $region80: #{tpu_custom_call.1} parent=71 // loop_pre_header
                _
              $region81: #{tpu_custom_call.1} parent=71 // loop_header
                %s3047 = sphi 0, %s3049
                %p3048 = scmp.ge.s32.totalorder %s3047, %s3040
                %s3052 = sphi 0, %s3059
                %s3053 = sphi %s3043, %s3062
                %s3054 = sphi %s3045, %s3063
              $region82: #{tpu_custom_call.1} parent=71 // loop_header_branch
                %3051 = sbr.rel (%p3048) target = $region86
              $region83: #{tpu_custom_call.1} parent=71 // loop_body
                %v3055 = vld [vmem:[%s3053] sm:%s2957]
                %3056 = vst [vmem:[%s3054] sm:%s2957] %v3055
                %s3057 = sadd.s32 1, %s3052
                %p3058 = scmp.ge.s32.totalorder %s3057, %s3040
                %s3059 = scalar_select %p3058, 0, %s3057
                %s3060 = smul.u32 %s3059, 8
                %s3061 = smul.u32 %s3059, 8
                %s3062 = scalar_lea.vmem %s3043, %s3060 [#allocation10]
                %s3063 = scalar_lea.vmem %s3045, %s3061
              $region84: #{tpu_custom_call.1} parent=71 // loop_footer
                %s3049 = sadd.s32 %s3047, 1
              $region85: #{tpu_custom_call.1} parent=71 // loop_footer_branch
                %3046 = sbr.rel target = $region81
              $region86: #{tpu_custom_call.1} parent=71 // loop_exit
                _
            $region72: #{tpu_custom_call.1} parent=63 // pred_fallthru
              _
          $region64: #{tpu_custom_call.1} parent=59 // pred_fallthru
            _
          %3174 = vnop
        $region60: #{tpu_custom_call.1} parent=39 // pred_fallthru
          _
      $region40: #{tpu_custom_call.1} parent=5 // pred_fallthru
        _
      %p3175 = scmp.le.s32.totalorder 2, %s18
      // Predicated region
      $region109: #{tpu_custom_call.1} parent=5 // pred_check
        %p3176 = pneg %p3175
      $region110: #{tpu_custom_call.1} parent=5 // pred_check_branch
        %3178 = sbr.rel (%p3176) target = $region112
      $region111: #{tpu_custom_call.1} parent=5 // pred_region
        %s3179 = ssub.s32 %s18, 2
        // Predicated region
        $region113: #{tpu_custom_call.1} parent=111 // pred_check
          %p3180 = pneg %p157
        $region114: #{tpu_custom_call.1} parent=111 // pred_check_branch
          %3182 = sbr.rel (%p3180) target = $region116
        $region115: #{tpu_custom_call.1} parent=111 // pred_region
          %s3183 = sand.u32 %s142, 1
          %s3184 = sand.u32 %s142, 1
          %s3185 = smul.addr %s3184, 256
          %s3186 = scalar_lea.vmem [#allocation10], %s3185
        $region116: #{tpu_custom_call.1} parent=111 // pred_fallthru
          _
      $region112: #{tpu_custom_call.1} parent=5 // pred_fallthru
        _
    $region6: #{tpu_custom_call.1} parent=1 // loop_footer
      %s22 = sadd.s32 1, %s18
    $region7: #{tpu_custom_call.1} parent=1 // loop_footer_branch
      %17 = sbr.rel target = $region3
    $region8: #{tpu_custom_call.1} parent=1 // loop_exit
      _
    %3187 = vsyncpa [#allocation4], 1
    %s3188 = scalar_lea.sflag [#allocation4], 1
    %3189 = vsyncpa %s3188, 1
    %3190 = vsyncpa [#allocation6], 1
    %3191 = vsyncpa [#allocation9], 1

</llo_original>
